<compile_context>
chip_gen: v7x
topology: tpu7x:2x2x1
jax: 0.10.0
libtpu: 0.0.40
codegen_flags: <defaults>
</compile_context>

<pallas_src>
import math
from functools import partial

import jax
import jax.numpy as jnp
from jax import lax
from jax.experimental import pallas as pl
from jax.experimental.pallas import tpu as pltpu


# ----------------------------------------------------------------------------
# helpers
# ----------------------------------------------------------------------------
def _round_up(x, m):
    return ((x + m - 1) // m) * m


def _m_grid(M):
    """Pick (Mp, TM) for the GEMM row dimension.

    Prefer exactly two row blocks: both v7x TensorCores get work via the
    'parallel' grid axis while grid-step overhead stays minimal on the
    single-TC v5e/v6e (these GEMMs are launch/overhead bound, not VMEM bound).
    """
    for tm in (1024, 512, 256, 128, 64, 32, 16, 8):
        if M % tm == 0 and M // tm >= 2:
            return M, tm
    Mp = _round_up(M, 8)
    return Mp, Mp


# ----------------------------------------------------------------------------
# Pallas kernels
# ----------------------------------------------------------------------------
def _head_gemm_kernel(x_ref, w_ref, b_ref, o1_ref, o2_ref, o3_ref):
    """Fused branch1/2/4 1x1 heads: y = relu(x @ w + b), split to 3 outputs.

    x_ref: (TM, K) bf16, w_ref: (K, 384) bf16, b_ref: (1, 384) f32.
    Outputs are lane-dense 128-wide (real channels 0:64 / 0:48 / 0:64, rest 0).
    """
    y = jnp.dot(x_ref[...], w_ref[...], preferred_element_type=jnp.float32)
    y = jnp.maximum(y + b_ref[...], 0.0)
    o1_ref[...] = y[:, 0:128].astype(o1_ref.dtype)
    o2_ref[...] = y[:, 128:256].astype(o2_ref.dtype)
    o3_ref[...] = y[:, 256:384].astype(o3_ref.dtype)


def _gemm_bias_relu_kernel(x_ref, w_ref, b_ref, o_ref):
    """y = relu(x @ w + b) — single-output 1x1-conv GEMM (branch3)."""
    y = jnp.dot(x_ref[...], w_ref[...], preferred_element_type=jnp.float32)
    o_ref[...] = jnp.maximum(y + b_ref[...], 0.0).astype(o_ref.dtype)


def _conv3x3_kernel(x_ref, w_ref, b_ref, o_ref, *, H, W):
    """3x3 / stride 1 / pad 1 conv (+ folded-BN bias, ReLU) on one image.

    x_ref: (1, H+2, W+2, Cin)  zero-padded NHWC image (bf16, Cin lane-padded)
    w_ref: (3, 3, Cin, Coutp)  BN-folded weights (bf16)
    b_ref: (1, Coutp)          BN-folded bias (f32)
    o_ref: (1, H, W, Coutp)    output (bf16)

    Implicit GEMM: the 9 shifted-window matmuls are accumulated in f32 while
    the halo stays in VMEM — no im2col materialization in HBM.
    """
    cin = x_ref.shape[-1]
    coutp = o_ref.shape[-1]
    # Slice the shifted windows in a 32-bit layout (robust sublane slicing);
    # the MXU still runs in bf16 (lossless bf16->f32->bf16 round trip).
    xv = x_ref[0].astype(jnp.float32)                       # (H+2, W+2, Cin)
    acc = jnp.zeros((H * W, coutp), jnp.float32)
    for di in range(3):
        for dj in range(3):
            patch = xv[di:di + H, dj:dj + W, :]             # (H, W, Cin)
            patch = patch.reshape(H * W, cin).astype(jnp.bfloat16)
            acc = acc + jnp.dot(patch, w_ref[di, dj],
                                preferred_element_type=jnp.float32)
    y = jnp.maximum(acc + b_ref[...], 0.0)
    o_ref[...] = y.reshape(1, H, W, coutp).astype(o_ref.dtype)


# ----------------------------------------------------------------------------
# kernel wrappers
# ----------------------------------------------------------------------------
def head_gemm(x, w, b):
    """Fused 1x1 heads of branch1/2/4. x: (M, K); w: (K, 384); b: (1, 384)."""
    M, K = x.shape
    Kw, Np = w.shape
    assert Kw == K and Np == 384
    Mp, TM = _m_grid(M)
    if Mp != M:
        x = jnp.pad(x, ((0, Mp - M), (0, 0)))
    outs = pl.pallas_call(
        _head_gemm_kernel,
        out_shape=[jax.ShapeDtypeStruct((Mp, 128), jnp.bfloat16)] * 3,
        grid_spec=pltpu.PrefetchScalarGridSpec(
            num_scalar_prefetch=0,
            grid=(Mp // TM,),
            in_specs=[
                pl.BlockSpec((TM, K), lambda i: (i, 0)),     # true K, no pad
                pl.BlockSpec((K, Np), lambda i: (0, 0)),     # resident weights
                pl.BlockSpec((1, Np), lambda i: (0, 0)),     # resident bias
            ],
            out_specs=[pl.BlockSpec((TM, 128), lambda i: (i, 0))] * 3,
        ),
        compiler_params=pltpu.CompilerParams(
            dimension_semantics=("parallel",)),
    )(x, w, b)
    if Mp != M:
        outs = [o[:M] for o in outs]
    return outs


def gemm_bias_relu(x, w, b):
    """1x1 ConvBlock GEMM: relu(x @ w + b). x: (M, K); w: (K, Np); b: (1, Np)."""
    M, K = x.shape
    _, Np = w.shape
    Mp, TM = _m_grid(M)
    if Mp != M:
        x = jnp.pad(x, ((0, Mp - M), (0, 0)))
    out = pl.pallas_call(
        _gemm_bias_relu_kernel,
        out_shape=jax.ShapeDtypeStruct((Mp, Np), jnp.bfloat16),
        grid_spec=pltpu.PrefetchScalarGridSpec(
            num_scalar_prefetch=0,
            grid=(Mp // TM,),
            in_specs=[
                pl.BlockSpec((TM, K), lambda i: (i, 0)),
                pl.BlockSpec((K, Np), lambda i: (0, 0)),
                pl.BlockSpec((1, Np), lambda i: (0, 0)),
            ],
            out_specs=pl.BlockSpec((TM, Np), lambda i: (i, 0)),
        ),
        compiler_params=pltpu.CompilerParams(
            dimension_semantics=("parallel",)),
    )(x, w, b)
    return out[:M] if Mp != M else out


def conv3x3(x, p):
    """3x3 ConvBlock (stride 1, pad 1) via the implicit-GEMM kernel.

    x: (N, H, W, Cin) NHWC bf16 (channel-padded OK; padded weight rows are 0).
    """
    N, H, W, Cin = x.shape
    w, b = p["w"], p["b"]                     # (3, 3, Cin, Coutp), (1, Coutp)
    assert w.shape[2] == Cin
    Coutp = w.shape[-1]
    xp = jnp.pad(x, ((0, 0), (1, 1), (1, 1), (0, 0)))   # spatial halo only
    return pl.pallas_call(
        partial(_conv3x3_kernel, H=H, W=W),
        out_shape=jax.ShapeDtypeStruct((N, H, W, Coutp), jnp.bfloat16),
        grid_spec=pltpu.PrefetchScalarGridSpec(
            num_scalar_prefetch=0,
            grid=(N,),
            in_specs=[
                pl.BlockSpec((1, H + 2, W + 2, Cin), lambda n: (n, 0, 0, 0)),
                pl.BlockSpec((3, 3, Cin, Coutp), lambda n: (0, 0, 0, 0)),
                pl.BlockSpec((1, Coutp), lambda n: (0, 0)),
            ],
            out_specs=pl.BlockSpec((1, H, W, Coutp), lambda n: (n, 0, 0, 0)),
        ),
        compiler_params=pltpu.CompilerParams(
            dimension_semantics=("parallel",)),
    )(xp, w, b)


def max_pool_same(x, k=3, s=1, p=1):
    return lax.reduce_window(
        x, jnp.asarray(-jnp.inf, x.dtype), lax.max,
        window_dimensions=(1, k, k, 1),
        window_strides=(1, s, s, 1),
        padding=((0, 0), (p, p), (p, p), (0, 0)))


# ----------------------------------------------------------------------------
# parameter init (BN fold, branch fusion, channel padding, bf16 cast — once)
# ----------------------------------------------------------------------------
class KeyGen:
    def __init__(self, seed=0):
        self.key = jax.random.PRNGKey(seed)

    def __call__(self):
        self.key, sub = jax.random.split(self.key)
        return sub


def _conv_bn_folded(kg, cin, cout, kh, kw, eps=1e-5):
    """He-normal conv weights with eval-mode BatchNorm folded in.

    Returns wf: (kh, kw, cin, cout) f32, bias: (cout,) f32.
    """
    fan_in = cin * kh * kw
    w = jax.random.normal(kg(), (cout, cin, kh, kw), jnp.float32) * math.sqrt(
        2.0 / fan_in)
    conv_b = jnp.zeros((cout,), jnp.float32)
    gamma = jnp.ones((cout,), jnp.float32)
    beta = jnp.zeros((cout,), jnp.float32)
    mean = jnp.zeros((cout,), jnp.float32)
    var = jnp.ones((cout,), jnp.float32)
    scale = gamma / jnp.sqrt(var + eps)
    bias = beta + scale * (conv_b - mean)
    wf = jnp.transpose(w, (2, 3, 1, 0)) * scale[None, None, None, :]
    return wf, bias


def f5_init(kg, cin):
    # --- fused 1x1 heads: branch1 (64), branch2 (48), branch4 (64) read the
    #     same input -> one (cin, 384) weight, branches lane-aligned at 0/128/256.
    w1, bb1 = _conv_bn_folded(kg, cin, 64, 1, 1)
    w2, bb2 = _conv_bn_folded(kg, cin, 48, 1, 1)
    w4, bb4 = _conv_bn_folded(kg, cin, 64, 1, 1)
    head_w = jnp.zeros((cin, 384), jnp.float32)
    head_w = head_w.at[:, 0:64].set(w1.reshape(cin, 64))
    head_w = head_w.at[:, 128:176].set(w2.reshape(cin, 48))
    head_w = head_w.at[:, 256:320].set(w4.reshape(cin, 64))
    head_b = jnp.zeros((1, 384), jnp.float32)
    head_b = head_b.at[0, 0:64].set(bb1).at[0, 128:176].set(bb2)
    head_b = head_b.at[0, 256:320].set(bb4)

    def conv3(cin_real, cout_real, cin_pad):
        wf, bias = _conv_bn_folded(kg, cin_real, cout_real, 3, 3)
        wp = jnp.zeros((3, 3, cin_pad, 128), jnp.float32)
        wp = wp.at[:, :, :cin_real, :cout_real].set(wf)
        bp = jnp.zeros((1, 128), jnp.float32).at[0, :cout_real].set(bias)
        return dict(w=wp.astype(jnp.bfloat16), b=bp)

    # --- branch3: 1x1 conv after the 3x3 max pool (different input).
    w3, bb3 = _conv_bn_folded(kg, cin, 64, 1, 1)
    b3_w = jnp.zeros((cin, 128), jnp.float32).at[:, :64].set(w3.reshape(cin, 64))
    b3_b = jnp.zeros((1, 128), jnp.float32).at[0, :64].set(bb3)

    return dict(
        head_w=head_w.astype(jnp.bfloat16), head_b=head_b,
        b1_c1=conv3(64, 96, 128),    # branch1: 64 -> 96 (input channel-padded to 128)
        b1_c2=conv3(96, 96, 128),    # branch1: 96 -> 96
        b2_c1=conv3(48, 64, 128),    # branch2: 48 -> 64
        b3_w=b3_w.astype(jnp.bfloat16), b3_b=b3_b,
    )


# ----------------------------------------------------------------------------
# InceptionF5 forward
# ----------------------------------------------------------------------------
def f5_apply(params, x_nchw):
    # NCHW -> NHWC; carry activations in bf16 (f32 accumulation in the kernels).
    x = jnp.transpose(x_nchw, (0, 2, 3, 1)).astype(jnp.bfloat16)
    N, H, W, C = x.shape
    M = N * H * W
    xm = x.reshape(M, C)

    # Fused branch1/2/4 1x1 heads: one GEMM, three lane-dense 128-wide outputs.
    h1, h2, h4 = head_gemm(xm, params["head_w"], params["head_b"])
    h1 = h1.reshape(N, H, W, 128)        # real channels 0:64
    h2 = h2.reshape(N, H, W, 128)        # real channels 0:48
    a4 = h4.reshape(N, H, W, 128)        # branch4 output, real channels 0:64

    # Branch1: two 3x3 ConvBlocks (implicit GEMM, halo stays in VMEM).
    a1 = conv3x3(h1, params["b1_c1"])
    a1 = conv3x3(a1, params["b1_c2"])    # real channels 0:96

    # Branch2: one 3x3 ConvBlock.
    a2 = conv3x3(h2, params["b2_c1"])    # real channels 0:64

    # Branch3: 3x3 max pool (stride 1, pad 1) + 1x1 ConvBlock.
    xp = max_pool_same(x, 3, 1, 1)
    a3 = gemm_bias_relu(xp.reshape(M, C), params["b3_w"], params["b3_b"])
    a3 = a3.reshape(N, H, W, 128)        # real channels 0:64

    # Single slice/concat/transpose pass at the very end (channel-padded
    # domain everywhere else).
    y = jnp.concatenate(
        [a1[..., :96], a2[..., :64], a3[..., :64], a4[..., :64]], axis=-1)
    return jnp.transpose(y, (0, 3, 1, 2)).astype(jnp.float32)   # -> NCHW


if __name__ == "__main__":
    N, C, H, W = 2, 32, 16, 16
    key = jax.random.PRNGKey(0)
    x = jax.random.normal(key, (N, C, H, W), jnp.float32)   # NCHW like PyTorch

    kg = KeyGen(0)
    params = f5_init(kg, C)

    # jit the whole forward so pads, pool, slices and the Pallas calls are
    # scheduled together.
    fwd = jax.jit(lambda inp: f5_apply(params, inp))

    y = jax.block_until_ready(fwd(x))

    assert y.shape == (N, 96 + 64 + 64 + 64, H, W), y.shape
    assert bool(jnp.all(jnp.isfinite(y)))
    print("KERNEL_OK")
</pallas_src>

<mosaic_0001>
module attributes {stable_mosaic.version = 11 : i64} {
  func.func @_gemm_bias_relu_kernel(%arg0: i32, %arg1: memref<256x32xbf16, #tpu.memory_space<vmem>>, %arg2: memref<32x128xbf16, #tpu.memory_space<vmem>>, %arg3: memref<1x128xf32, #tpu.memory_space<vmem>>, %arg4: memref<256x128xbf16, #tpu.memory_space<vmem>>) attributes {dimension_semantics = [#tpu.dimension_semantics<parallel>], iteration_bounds = array<i64: 2>, scalar_prefetch = 0 : i64, scratch_operands = 0 : i64, tpu.core_type = #tpu.core_type<tc>, window_params = [{transform_indices = @transform_0, window_bounds = array<i64: 256, 32>}, {pipeline_mode = #tpu.pipeline_mode<synchronous>, transform_indices = @transform_1, window_bounds = array<i64: 32, 128>}, {pipeline_mode = #tpu.pipeline_mode<synchronous>, transform_indices = @transform_2, window_bounds = array<i64: 1, 128>}, {transform_indices = @transform_3, window_bounds = array<i64: 256, 128>}]} {
    %c0 = arith.constant 0 : index
    %c0_0 = arith.constant 0 : index
    %0 = vector.load %arg1[%c0, %c0_0] : memref<256x32xbf16, #tpu.memory_space<vmem>>, vector<256x32xbf16>
    %c0_1 = arith.constant 0 : index
    %c0_2 = arith.constant 0 : index
    %1 = vector.load %arg2[%c0_1, %c0_2] : memref<32x128xbf16, #tpu.memory_space<vmem>>, vector<32x128xbf16>
    %cst = arith.constant dense<0.000000e+00> : vector<256x128xf32>
    %2 = tpu.matmul %0, %1, %cst {dimension_numbers = #tpu.dot_dimension_numbers<[1], [0], [0], [1], [0, 0, 1, 1], [], []>} : vector<256x32xbf16>, vector<32x128xbf16>, vector<256x128xf32> -> vector<256x128xf32>
    %c0_3 = arith.constant 0 : index
    %c0_4 = arith.constant 0 : index
    %3 = vector.load %arg3[%c0_3, %c0_4] : memref<1x128xf32, #tpu.memory_space<vmem>>, vector<1x128xf32>
    %4 = vector.broadcast %3 : vector<1x128xf32> to vector<256x128xf32>
    %5 = arith.addf %2, %4 : vector<256x128xf32>
    %cst_5 = arith.constant 0.000000e+00 : f32
    %6 = vector.broadcast %cst_5 : f32 to vector<256x128xf32>
    %7 = arith.maximumf %5, %6 : vector<256x128xf32>
    %8 = arith.truncf %7 : vector<256x128xf32> to vector<256x128xbf16>
    %c0_6 = arith.constant 0 : index
    %c0_7 = arith.constant 0 : index
    %9 = vector.load %arg4[%c0_6, %c0_7] : memref<256x128xbf16, #tpu.memory_space<vmem>>, vector<256x128xbf16>
    tpu.vector_store %arg4[%c0_6, %c0_7], %8 {strides = array<i32>} : memref<256x128xbf16, #tpu.memory_space<vmem>>, vector<256x128xbf16>,
    return
  }
  func.func @transform_0(%arg0: i32) -> (i32, i32) {
    %c0_i32 = arith.constant 0 : i32
    %c0_i32_0 = arith.constant 0 : i32
    return %arg0, %c0_i32 : i32, i32
  }
  func.func @transform_1(%arg0: i32) -> (i32, i32) {
    %c0_i32 = arith.constant 0 : i32
    %c0_i32_0 = arith.constant 0 : i32
    %c0_i32_1 = arith.constant 0 : i32
    return %c0_i32, %c0_i32_0 : i32, i32
  }
  func.func @transform_2(%arg0: i32) -> (i32, i32) {
    %c0_i32 = arith.constant 0 : i32
    %c0_i32_0 = arith.constant 0 : i32
    %c0_i32_1 = arith.constant 0 : i32
    return %c0_i32, %c0_i32_0 : i32, i32
  }
  func.func @transform_3(%arg0: i32) -> (i32, i32) {
    %c0_i32 = arith.constant 0 : i32
    %c0_i32_0 = arith.constant 0 : i32
    return %arg0, %c0_i32 : i32, i32
  }
}

module attributes {stable_mosaic.version = 11 : i64} {
  func.func @_head_gemm_kernel(%arg0: i32, %arg1: memref<256x32xbf16, #tpu.memory_space<vmem>>, %arg2: memref<32x384xbf16, #tpu.memory_space<vmem>>, %arg3: memref<1x384xf32, #tpu.memory_space<vmem>>, %arg4: memref<256x128xbf16, #tpu.memory_space<vmem>>, %arg5: memref<256x128xbf16, #tpu.memory_space<vmem>>, %arg6: memref<256x128xbf16, #tpu.memory_space<vmem>>) attributes {dimension_semantics = [#tpu.dimension_semantics<parallel>], iteration_bounds = array<i64: 2>, scalar_prefetch = 0 : i64, scratch_operands = 0 : i64, tpu.core_type = #tpu.core_type<tc>, window_params = [{transform_indices = @transform_0, window_bounds = array<i64: 256, 32>}, {pipeline_mode = #tpu.pipeline_mode<synchronous>, transform_indices = @transform_1, window_bounds = array<i64: 32, 384>}, {pipeline_mode = #tpu.pipeline_mode<synchronous>, transform_indices = @transform_2, window_bounds = array<i64: 1, 384>}, {transform_indices = @transform_3, window_bounds = array<i64: 256, 128>}, {transform_indices = @transform_4, window_bounds = array<i64: 256, 128>}, {transform_indices = @transform_5, window_bounds = array<i64: 256, 128>}]} {
    %c0 = arith.constant 0 : index
    %c0_0 = arith.constant 0 : index
    %0 = vector.load %arg1[%c0, %c0_0] : memref<256x32xbf16, #tpu.memory_space<vmem>>, vector<256x32xbf16>
    %c0_1 = arith.constant 0 : index
    %c0_2 = arith.constant 0 : index
    %1 = vector.load %arg2[%c0_1, %c0_2] : memref<32x384xbf16, #tpu.memory_space<vmem>>, vector<32x384xbf16>
    %cst = arith.constant dense<0.000000e+00> : vector<256x384xf32>
    %2 = tpu.matmul %0, %1, %cst {dimension_numbers = #tpu.dot_dimension_numbers<[1], [0], [0], [1], [0, 0, 1, 1], [], []>} : vector<256x32xbf16>, vector<32x384xbf16>, vector<256x384xf32> -> vector<256x384xf32>
    %c0_3 = arith.constant 0 : index
    %c0_4 = arith.constant 0 : index
    %3 = vector.load %arg3[%c0_3, %c0_4] : memref<1x384xf32, #tpu.memory_space<vmem>>, vector<1x384xf32>
    %4 = vector.broadcast %3 : vector<1x384xf32> to vector<256x384xf32>
    %5 = arith.addf %2, %4 : vector<256x384xf32>
    %cst_5 = arith.constant 0.000000e+00 : f32
    %6 = vector.broadcast %cst_5 : f32 to vector<256x384xf32>
    %7 = arith.maximumf %5, %6 : vector<256x384xf32>
    %8 = vector.extract_strided_slice %7 {offsets = [0, 0], sizes = [256, 128], strides = [1, 1]} : vector<256x384xf32> to vector<256x128xf32>
    %9 = arith.truncf %8 : vector<256x128xf32> to vector<256x128xbf16>
    %c0_6 = arith.constant 0 : index
    %c0_7 = arith.constant 0 : index
    %10 = vector.load %arg4[%c0_6, %c0_7] : memref<256x128xbf16, #tpu.memory_space<vmem>>, vector<256x128xbf16>
    tpu.vector_store %arg4[%c0_6, %c0_7], %9 {strides = array<i32>} : memref<256x128xbf16, #tpu.memory_space<vmem>>, vector<256x128xbf16>,
    %11 = vector.extract_strided_slice %7 {offsets = [0, 128], sizes = [256, 128], strides = [1, 1]} : vector<256x384xf32> to vector<256x128xf32>
    %12 = arith.truncf %11 : vector<256x128xf32> to vector<256x128xbf16>
    %c0_8 = arith.constant 0 : index
    %c0_9 = arith.constant 0 : index
    %13 = vector.load %arg5[%c0_8, %c0_9] : memref<256x128xbf16, #tpu.memory_space<vmem>>, vector<256x128xbf16>
    tpu.vector_store %arg5[%c0_8, %c0_9], %12 {strides = array<i32>} : memref<256x128xbf16, #tpu.memory_space<vmem>>, vector<256x128xbf16>,
    %14 = vector.extract_strided_slice %7 {offsets = [0, 256], sizes = [256, 128], strides = [1, 1]} : vector<256x384xf32> to vector<256x128xf32>
    %15 = arith.truncf %14 : vector<256x128xf32> to vector<256x128xbf16>
    %c0_10 = arith.constant 0 : index
    %c0_11 = arith.constant 0 : index
    %16 = vector.load %arg6[%c0_10, %c0_11] : memref<256x128xbf16, #tpu.memory_space<vmem>>, vector<256x128xbf16>
    tpu.vector_store %arg6[%c0_10, %c0_11], %15 {strides = array<i32>} : memref<256x128xbf16, #tpu.memory_space<vmem>>, vector<256x128xbf16>,
    return
  }
  func.func @transform_0(%arg0: i32) -> (i32, i32) {
    %c0_i32 = arith.constant 0 : i32
    %c0_i32_0 = arith.constant 0 : i32
    return %arg0, %c0_i32 : i32, i32
  }
  func.func @transform_1(%arg0: i32) -> (i32, i32) {
    %c0_i32 = arith.constant 0 : i32
    %c0_i32_0 = arith.constant 0 : i32
    %c0_i32_1 = arith.constant 0 : i32
    return %c0_i32, %c0_i32_0 : i32, i32
  }
  func.func @transform_2(%arg0: i32) -> (i32, i32) {
    %c0_i32 = arith.constant 0 : i32
    %c0_i32_0 = arith.constant 0 : i32
    %c0_i32_1 = arith.constant 0 : i32
    return %c0_i32, %c0_i32_0 : i32, i32
  }
  func.func @transform_3(%arg0: i32) -> (i32, i32) {
    %c0_i32 = arith.constant 0 : i32
    %c0_i32_0 = arith.constant 0 : i32
    return %arg0, %c0_i32 : i32, i32
  }
  func.func @transform_4(%arg0: i32) -> (i32, i32) {
    %c0_i32 = arith.constant 0 : i32
    %c0_i32_0 = arith.constant 0 : i32
    return %arg0, %c0_i32 : i32, i32
  }
  func.func @transform_5(%arg0: i32) -> (i32, i32) {
    %c0_i32 = arith.constant 0 : i32
    %c0_i32_0 = arith.constant 0 : i32
    return %arg0, %c0_i32 : i32, i32
  }
}

module attributes {stable_mosaic.version = 11 : i64} {
  func.func @_conv3x3_kernel(%arg0: i32, %arg1: memref<1x18x18x128xbf16, #tpu.memory_space<vmem>>, %arg2: memref<3x3x128x128xbf16, #tpu.memory_space<vmem>>, %arg3: memref<1x128xf32, #tpu.memory_space<vmem>>, %arg4: memref<1x16x16x128xbf16, #tpu.memory_space<vmem>>) attributes {dimension_semantics = [#tpu.dimension_semantics<parallel>], iteration_bounds = array<i64: 2>, scalar_prefetch = 0 : i64, scratch_operands = 0 : i64, tpu.core_type = #tpu.core_type<tc>, window_params = [{transform_indices = @transform_0, window_bounds = array<i64: 1, 18, 18, 128>}, {pipeline_mode = #tpu.pipeline_mode<synchronous>, transform_indices = @transform_1, window_bounds = array<i64: 3, 3, 128, 128>}, {pipeline_mode = #tpu.pipeline_mode<synchronous>, transform_indices = @transform_2, window_bounds = array<i64: 1, 128>}, {transform_indices = @transform_3, window_bounds = array<i64: 1, 16, 16, 128>}]} {
    %c0 = arith.constant 0 : index
    %c0_0 = arith.constant 0 : index
    %c0_1 = arith.constant 0 : index
    %c0_2 = arith.constant 0 : index
    %0 = vector.load %arg1[%c0, %c0_0, %c0_1, %c0_2] : memref<1x18x18x128xbf16, #tpu.memory_space<vmem>>, vector<1x18x18x128xbf16>
    %1 = vector.shape_cast %0 : vector<1x18x18x128xbf16> to vector<18x18x128xbf16>
    %2 = arith.extf %1 : vector<18x18x128xbf16> to vector<18x18x128xf32>
    %cst = arith.constant 0.000000e+00 : f32
    %3 = vector.broadcast %cst : f32 to vector<256x128xf32>
    %4 = vector.extract_strided_slice %2 {offsets = [0, 0, 0], sizes = [16, 16, 128], strides = [1, 1, 1]} : vector<18x18x128xf32> to vector<16x16x128xf32>
    %5 = vector.shape_cast %4 : vector<16x16x128xf32> to vector<256x128xf32>
    %6 = arith.truncf %5 : vector<256x128xf32> to vector<256x128xbf16>
    %c0_3 = arith.constant 0 : index
    %c0_4 = arith.constant 0 : index
    %c0_5 = arith.constant 0 : index
    %c0_6 = arith.constant 0 : index
    %7 = vector.load %arg2[%c0_3, %c0_4, %c0_5, %c0_6] : memref<3x3x128x128xbf16, #tpu.memory_space<vmem>>, vector<1x1x128x128xbf16>
    %8 = vector.shape_cast %7 : vector<1x1x128x128xbf16> to vector<128x128xbf16>
    %cst_7 = arith.constant dense<0.000000e+00> : vector<256x128xf32>
    %9 = tpu.matmul %6, %8, %cst_7 {dimension_numbers = #tpu.dot_dimension_numbers<[1], [0], [0], [1], [0, 0, 1, 1], [], []>} : vector<256x128xbf16>, vector<128x128xbf16>, vector<256x128xf32> -> vector<256x128xf32>
    %10 = arith.addf %3, %9 : vector<256x128xf32>
    %11 = vector.extract_strided_slice %2 {offsets = [0, 1, 0], sizes = [16, 16, 128], strides = [1, 1, 1]} : vector<18x18x128xf32> to vector<16x16x128xf32>
    %12 = vector.shape_cast %11 : vector<16x16x128xf32> to vector<256x128xf32>
    %13 = arith.truncf %12 : vector<256x128xf32> to vector<256x128xbf16>
    %c0_8 = arith.constant 0 : index
    %c1 = arith.constant 1 : index
    %c0_9 = arith.constant 0 : index
    %c0_10 = arith.constant 0 : index
    %14 = vector.load %arg2[%c0_8, %c1, %c0_9, %c0_10] : memref<3x3x128x128xbf16, #tpu.memory_space<vmem>>, vector<1x1x128x128xbf16>
    %15 = vector.shape_cast %14 : vector<1x1x128x128xbf16> to vector<128x128xbf16>
    %cst_11 = arith.constant dense<0.000000e+00> : vector<256x128xf32>
    %16 = tpu.matmul %13, %15, %cst_11 {dimension_numbers = #tpu.dot_dimension_numbers<[1], [0], [0], [1], [0, 0, 1, 1], [], []>} : vector<256x128xbf16>, vector<128x128xbf16>, vector<256x128xf32> -> vector<256x128xf32>
    %17 = arith.addf %10, %16 : vector<256x128xf32>
    %18 = vector.extract_strided_slice %2 {offsets = [0, 2, 0], sizes = [16, 16, 128], strides = [1, 1, 1]} : vector<18x18x128xf32> to vector<16x16x128xf32>
    %19 = vector.shape_cast %18 : vector<16x16x128xf32> to vector<256x128xf32>
    %20 = arith.truncf %19 : vector<256x128xf32> to vector<256x128xbf16>
    %c0_12 = arith.constant 0 : index
    %c2 = arith.constant 2 : index
    %c0_13 = arith.constant 0 : index
    %c0_14 = arith.constant 0 : index
    %21 = vector.load %arg2[%c0_12, %c2, %c0_13, %c0_14] : memref<3x3x128x128xbf16, #tpu.memory_space<vmem>>, vector<1x1x128x128xbf16>
    %22 = vector.shape_cast %21 : vector<1x1x128x128xbf16> to vector<128x128xbf16>
    %cst_15 = arith.constant dense<0.000000e+00> : vector<256x128xf32>
    %23 = tpu.matmul %20, %22, %cst_15 {dimension_numbers = #tpu.dot_dimension_numbers<[1], [0], [0], [1], [0, 0, 1, 1], [], []>} : vector<256x128xbf16>, vector<128x128xbf16>, vector<256x128xf32> -> vector<256x128xf32>
    %24 = arith.addf %17, %23 : vector<256x128xf32>
    %25 = vector.extract_strided_slice %2 {offsets = [1, 0, 0], sizes = [16, 16, 128], strides = [1, 1, 1]} : vector<18x18x128xf32> to vector<16x16x128xf32>
    %26 = vector.shape_cast %25 : vector<16x16x128xf32> to vector<256x128xf32>
    %27 = arith.truncf %26 : vector<256x128xf32> to vector<256x128xbf16>
    %c1_16 = arith.constant 1 : index
    %c0_17 = arith.constant 0 : index
    %c0_18 = arith.constant 0 : index
    %c0_19 = arith.constant 0 : index
    %28 = vector.load %arg2[%c1_16, %c0_17, %c0_18, %c0_19] : memref<3x3x128x128xbf16, #tpu.memory_space<vmem>>, vector<1x1x128x128xbf16>
    %29 = vector.shape_cast %28 : vector<1x1x128x128xbf16> to vector<128x128xbf16>
    %cst_20 = arith.constant dense<0.000000e+00> : vector<256x128xf32>
    %30 = tpu.matmul %27, %29, %cst_20 {dimension_numbers = #tpu.dot_dimension_numbers<[1], [0], [0], [1], [0, 0, 1, 1], [], []>} : vector<256x128xbf16>, vector<128x128xbf16>, vector<256x128xf32> -> vector<256x128xf32>
    %31 = arith.addf %24, %30 : vector<256x128xf32>
    %32 = vector.extract_strided_slice %2 {offsets = [1, 1, 0], sizes = [16, 16, 128], strides = [1, 1, 1]} : vector<18x18x128xf32> to vector<16x16x128xf32>
    %33 = vector.shape_cast %32 : vector<16x16x128xf32> to vector<256x128xf32>
    %34 = arith.truncf %33 : vector<256x128xf32> to vector<256x128xbf16>
    %c1_21 = arith.constant 1 : index
    %c1_22 = arith.constant 1 : index
    %c0_23 = arith.constant 0 : index
    %c0_24 = arith.constant 0 : index
    %35 = vector.load %arg2[%c1_21, %c1_22, %c0_23, %c0_24] : memref<3x3x128x128xbf16, #tpu.memory_space<vmem>>, vector<1x1x128x128xbf16>
    %36 = vector.shape_cast %35 : vector<1x1x128x128xbf16> to vector<128x128xbf16>
    %cst_25 = arith.constant dense<0.000000e+00> : vector<256x128xf32>
    %37 = tpu.matmul %34, %36, %cst_25 {dimension_numbers = #tpu.dot_dimension_numbers<[1], [0], [0], [1], [0, 0, 1, 1], [], []>} : vector<256x128xbf16>, vector<128x128xbf16>, vector<256x128xf32> -> vector<256x128xf32>
    %38 = arith.addf %31, %37 : vector<256x128xf32>
    %39 = vector.extract_strided_slice %2 {offsets = [1, 2, 0], sizes = [16, 16, 128], strides = [1, 1, 1]} : vector<18x18x128xf32> to vector<16x16x128xf32>
    %40 = vector.shape_cast %39 : vector<16x16x128xf32> to vector<256x128xf32>
    %41 = arith.truncf %40 : vector<256x128xf32> to vector<256x128xbf16>
    %c1_26 = arith.constant 1 : index
    %c2_27 = arith.constant 2 : index
    %c0_28 = arith.constant 0 : index
    %c0_29 = arith.constant 0 : index
    %42 = vector.load %arg2[%c1_26, %c2_27, %c0_28, %c0_29] : memref<3x3x128x128xbf16, #tpu.memory_space<vmem>>, vector<1x1x128x128xbf16>
    %43 = vector.shape_cast %42 : vector<1x1x128x128xbf16> to vector<128x128xbf16>
    %cst_30 = arith.constant dense<0.000000e+00> : vector<256x128xf32>
    %44 = tpu.matmul %41, %43, %cst_30 {dimension_numbers = #tpu.dot_dimension_numbers<[1], [0], [0], [1], [0, 0, 1, 1], [], []>} : vector<256x128xbf16>, vector<128x128xbf16>, vector<256x128xf32> -> vector<256x128xf32>
    %45 = arith.addf %38, %44 : vector<256x128xf32>
    %46 = vector.extract_strided_slice %2 {offsets = [2, 0, 0], sizes = [16, 16, 128], strides = [1, 1, 1]} : vector<18x18x128xf32> to vector<16x16x128xf32>
    %47 = vector.shape_cast %46 : vector<16x16x128xf32> to vector<256x128xf32>
    %48 = arith.truncf %47 : vector<256x128xf32> to vector<256x128xbf16>
    %c2_31 = arith.constant 2 : index
    %c0_32 = arith.constant 0 : index
    %c0_33 = arith.constant 0 : index
    %c0_34 = arith.constant 0 : index
    %49 = vector.load %arg2[%c2_31, %c0_32, %c0_33, %c0_34] : memref<3x3x128x128xbf16, #tpu.memory_space<vmem>>, vector<1x1x128x128xbf16>
    %50 = vector.shape_cast %49 : vector<1x1x128x128xbf16> to vector<128x128xbf16>
    %cst_35 = arith.constant dense<0.000000e+00> : vector<256x128xf32>
    %51 = tpu.matmul %48, %50, %cst_35 {dimension_numbers = #tpu.dot_dimension_numbers<[1], [0], [0], [1], [0, 0, 1, 1], [], []>} : vector<256x128xbf16>, vector<128x128xbf16>, vector<256x128xf32> -> vector<256x128xf32>
    %52 = arith.addf %45, %51 : vector<256x128xf32>
    %53 = vector.extract_strided_slice %2 {offsets = [2, 1, 0], sizes = [16, 16, 128], strides = [1, 1, 1]} : vector<18x18x128xf32> to vector<16x16x128xf32>
    %54 = vector.shape_cast %53 : vector<16x16x128xf32> to vector<256x128xf32>
    %55 = arith.truncf %54 : vector<256x128xf32> to vector<256x128xbf16>
    %c2_36 = arith.constant 2 : index
    %c1_37 = arith.constant 1 : index
    %c0_38 = arith.constant 0 : index
    %c0_39 = arith.constant 0 : index
    %56 = vector.load %arg2[%c2_36, %c1_37, %c0_38, %c0_39] : memref<3x3x128x128xbf16, #tpu.memory_space<vmem>>, vector<1x1x128x128xbf16>
    %57 = vector.shape_cast %56 : vector<1x1x128x128xbf16> to vector<128x128xbf16>
    %cst_40 = arith.constant dense<0.000000e+00> : vector<256x128xf32>
    %58 = tpu.matmul %55, %57, %cst_40 {dimension_numbers = #tpu.dot_dimension_numbers<[1], [0], [0], [1], [0, 0, 1, 1], [], []>} : vector<256x128xbf16>, vector<128x128xbf16>, vector<256x128xf32> -> vector<256x128xf32>
    %59 = arith.addf %52, %58 : vector<256x128xf32>
    %60 = vector.extract_strided_slice %2 {offsets = [2, 2, 0], sizes = [16, 16, 128], strides = [1, 1, 1]} : vector<18x18x128xf32> to vector<16x16x128xf32>
    %61 = vector.shape_cast %60 : vector<16x16x128xf32> to vector<256x128xf32>
    %62 = arith.truncf %61 : vector<256x128xf32> to vector<256x128xbf16>
    %c2_41 = arith.constant 2 : index
    %c2_42 = arith.constant 2 : index
    %c0_43 = arith.constant 0 : index
    %c0_44 = arith.constant 0 : index
    %63 = vector.load %arg2[%c2_41, %c2_42, %c0_43, %c0_44] : memref<3x3x128x128xbf16, #tpu.memory_space<vmem>>, vector<1x1x128x128xbf16>
    %64 = vector.shape_cast %63 : vector<1x1x128x128xbf16> to vector<128x128xbf16>
    %cst_45 = arith.constant dense<0.000000e+00> : vector<256x128xf32>
    %65 = tpu.matmul %62, %64, %cst_45 {dimension_numbers = #tpu.dot_dimension_numbers<[1], [0], [0], [1], [0, 0, 1, 1], [], []>} : vector<256x128xbf16>, vector<128x128xbf16>, vector<256x128xf32> -> vector<256x128xf32>
    %66 = arith.addf %59, %65 : vector<256x128xf32>
    %c0_46 = arith.constant 0 : index
    %c0_47 = arith.constant 0 : index
    %67 = vector.load %arg3[%c0_46, %c0_47] : memref<1x128xf32, #tpu.memory_space<vmem>>, vector<1x128xf32>
    %68 = vector.broadcast %67 : vector<1x128xf32> to vector<256x128xf32>
    %69 = arith.addf %66, %68 : vector<256x128xf32>
    %cst_48 = arith.constant 0.000000e+00 : f32
    %70 = vector.broadcast %cst_48 : f32 to vector<256x128xf32>
    %71 = arith.maximumf %69, %70 : vector<256x128xf32>
    %72 = vector.shape_cast %71 : vector<256x128xf32> to vector<1x16x16x128xf32>
    %73 = arith.truncf %72 : vector<1x16x16x128xf32> to vector<1x16x16x128xbf16>
    %c0_49 = arith.constant 0 : index
    %c0_50 = arith.constant 0 : index
    %c0_51 = arith.constant 0 : index
    %c0_52 = arith.constant 0 : index
    %74 = vector.load %arg4[%c0_49, %c0_50, %c0_51, %c0_52] : memref<1x16x16x128xbf16, #tpu.memory_space<vmem>>, vector<1x16x16x128xbf16>
    tpu.vector_store %arg4[%c0_49, %c0_50, %c0_51, %c0_52], %73 {strides = array<i32>} : memref<1x16x16x128xbf16, #tpu.memory_space<vmem>>, vector<1x16x16x128xbf16>,
    return
  }
  func.func @transform_0(%arg0: i32) -> (i32, i32, i32, i32) {
    %c0_i32 = arith.constant 0 : i32
    %c0_i32_0 = arith.constant 0 : i32
    %c0_i32_1 = arith.constant 0 : i32
    %c0_i32_2 = arith.constant 0 : i32
    return %arg0, %c0_i32, %c0_i32_0, %c0_i32_1 : i32, i32, i32, i32
  }
  func.func @transform_1(%arg0: i32) -> (i32, i32, i32, i32) {
    %c0_i32 = arith.constant 0 : i32
    %c0_i32_0 = arith.constant 0 : i32
    %c0_i32_1 = arith.constant 0 : i32
    %c0_i32_2 = arith.constant 0 : i32
    %c0_i32_3 = arith.constant 0 : i32
    return %c0_i32, %c0_i32_0, %c0_i32_1, %c0_i32_2 : i32, i32, i32, i32
  }
  func.func @transform_2(%arg0: i32) -> (i32, i32) {
    %c0_i32 = arith.constant 0 : i32
    %c0_i32_0 = arith.constant 0 : i32
    %c0_i32_1 = arith.constant 0 : i32
    return %c0_i32, %c0_i32_0 : i32, i32
  }
  func.func @transform_3(%arg0: i32) -> (i32, i32, i32, i32) {
    %c0_i32 = arith.constant 0 : i32
    %c0_i32_0 = arith.constant 0 : i32
    %c0_i32_1 = arith.constant 0 : i32
    %c0_i32_2 = arith.constant 0 : i32
    return %arg0, %c0_i32, %c0_i32_0, %c0_i32_1 : i32, i32, i32, i32
  }
}

</mosaic_0001>

<llo_original>
// kernel: _lambda_.9
$region0: #{_lambda_.9}
  #allocation0 [shape = 'u32[]', space=smem, size = 0x4, offset = 0x4, fixed_abs, tag = 'smem constant byte address 0x4 - core index']
  #allocation1 [shape = 'u32[144,128]{1,0:T(1,128)}', space=vmem, size = 0x12000, scoped, tag = 'internal scratch']
  %s0 = inlined_call_operand.vmem [shape: bf16[512,32], index: 0, kind: input, shape index: {}]
  %s1 = inlined_call_operand.vmem [shape: bf16[32,128], index: 1, kind: input, shape index: {}]
  %s2 = inlined_call_operand.vmem [shape: f32[1,128], index: 2, kind: input, shape index: {}]
  %s3 = inlined_call_operand.vmem [shape: bf16[512,128], index: 3, kind: output, shape index: {}]
  %s4 = sld [smem:[#allocation0]]
  $region45: #{_lambda_.9} parent=0
    _
  %s6 = ssub.s32 1, %s4
  %s7 = scalar_select 0, %s6, %s4
  loop: start=0, step=1, limit=4
  $region2: #{_lambda_.9} parent=0 // loop_pre_header
    _
  $region3: #{_lambda_.9} parent=0 // loop_header
    %s9 = sphi 0, %s13
    %p10 = scmp.ge.s32.totalorder %s9, 4
    %s19 = sphi 0, %s21
    %s22 = sphi 0, %s19
    %s23 = sphi 0, %s22
    %s39 = sphi 0, %s23
    %s43 = sphi 0, %s43
    %s45 = sphi 0, %s43
    %s46 = sphi 0, %s45
    %s60 = sphi 0, %s46
    %s64 = sphi 0, %s64
    %s66 = sphi 0, %s64
    %s67 = sphi 0, %s66
    %s81 = sphi 0, %s67
    %s87 = sphi 0, %s89
    %s90 = sphi 0, %s87
    %s91 = sphi 0, %s90
    %s107 = sphi 0, %s91
  $region4: #{_lambda_.9} parent=0 // loop_header_branch
    %12 = sbr.rel (%p10) target = $region8
  $region5: #{_lambda_.9} parent=0 // loop_body
    %s14 = ssub.s32 %s9, 1
    %s15 = ssub.s32 %s9, 2
    %s16 = sadd.s32 %s9, 1
    %s17 = ssub.s32 %s9, %s16
    %p18 = scmp.eq.s32.totalorder %s17, 0
    %s20 = sadd.s32 %s19, 1
    %s21 = scalar_select %p18, %s19, %s20
    %p24 = pneg %p18
    %p25 = scmp.eq.s32.totalorder %s9, 1
    %p26 = por %p24, %p25
    %p27 = scmp.ne.s32.totalorder %s19, %s22
    %p28 = scmp.eq.s32.totalorder %s9, 0
    %p29 = por %p27, %p28
    %p30 = scmp.ne.s32.totalorder %s19, %s22
    %p31 = scmp.eq.s32.totalorder %s14, 1
    %p32 = por %p30, %p31
    %p33 = scmp.ne.s32.totalorder %s22, %s23
    %p34 = scmp.eq.s32.totalorder %s14, 0
    %p35 = por %p33, %p34
    %p36 = scmp.ne.s32.totalorder %s22, %s23
    %p37 = scmp.eq.s32.totalorder %s15, 1
    %p38 = por %p36, %p37
    %p40 = scmp.ne.s32.totalorder %s23, %s39
    %p41 = scmp.eq.s32.totalorder %s15, 0
    %p42 = por %p40, %p41
    %s44 = sadd.s32 %s43, 1
    %p47 = scmp.eq.s32.totalorder %s9, 1
    %p48 = scmp.ne.s32.totalorder %s43, %s45
    %p49 = scmp.eq.s32.totalorder %s9, 0
    %p50 = por %p48, %p49
    %p51 = scmp.ne.s32.totalorder %s43, %s45
    %p52 = scmp.eq.s32.totalorder %s14, 1
    %p53 = por %p51, %p52
    %p54 = scmp.ne.s32.totalorder %s45, %s46
    %p55 = scmp.eq.s32.totalorder %s14, 0
    %p56 = por %p54, %p55
    %p57 = scmp.ne.s32.totalorder %s45, %s46
    %p58 = scmp.eq.s32.totalorder %s15, 1
    %p59 = por %p57, %p58
    %p61 = scmp.ne.s32.totalorder %s46, %s60
    %p62 = scmp.eq.s32.totalorder %s15, 0
    %p63 = por %p61, %p62
    %s65 = sadd.s32 %s64, 1
    %p68 = scmp.eq.s32.totalorder %s9, 1
    %p69 = scmp.ne.s32.totalorder %s64, %s66
    %p70 = scmp.eq.s32.totalorder %s9, 0
    %p71 = por %p69, %p70
    %p72 = scmp.ne.s32.totalorder %s64, %s66
    %p73 = scmp.eq.s32.totalorder %s14, 1
    %p74 = por %p72, %p73
    %p75 = scmp.ne.s32.totalorder %s66, %s67
    %p76 = scmp.eq.s32.totalorder %s14, 0
    %p77 = por %p75, %p76
    %p78 = scmp.ne.s32.totalorder %s66, %s67
    %p79 = scmp.eq.s32.totalorder %s15, 1
    %p80 = por %p78, %p79
    %p82 = scmp.ne.s32.totalorder %s67, %s81
    %p83 = scmp.eq.s32.totalorder %s15, 0
    %p84 = por %p82, %p83
    %s85 = ssub.s32 %s9, %s16
    %p86 = scmp.eq.s32.totalorder %s85, 0
    %s88 = sadd.s32 %s87, 1
    %s89 = scalar_select %p86, %s87, %s88
    %p92 = pneg %p86
    %p93 = scmp.eq.s32.totalorder %s9, 1
    %p94 = por %p92, %p93
    %p95 = scmp.ne.s32.totalorder %s87, %s90
    %p96 = scmp.eq.s32.totalorder %s9, 0
    %p97 = por %p95, %p96
    %p98 = scmp.ne.s32.totalorder %s87, %s90
    %p99 = scmp.eq.s32.totalorder %s14, 1
    %p100 = por %p98, %p99
    %p101 = scmp.ne.s32.totalorder %s90, %s91
    %p102 = scmp.eq.s32.totalorder %s14, 0
    %p103 = por %p101, %p102
    %p104 = scmp.ne.s32.totalorder %s90, %s91
    %p105 = scmp.eq.s32.totalorder %s15, 1
    %p106 = por %p104, %p105
    %p108 = scmp.ne.s32.totalorder %s91, %s107
    %p109 = scmp.eq.s32.totalorder %s15, 0
    %p110 = por %p108, %p109
    %p111 = scmp.le.s32.totalorder 1, %s9
    %p112 = scmp.lt.s32.totalorder %s9, 3
    %p113 = pnand %p111, %p112
    %p114 = pneg %p113
    // Predicated region
    $region9: #{_lambda_.9} parent=5 // pred_check
      _
    $region10: #{_lambda_.9} parent=5 // pred_check_branch
      %116 = sbr.rel (%p113) target = $region12
    $region11: #{_lambda_.9} parent=5 // pred_region
      %s117 = ssub.s32 %s9, 1
      // Predicated region
      $region13: #{_lambda_.9} parent=11 // pred_check
        %p118 = pneg %p56
      $region14: #{_lambda_.9} parent=11 // pred_check_branch
        %120 = sbr.rel (%p118) target = $region16
      $region15: #{_lambda_.9} parent=11 // pred_region
        _
      $region16: #{_lambda_.9} parent=11 // pred_fallthru
        _
      // Predicated region
      $region17: #{_lambda_.9} parent=11 // pred_check
        %p121 = pneg %p77
      $region18: #{_lambda_.9} parent=11 // pred_check_branch
        %123 = sbr.rel (%p121) target = $region20
      $region19: #{_lambda_.9} parent=11 // pred_region
        _
      $region20: #{_lambda_.9} parent=11 // pred_fallthru
        _
    $region12: #{_lambda_.9} parent=5 // pred_fallthru
      _
    %p124 = scmp.lt.s32.totalorder %s9, 2
    // Predicated region
    $region21: #{_lambda_.9} parent=5 // pred_check
      %p125 = pneg %p124
    $region22: #{_lambda_.9} parent=5 // pred_check_branch
      %127 = sbr.rel (%p125) target = $region24
    $region23: #{_lambda_.9} parent=5 // pred_region
      // Predicated region
      $region25: #{_lambda_.9} parent=23 // pred_check
        %p128 = pneg %p29
      $region26: #{_lambda_.9} parent=23 // pred_check_branch
        %130 = sbr.rel (%p128) target = $region28
      $region27: #{_lambda_.9} parent=23 // pred_region
        %s131 = smul.u32 32, %s9
        %p132 = scmp.lt.s32.totalorder %s131, 63
        %s133 = scalar_select %p132, %s131, 63
        %s134 = smul.addr %s133, 4
        %s135 = scalar_lea.vmem %s0, %s134
        %s136 = smul.u32 32, %s9
      $region28: #{_lambda_.9} parent=23 // pred_fallthru
        _
    $region24: #{_lambda_.9} parent=5 // pred_fallthru
      _
    %p137 = scmp.le.s32.totalorder 1, %s9
    %p138 = scmp.lt.s32.totalorder %s9, 3
    %p139 = pnand %p137, %p138
    %p140 = pneg %p139
    // Predicated region
    $region29: #{_lambda_.9} parent=5 // pred_check
      _
    $region30: #{_lambda_.9} parent=5 // pred_check_branch
      %142 = sbr.rel (%p139) target = $region32
    $region31: #{_lambda_.9} parent=5 // pred_region
      %s143 = ssub.s32 %s9, 1
      %s144 = smul.u32 32, %s14
      %p145 = scmp.lt.s32.totalorder %s144, 63
      %s146 = scalar_select %p145, %s144, 63
      %s147 = smul.addr %s146, 4
      %s148 = scalar_lea.vmem %s0, %s147
      %p149 = pneg %p35
      %p150 = pneg %p32
      %p151 = pneg %p56
      %p152 = pneg %p53
      %p153 = pneg %p77
      %p154 = pneg %p74
      %p155 = pneg %p103
      %p156 = pneg %p100
      %s157 = smul.u32 32, %s14
      %p158 = scmp.lt.s32.totalorder %s157, 63
      %s159 = scalar_select %p158, %s157, 63
      %s160 = smul.addr %s159, 4
      %s161 = scalar_lea.vmem %s3, %s160
      %s162 = smul.u32 32, %s14
      %p163 = scmp.lt.s32.totalorder %s162, 63
      %s164 = scalar_select %p163, %s162, 63
      %s165 = smul.addr %s164, 4
      %s166 = scalar_lea.vmem %s0, %s165
      %s167 = smul.u32 32, %s14
      %s168 = smul.u32 32, %s14
      %p169 = scmp.lt.s32.totalorder %s168, 63
      %s170 = scalar_select %p169, %s168, 63
      %s171 = smul.addr %s170, 4
      %s172 = scalar_lea.vmem %s3, %s171
      %s173 = smul.u32 32, %s14
      %v175 = vld [vmem:[%s166] sm:$0xf]
      %v176 = vld [vmem:[%s166 + $0x4] sm:$0xf]
      %v177 = vld [vmem:[%s166 + $0x8] sm:$0xf]
      %v178 = vld [vmem:[%s166 + $0xc] sm:$0xf]
      %v179 = vld [vmem:[%s166 + $0x10] sm:$0xf]
      %v180 = vld [vmem:[%s166 + $0x14] sm:$0xf]
      %v181 = vld [vmem:[%s166 + $0x18] sm:$0xf]
      %v182 = vld [vmem:[%s166 + $0x1c] sm:$0xf]
      %v183 = vld [vmem:[%s166 + $0x20] sm:$0xf]
      %v184 = vld [vmem:[%s166 + $0x24] sm:$0xf]
      %v185 = vld [vmem:[%s166 + $0x28] sm:$0xf]
      %v186 = vld [vmem:[%s166 + $0x2c] sm:$0xf]
      %v187 = vld [vmem:[%s166 + $0x30] sm:$0xf]
      %v188 = vld [vmem:[%s166 + $0x34] sm:$0xf]
      %v189 = vld [vmem:[%s166 + $0x38] sm:$0xf]
      %v190 = vld [vmem:[%s166 + $0x3c] sm:$0xf]
      %v191 = vld [vmem:[%s166 + $0x40] sm:$0xf]
      %v192 = vld [vmem:[%s166 + $0x44] sm:$0xf]
      %v193 = vld [vmem:[%s166 + $0x48] sm:$0xf]
      %v194 = vld [vmem:[%s166 + $0x4c] sm:$0xf]
      %v195 = vld [vmem:[%s166 + $0x50] sm:$0xf]
      %v196 = vld [vmem:[%s166 + $0x54] sm:$0xf]
      %v197 = vld [vmem:[%s166 + $0x58] sm:$0xf]
      %v198 = vld [vmem:[%s166 + $0x5c] sm:$0xf]
      %v199 = vld [vmem:[%s166 + $0x60] sm:$0xf]
      %v200 = vld [vmem:[%s166 + $0x64] sm:$0xf]
      %v201 = vld [vmem:[%s166 + $0x68] sm:$0xf]
      %v202 = vld [vmem:[%s166 + $0x6c] sm:$0xf]
      %v203 = vld [vmem:[%s166 + $0x70] sm:$0xf]
      %v204 = vld [vmem:[%s166 + $0x74] sm:$0xf]
      %v205 = vld [vmem:[%s166 + $0x78] sm:$0xf]
      %v206 = vld [vmem:[%s166 + $0x7c] sm:$0xf]
      %v207 = vld [vmem:[%s1] sm:$0xf]
      %v208 = vld [vmem:[%s1 + $0x4] sm:$0xf]
      %v209 = vld [vmem:[%s1 + $0x8] sm:$0xf]
      %v210 = vld [vmem:[%s1 + $0xc] sm:$0xf]
      %v211 = vld [vmem:[%s2] sm:$0x1]
      %v213 = vlaneseq
      %v214 = vshrl.u32 %v213, 7
      %v215 = vsub.s32 0, %v214
      %v216 = vrot.slane %v211, %v215
      %v250 = vunpack.c.l.b16 %v175
      %v251 = vunpack.c.l.b16 %v176
      %v252 = vunpack.c.l.b16 %v177
      %v253 = vunpack.c.l.b16 %v178
      %v254 = vunpack.c.l.b16 %v179
      %v255 = vunpack.c.l.b16 %v180
      %v256 = vunpack.c.l.b16 %v181
      %v257 = vunpack.c.l.b16 %v182
      %v258 = vunpack.c.l.b16 %v183
      %v259 = vunpack.c.l.b16 %v184
      %v260 = vunpack.c.l.b16 %v185
      %v261 = vunpack.c.l.b16 %v186
      %v262 = vunpack.c.l.b16 %v187
      %v263 = vunpack.c.l.b16 %v188
      %v264 = vunpack.c.l.b16 %v189
      %v265 = vunpack.c.l.b16 %v190
      %v266 = vunpack.c.l.b16 %v191
      %v267 = vunpack.c.l.b16 %v192
      %v268 = vunpack.c.l.b16 %v193
      %v269 = vunpack.c.l.b16 %v194
      %v270 = vunpack.c.l.b16 %v195
      %v271 = vunpack.c.l.b16 %v196
      %v272 = vunpack.c.l.b16 %v197
      %v273 = vunpack.c.l.b16 %v198
      %v274 = vunpack.c.l.b16 %v199
      %v275 = vunpack.c.l.b16 %v200
      %v276 = vunpack.c.l.b16 %v201
      %v277 = vunpack.c.l.b16 %v202
      %v278 = vunpack.c.l.b16 %v203
      %v279 = vunpack.c.l.b16 %v204
      %v280 = vunpack.c.l.b16 %v205
      %v281 = vunpack.c.l.b16 %v206
      %v282 = vpack.c.b16 %v251, %v250
      %v283 = vpack.c.b16 %v253, %v252
      %v284 = vpack.c.b16 %v255, %v254
      %v285 = vpack.c.b16 %v257, %v256
      %v286 = vpack.c.b16 %v259, %v258
      %v287 = vpack.c.b16 %v261, %v260
      %v288 = vpack.c.b16 %v263, %v262
      %v289 = vpack.c.b16 %v265, %v264
      %v290 = vpack.c.b16 %v267, %v266
      %v291 = vpack.c.b16 %v269, %v268
      %v292 = vpack.c.b16 %v271, %v270
      %v293 = vpack.c.b16 %v273, %v272
      %v294 = vpack.c.b16 %v275, %v274
      %v295 = vpack.c.b16 %v277, %v276
      %v296 = vpack.c.b16 %v279, %v278
      %v297 = vpack.c.b16 %v281, %v280
      %v302 = vunpack.c.l.b16 %v207
      %v303 = vunpack.c.l.b16 %v208
      %v304 = vunpack.c.l.b16 %v209
      %v305 = vunpack.c.l.b16 %v210
      %v306 = vpack.c.b16 %v303, %v302
      %v307 = vpack.c.b16 %v305, %v304
      %vm310 = vcmask 261120
      %v312 = vsel %vm310, %v282, 0
      %v315 = vsel %vm310, %v283, 0
      %v318 = vsel %vm310, %v284, 0
      %v321 = vsel %vm310, %v285, 0
      %v324 = vsel %vm310, %v286, 0
      %v327 = vsel %vm310, %v287, 0
      %v330 = vsel %vm310, %v288, 0
      %v333 = vsel %vm310, %v289, 0
      %v336 = vsel %vm310, %v290, 0
      %v339 = vsel %vm310, %v291, 0
      %v342 = vsel %vm310, %v292, 0
      %v345 = vsel %vm310, %v293, 0
      %v348 = vsel %vm310, %v294, 0
      %v351 = vsel %vm310, %v295, 0
      %v354 = vsel %vm310, %v296, 0
      %v357 = vsel %vm310, %v297, 0
      %359 = vmatprep.subr.bf16.mxu0 0
      %360 = vmatpush1.bf16.msra.mxu0 %v306
      %361 = vmatprep.subr.bf16.mxu0 0
      %362 = vmatpush1.bf16.msra.mxu0 %v307
      %363 = vmatprep.subr.bf16.mxu0 0
      %364 = vmatpush1.bf16.msra.mxu0 0
      %365 = vmatprep.subr.bf16.mxu0 0
      %366 = vmatpush1.bf16.msra.mxu0 0
      %367 = vmatprep.subr.bf16.mxu0 0
      %368 = vmatpush1.bf16.msra.mxu0 0
      %369 = vmatprep.subr.bf16.mxu0 0
      %370 = vmatpush1.bf16.msra.mxu0 0
      %371 = vmatprep.subr.bf16.mxu0 0
      %372 = vmatpush1.bf16.msra.mxu0 0
      %373 = vmatprep.subr.bf16.mxu0 0
      %374 = vmatpush1.bf16.msra.mxu0 0
      %375 = vmatprep.subr.bf16.mxu0 0
      %376 = vmatpush1.bf16.msra.mxu0 0
      %377 = vmatprep.subr.bf16.mxu0 0
      %378 = vmatpush1.bf16.msra.mxu0 0
      %379 = vmatprep.subr.bf16.mxu0 0
      %380 = vmatpush1.bf16.msra.mxu0 0
      %381 = vmatprep.subr.bf16.mxu0 0
      %382 = vmatpush1.bf16.msra.mxu0 0
      %383 = vmatprep.subr.bf16.mxu0 0
      %384 = vmatpush1.bf16.msra.mxu0 0
      %385 = vmatprep.subr.bf16.mxu0 0
      %386 = vmatpush1.bf16.msra.mxu0 0
      %387 = vmatprep.subr.bf16.mxu0 0
      %388 = vmatpush1.bf16.msra.mxu0 0
      %389 = vmatprep.subr.bf16.mxu0 0
      %390 = vmatpush1.bf16.msra.mxu0 0
      %391 = vmatprep.mubr.bf16.mxu0 0
      %392 = vmatmul.mubr.bf16.gmra.mrb[0].mxu0 %v312
      %v393 = vpop.f32.mrb[0].mxu0
      %v394 = vadd.f32 %v216, %v393
      %v395 = vpop.f32.mrb[0].mxu0
      %v396 = vpop.f32.mrb[0].mxu0
      %v397 = vadd.f32 %v216, %v396
      %v398 = vpop.f32.mrb[0].mxu0
      %399 = vmatprep.mubr.bf16.mxu0 0
      %400 = vmatmul.mubr.bf16.gmra.mrb[0].mxu0 %v315
      %v401 = vpop.f32.mrb[0].mxu0
      %v402 = vadd.f32 %v216, %v401
      %v403 = vpop.f32.mrb[0].mxu0
      %v404 = vpop.f32.mrb[0].mxu0
      %v405 = vadd.f32 %v216, %v404
      %v406 = vpop.f32.mrb[0].mxu0
      %407 = vmatprep.mubr.bf16.mxu0 0
      %408 = vmatmul.mubr.bf16.gmra.mrb[0].mxu0 %v318
      %v409 = vpop.f32.mrb[0].mxu0
      %v410 = vadd.f32 %v216, %v409
      %v411 = vpop.f32.mrb[0].mxu0
      %v412 = vpop.f32.mrb[0].mxu0
      %v413 = vadd.f32 %v216, %v412
      %v414 = vpop.f32.mrb[0].mxu0
      %415 = vmatprep.mubr.bf16.mxu0 0
      %416 = vmatmul.mubr.bf16.gmra.mrb[0].mxu0 %v321
      %v417 = vpop.f32.mrb[0].mxu0
      %v418 = vadd.f32 %v216, %v417
      %v419 = vpop.f32.mrb[0].mxu0
      %v420 = vpop.f32.mrb[0].mxu0
      %v421 = vadd.f32 %v216, %v420
      %v422 = vpop.f32.mrb[0].mxu0
      %423 = vmatprep.mubr.bf16.mxu0 0
      %424 = vmatmul.mubr.bf16.gmra.mrb[0].mxu0 %v324
      %v425 = vpop.f32.mrb[0].mxu0
      %v426 = vadd.f32 %v216, %v425
      %v427 = vpop.f32.mrb[0].mxu0
      %v428 = vpop.f32.mrb[0].mxu0
      %v429 = vadd.f32 %v216, %v428
      %v430 = vpop.f32.mrb[0].mxu0
      %431 = vmatprep.mubr.bf16.mxu0 0
      %432 = vmatmul.mubr.bf16.gmra.mrb[0].mxu0 %v327
      %v433 = vpop.f32.mrb[0].mxu0
      %v434 = vadd.f32 %v216, %v433
      %v435 = vpop.f32.mrb[0].mxu0
      %v436 = vpop.f32.mrb[0].mxu0
      %v437 = vadd.f32 %v216, %v436
      %v438 = vpop.f32.mrb[0].mxu0
      %439 = vmatprep.mubr.bf16.mxu0 0
      %440 = vmatmul.mubr.bf16.gmra.mrb[0].mxu0 %v330
      %v441 = vpop.f32.mrb[0].mxu0
      %v442 = vadd.f32 %v216, %v441
      %v443 = vpop.f32.mrb[0].mxu0
      %v444 = vpop.f32.mrb[0].mxu0
      %v445 = vadd.f32 %v216, %v444
      %v446 = vpop.f32.mrb[0].mxu0
      %447 = vmatprep.mubr.bf16.mxu0 0
      %448 = vmatmul.mubr.bf16.gmra.mrb[0].mxu0 %v333
      %v449 = vpop.f32.mrb[0].mxu0
      %v450 = vadd.f32 %v216, %v449
      %v451 = vpop.f32.mrb[0].mxu0
      %v452 = vpop.f32.mrb[0].mxu0
      %v453 = vadd.f32 %v216, %v452
      %v454 = vpop.f32.mrb[0].mxu0
      %455 = vmatprep.mubr.bf16.mxu0 0
      %456 = vmatmul.mubr.bf16.gmra.mrb[0].mxu0 %v336
      %v457 = vpop.f32.mrb[0].mxu0
      %v458 = vadd.f32 %v216, %v457
      %v459 = vpop.f32.mrb[0].mxu0
      %v460 = vpop.f32.mrb[0].mxu0
      %v461 = vadd.f32 %v216, %v460
      %v462 = vpop.f32.mrb[0].mxu0
      %463 = vmatprep.mubr.bf16.mxu0 0
      %464 = vmatmul.mubr.bf16.gmra.mrb[0].mxu0 %v339
      %v465 = vpop.f32.mrb[0].mxu0
      %v466 = vadd.f32 %v216, %v465
      %v467 = vpop.f32.mrb[0].mxu0
      %v468 = vpop.f32.mrb[0].mxu0
      %v469 = vadd.f32 %v216, %v468
      %v470 = vpop.f32.mrb[0].mxu0
      %471 = vmatprep.mubr.bf16.mxu0 0
      %472 = vmatmul.mubr.bf16.gmra.mrb[0].mxu0 %v342
      %v473 = vpop.f32.mrb[0].mxu0
      %v474 = vadd.f32 %v216, %v473
      %v475 = vpop.f32.mrb[0].mxu0
      %v476 = vpop.f32.mrb[0].mxu0
      %v477 = vadd.f32 %v216, %v476
      %v478 = vpop.f32.mrb[0].mxu0
      %479 = vmatprep.mubr.bf16.mxu0 0
      %480 = vmatmul.mubr.bf16.gmra.mrb[0].mxu0 %v345
      %v481 = vpop.f32.mrb[0].mxu0
      %v482 = vadd.f32 %v216, %v481
      %v483 = vpop.f32.mrb[0].mxu0
      %v484 = vpop.f32.mrb[0].mxu0
      %v485 = vadd.f32 %v216, %v484
      %v486 = vpop.f32.mrb[0].mxu0
      %487 = vmatprep.mubr.bf16.mxu0 0
      %488 = vmatmul.mubr.bf16.gmra.mrb[0].mxu0 %v348
      %v489 = vpop.f32.mrb[0].mxu0
      %v490 = vadd.f32 %v216, %v489
      %v491 = vpop.f32.mrb[0].mxu0
      %v492 = vpop.f32.mrb[0].mxu0
      %v493 = vadd.f32 %v216, %v492
      %v494 = vpop.f32.mrb[0].mxu0
      %495 = vmatprep.mubr.bf16.mxu0 0
      %496 = vmatmul.mubr.bf16.gmra.mrb[0].mxu0 %v351
      %v497 = vpop.f32.mrb[0].mxu0
      %v498 = vadd.f32 %v216, %v497
      %v499 = vpop.f32.mrb[0].mxu0
      %v500 = vpop.f32.mrb[0].mxu0
      %v501 = vadd.f32 %v216, %v500
      %v502 = vpop.f32.mrb[0].mxu0
      %503 = vmatprep.mubr.bf16.mxu0 0
      %504 = vmatmul.mubr.bf16.gmra.mrb[0].mxu0 %v354
      %v505 = vpop.f32.mrb[0].mxu0
      %v506 = vadd.f32 %v216, %v505
      %v507 = vpop.f32.mrb[0].mxu0
      %v508 = vpop.f32.mrb[0].mxu0
      %v509 = vadd.f32 %v216, %v508
      %v510 = vpop.f32.mrb[0].mxu0
      %511 = vmatprep.mubr.bf16.mxu0 0
      %512 = vmatmul.mubr.bf16.gmra.mrb[0].mxu0 %v357
      %v513 = vpop.f32.mrb[0].mxu0
      %v514 = vadd.f32 %v216, %v513
      %v515 = vpop.f32.mrb[0].mxu0
      %v516 = vpop.f32.mrb[0].mxu0
      %v517 = vadd.f32 %v216, %v516
      %v518 = vpop.f32.mrb[0].mxu0
      %519 = vdwg.mxu0
      %v520 = vmax.f32 %v394, 0.0
      %v521 = vmax.f32 %v397, 0.0
      %v522 = vmax.f32 %v402, 0.0
      %v523 = vmax.f32 %v405, 0.0
      %v524 = vmax.f32 %v410, 0.0
      %v525 = vmax.f32 %v413, 0.0
      %v526 = vmax.f32 %v418, 0.0
      %v527 = vmax.f32 %v421, 0.0
      %v528 = vmax.f32 %v426, 0.0
      %v529 = vmax.f32 %v429, 0.0
      %v530 = vmax.f32 %v434, 0.0
      %v531 = vmax.f32 %v437, 0.0
      %v532 = vmax.f32 %v442, 0.0
      %v533 = vmax.f32 %v445, 0.0
      %v534 = vmax.f32 %v450, 0.0
      %v535 = vmax.f32 %v453, 0.0
      %v536 = vmax.f32 %v458, 0.0
      %v537 = vmax.f32 %v461, 0.0
      %v538 = vmax.f32 %v466, 0.0
      %v539 = vmax.f32 %v469, 0.0
      %v540 = vmax.f32 %v474, 0.0
      %v541 = vmax.f32 %v477, 0.0
      %v542 = vmax.f32 %v482, 0.0
      %v543 = vmax.f32 %v485, 0.0
      %v544 = vmax.f32 %v490, 0.0
      %v545 = vmax.f32 %v493, 0.0
      %v546 = vmax.f32 %v498, 0.0
      %v547 = vmax.f32 %v501, 0.0
      %v548 = vmax.f32 %v506, 0.0
      %v549 = vmax.f32 %v509, 0.0
      %v550 = vmax.f32 %v514, 0.0
      %v551 = vmax.f32 %v517, 0.0
      %v552 = vpack.c.bf16 %v521, %v520
      %v553 = vpack.c.bf16 %v523, %v522
      %v554 = vpack.c.bf16 %v525, %v524
      %v555 = vpack.c.bf16 %v527, %v526
      %v556 = vpack.c.bf16 %v529, %v528
      %v557 = vpack.c.bf16 %v531, %v530
      %v558 = vpack.c.bf16 %v533, %v532
      %v559 = vpack.c.bf16 %v535, %v534
      %v560 = vpack.c.bf16 %v537, %v536
      %v561 = vpack.c.bf16 %v539, %v538
      %v562 = vpack.c.bf16 %v541, %v540
      %v563 = vpack.c.bf16 %v543, %v542
      %v564 = vpack.c.bf16 %v545, %v544
      %v565 = vpack.c.bf16 %v547, %v546
      %v566 = vpack.c.bf16 %v549, %v548
      %v567 = vpack.c.bf16 %v551, %v550
      %v584 = vunpack.c.l.b16 %v552
      %v585 = vunpack.c.h.b16 %v552
      %v586 = vunpack.c.l.b16 %v553
      %v587 = vunpack.c.h.b16 %v553
      %v588 = vunpack.c.l.b16 %v554
      %v589 = vunpack.c.h.b16 %v554
      %v590 = vunpack.c.l.b16 %v555
      %v591 = vunpack.c.h.b16 %v555
      %v592 = vunpack.c.l.b16 %v556
      %v593 = vunpack.c.h.b16 %v556
      %v594 = vunpack.c.l.b16 %v557
      %v595 = vunpack.c.h.b16 %v557
      %v596 = vunpack.c.l.b16 %v558
      %v597 = vunpack.c.h.b16 %v558
      %v598 = vunpack.c.l.b16 %v559
      %v599 = vunpack.c.h.b16 %v559
      %v600 = vunpack.c.l.b16 %v560
      %v601 = vunpack.c.h.b16 %v560
      %v602 = vunpack.c.l.b16 %v561
      %v603 = vunpack.c.h.b16 %v561
      %v604 = vunpack.c.l.b16 %v562
      %v605 = vunpack.c.h.b16 %v562
      %v606 = vunpack.c.l.b16 %v563
      %v607 = vunpack.c.h.b16 %v563
      %v608 = vunpack.c.l.b16 %v564
      %v609 = vunpack.c.h.b16 %v564
      %v610 = vunpack.c.l.b16 %v565
      %v611 = vunpack.c.h.b16 %v565
      %v612 = vunpack.c.l.b16 %v566
      %v613 = vunpack.c.h.b16 %v566
      %v614 = vunpack.c.l.b16 %v567
      %v615 = vunpack.c.h.b16 %v567
      %v616 = vpack.c.b16 %v584, %v584
      %v617 = vpack.c.b16 %v585, %v585
      %v618 = vpack.c.b16 %v586, %v586
      %v619 = vpack.c.b16 %v587, %v587
      %v620 = vpack.c.b16 %v588, %v588
      %v621 = vpack.c.b16 %v589, %v589
      %v622 = vpack.c.b16 %v590, %v590
      %v623 = vpack.c.b16 %v591, %v591
      %v624 = vpack.c.b16 %v592, %v592
      %v625 = vpack.c.b16 %v593, %v593
      %v626 = vpack.c.b16 %v594, %v594
      %v627 = vpack.c.b16 %v595, %v595
      %v628 = vpack.c.b16 %v596, %v596
      %v629 = vpack.c.b16 %v597, %v597
      %v630 = vpack.c.b16 %v598, %v598
      %v631 = vpack.c.b16 %v599, %v599
      %v632 = vpack.c.b16 %v600, %v600
      %v633 = vpack.c.b16 %v601, %v601
      %v634 = vpack.c.b16 %v602, %v602
      %v635 = vpack.c.b16 %v603, %v603
      %v636 = vpack.c.b16 %v604, %v604
      %v637 = vpack.c.b16 %v605, %v605
      %v638 = vpack.c.b16 %v606, %v606
      %v639 = vpack.c.b16 %v607, %v607
      %v640 = vpack.c.b16 %v608, %v608
      %v641 = vpack.c.b16 %v609, %v609
      %v642 = vpack.c.b16 %v610, %v610
      %v643 = vpack.c.b16 %v611, %v611
      %v644 = vpack.c.b16 %v612, %v612
      %v645 = vpack.c.b16 %v613, %v613
      %v646 = vpack.c.b16 %v614, %v614
      %v647 = vpack.c.b16 %v615, %v615
      %680 = vst [vmem:[%s172] sm:$0xf] %v616
      %681 = vst [vmem:[%s172 + $0x4] sm:$0xf] %v617
      %682 = vst [vmem:[%s172 + $0x8] sm:$0xf] %v618
      %683 = vst [vmem:[%s172 + $0xc] sm:$0xf] %v619
      %684 = vst [vmem:[%s172 + $0x10] sm:$0xf] %v620
      %685 = vst [vmem:[%s172 + $0x14] sm:$0xf] %v621
      %686 = vst [vmem:[%s172 + $0x18] sm:$0xf] %v622
      %687 = vst [vmem:[%s172 + $0x1c] sm:$0xf] %v623
      %688 = vst [vmem:[%s172 + $0x20] sm:$0xf] %v624
      %689 = vst [vmem:[%s172 + $0x24] sm:$0xf] %v625
      %690 = vst [vmem:[%s172 + $0x28] sm:$0xf] %v626
      %691 = vst [vmem:[%s172 + $0x2c] sm:$0xf] %v627
      %692 = vst [vmem:[%s172 + $0x30] sm:$0xf] %v628
      %693 = vst [vmem:[%s172 + $0x34] sm:$0xf] %v629
      %694 = vst [vmem:[%s172 + $0x38] sm:$0xf] %v630
      %695 = vst [vmem:[%s172 + $0x3c] sm:$0xf] %v631
      %696 = vst [vmem:[%s172 + $0x40] sm:$0xf] %v632
      %697 = vst [vmem:[%s172 + $0x44] sm:$0xf] %v633
      %698 = vst [vmem:[%s172 + $0x48] sm:$0xf] %v634
      %699 = vst [vmem:[%s172 + $0x4c] sm:$0xf] %v635
      %700 = vst [vmem:[%s172 + $0x50] sm:$0xf] %v636
      %701 = vst [vmem:[%s172 + $0x54] sm:$0xf] %v637
      %702 = vst [vmem:[%s172 + $0x58] sm:$0xf] %v638
      %703 = vst [vmem:[%s172 + $0x5c] sm:$0xf] %v639
      %704 = vst [vmem:[%s172 + $0x60] sm:$0xf] %v640
      %705 = vst [vmem:[%s172 + $0x64] sm:$0xf] %v641
      %706 = vst [vmem:[%s172 + $0x68] sm:$0xf] %v642
      %707 = vst [vmem:[%s172 + $0x6c] sm:$0xf] %v643
      %708 = vst [vmem:[%s172 + $0x70] sm:$0xf] %v644
      %709 = vst [vmem:[%s172 + $0x74] sm:$0xf] %v645
      %710 = vst [vmem:[%s172 + $0x78] sm:$0xf] %v646
      %711 = vst [vmem:[%s172 + $0x7c] sm:$0xf] %v647
      %s712 = smul.u32 32, %s14
      %p713 = scmp.lt.s32.totalorder %s712, 63
      %s714 = scalar_select %p713, %s712, 63
      %s715 = smul.addr %s714, 4
      %s716 = scalar_lea.vmem %s3, %s715
      // Predicated region
      $region33: #{_lambda_.9} parent=31 // pred_check
        %p717 = pneg %p100
      $region34: #{_lambda_.9} parent=31 // pred_check_branch
        %719 = sbr.rel (%p717) target = $region36
      $region35: #{_lambda_.9} parent=31 // pred_region
        %s720 = smul.u32 32, %s14
      $region36: #{_lambda_.9} parent=31 // pred_fallthru
        _
    $region32: #{_lambda_.9} parent=5 // pred_fallthru
      _
    %p721 = scmp.le.s32.totalorder 2, %s9
    // Predicated region
    $region37: #{_lambda_.9} parent=5 // pred_check
      %p722 = pneg %p721
    $region38: #{_lambda_.9} parent=5 // pred_check_branch
      %724 = sbr.rel (%p722) target = $region40
    $region39: #{_lambda_.9} parent=5 // pred_region
      %s725 = ssub.s32 %s9, 2
      // Predicated region
      $region41: #{_lambda_.9} parent=39 // pred_check
        %p726 = pneg %p106
      $region42: #{_lambda_.9} parent=39 // pred_check_branch
        %728 = sbr.rel (%p726) target = $region44
      $region43: #{_lambda_.9} parent=39 // pred_region
        %s729 = smul.u32 32, %s15
        %p730 = scmp.lt.s32.totalorder %s729, 63
        %s731 = scalar_select %p730, %s729, 63
        %s732 = smul.addr %s731, 4
        %s733 = scalar_lea.vmem %s3, %s732
      $region44: #{_lambda_.9} parent=39 // pred_fallthru
        _
    $region40: #{_lambda_.9} parent=5 // pred_fallthru
      _
  $region6: #{_lambda_.9} parent=0 // loop_footer
    %s13 = sadd.s32 1, %s9
  $region7: #{_lambda_.9} parent=0 // loop_footer_branch
    %8 = sbr.rel target = $region3
  $region8: #{_lambda_.9} parent=0 // loop_exit
    _

// kernel: _lambda_.5
$region0: #{_lambda_.5}
  #allocation0 [shape = 'u32[]', space=smem, size = 0x4, offset = 0x4, fixed_abs, tag = 'smem constant byte address 0x4 - core index']
  #allocation1 [shape = 'u32[144,128]{1,0:T(1,128)}', space=vmem, size = 0x12000, scoped, tag = 'internal scratch']
  %s0 = inlined_call_operand.vmem [shape: bf16[512,32], index: 0, kind: input, shape index: {}]
  %s1 = inlined_call_operand.vmem [shape: bf16[32,384], index: 1, kind: input, shape index: {}]
  %s2 = inlined_call_operand.vmem [shape: f32[1,384], index: 2, kind: input, shape index: {}]
  %s3 = inlined_call_operand.vmem [shape: bf16[512,128], index: 3, kind: output, shape index: {0}]
  %s4 = inlined_call_operand.vmem [shape: bf16[512,128], index: 4, kind: output, shape index: {1}]
  %s5 = inlined_call_operand.vmem [shape: bf16[512,128], index: 5, kind: output, shape index: {2}]
  %6 = xla_tuple %s3, %s4, %s5
  %s7 = sld [smem:[#allocation0]]
  $region61: #{_lambda_.5} parent=0
    _
  %s9 = ssub.s32 1, %s7
  %s10 = scalar_select 0, %s9, %s7
  loop: start=0, step=1, limit=4
  $region2: #{_lambda_.5} parent=0 // loop_pre_header
    _
  $region3: #{_lambda_.5} parent=0 // loop_header
    %s12 = sphi 0, %s16
    %p13 = scmp.ge.s32.totalorder %s12, 4
    %s22 = sphi 0, %s24
    %s25 = sphi 0, %s22
    %s26 = sphi 0, %s25
    %s42 = sphi 0, %s26
    %s46 = sphi 0, %s46
    %s48 = sphi 0, %s46
    %s49 = sphi 0, %s48
    %s63 = sphi 0, %s49
    %s67 = sphi 0, %s67
    %s69 = sphi 0, %s67
    %s70 = sphi 0, %s69
    %s84 = sphi 0, %s70
    %s90 = sphi 0, %s92
    %s93 = sphi 0, %s90
    %s94 = sphi 0, %s93
    %s110 = sphi 0, %s94
    %s116 = sphi 0, %s118
    %s119 = sphi 0, %s116
    %s120 = sphi 0, %s119
    %s136 = sphi 0, %s120
    %s142 = sphi 0, %s144
    %s145 = sphi 0, %s142
    %s146 = sphi 0, %s145
    %s162 = sphi 0, %s146
  $region4: #{_lambda_.5} parent=0 // loop_header_branch
    %15 = sbr.rel (%p13) target = $region8
  $region5: #{_lambda_.5} parent=0 // loop_body
    %s17 = ssub.s32 %s12, 1
    %s18 = ssub.s32 %s12, 2
    %s19 = sadd.s32 %s12, 1
    %s20 = ssub.s32 %s12, %s19
    %p21 = scmp.eq.s32.totalorder %s20, 0
    %s23 = sadd.s32 %s22, 1
    %s24 = scalar_select %p21, %s22, %s23
    %p27 = pneg %p21
    %p28 = scmp.eq.s32.totalorder %s12, 1
    %p29 = por %p27, %p28
    %p30 = scmp.ne.s32.totalorder %s22, %s25
    %p31 = scmp.eq.s32.totalorder %s12, 0
    %p32 = por %p30, %p31
    %p33 = scmp.ne.s32.totalorder %s22, %s25
    %p34 = scmp.eq.s32.totalorder %s17, 1
    %p35 = por %p33, %p34
    %p36 = scmp.ne.s32.totalorder %s25, %s26
    %p37 = scmp.eq.s32.totalorder %s17, 0
    %p38 = por %p36, %p37
    %p39 = scmp.ne.s32.totalorder %s25, %s26
    %p40 = scmp.eq.s32.totalorder %s18, 1
    %p41 = por %p39, %p40
    %p43 = scmp.ne.s32.totalorder %s26, %s42
    %p44 = scmp.eq.s32.totalorder %s18, 0
    %p45 = por %p43, %p44
    %s47 = sadd.s32 %s46, 1
    %p50 = scmp.eq.s32.totalorder %s12, 1
    %p51 = scmp.ne.s32.totalorder %s46, %s48
    %p52 = scmp.eq.s32.totalorder %s12, 0
    %p53 = por %p51, %p52
    %p54 = scmp.ne.s32.totalorder %s46, %s48
    %p55 = scmp.eq.s32.totalorder %s17, 1
    %p56 = por %p54, %p55
    %p57 = scmp.ne.s32.totalorder %s48, %s49
    %p58 = scmp.eq.s32.totalorder %s17, 0
    %p59 = por %p57, %p58
    %p60 = scmp.ne.s32.totalorder %s48, %s49
    %p61 = scmp.eq.s32.totalorder %s18, 1
    %p62 = por %p60, %p61
    %p64 = scmp.ne.s32.totalorder %s49, %s63
    %p65 = scmp.eq.s32.totalorder %s18, 0
    %p66 = por %p64, %p65
    %s68 = sadd.s32 %s67, 1
    %p71 = scmp.eq.s32.totalorder %s12, 1
    %p72 = scmp.ne.s32.totalorder %s67, %s69
    %p73 = scmp.eq.s32.totalorder %s12, 0
    %p74 = por %p72, %p73
    %p75 = scmp.ne.s32.totalorder %s67, %s69
    %p76 = scmp.eq.s32.totalorder %s17, 1
    %p77 = por %p75, %p76
    %p78 = scmp.ne.s32.totalorder %s69, %s70
    %p79 = scmp.eq.s32.totalorder %s17, 0
    %p80 = por %p78, %p79
    %p81 = scmp.ne.s32.totalorder %s69, %s70
    %p82 = scmp.eq.s32.totalorder %s18, 1
    %p83 = por %p81, %p82
    %p85 = scmp.ne.s32.totalorder %s70, %s84
    %p86 = scmp.eq.s32.totalorder %s18, 0
    %p87 = por %p85, %p86
    %s88 = ssub.s32 %s12, %s19
    %p89 = scmp.eq.s32.totalorder %s88, 0
    %s91 = sadd.s32 %s90, 1
    %s92 = scalar_select %p89, %s90, %s91
    %p95 = pneg %p89
    %p96 = scmp.eq.s32.totalorder %s12, 1
    %p97 = por %p95, %p96
    %p98 = scmp.ne.s32.totalorder %s90, %s93
    %p99 = scmp.eq.s32.totalorder %s12, 0
    %p100 = por %p98, %p99
    %p101 = scmp.ne.s32.totalorder %s90, %s93
    %p102 = scmp.eq.s32.totalorder %s17, 1
    %p103 = por %p101, %p102
    %p104 = scmp.ne.s32.totalorder %s93, %s94
    %p105 = scmp.eq.s32.totalorder %s17, 0
    %p106 = por %p104, %p105
    %p107 = scmp.ne.s32.totalorder %s93, %s94
    %p108 = scmp.eq.s32.totalorder %s18, 1
    %p109 = por %p107, %p108
    %p111 = scmp.ne.s32.totalorder %s94, %s110
    %p112 = scmp.eq.s32.totalorder %s18, 0
    %p113 = por %p111, %p112
    %s114 = ssub.s32 %s12, %s19
    %p115 = scmp.eq.s32.totalorder %s114, 0
    %s117 = sadd.s32 %s116, 1
    %s118 = scalar_select %p115, %s116, %s117
    %p121 = pneg %p115
    %p122 = scmp.eq.s32.totalorder %s12, 1
    %p123 = por %p121, %p122
    %p124 = scmp.ne.s32.totalorder %s116, %s119
    %p125 = scmp.eq.s32.totalorder %s12, 0
    %p126 = por %p124, %p125
    %p127 = scmp.ne.s32.totalorder %s116, %s119
    %p128 = scmp.eq.s32.totalorder %s17, 1
    %p129 = por %p127, %p128
    %p130 = scmp.ne.s32.totalorder %s119, %s120
    %p131 = scmp.eq.s32.totalorder %s17, 0
    %p132 = por %p130, %p131
    %p133 = scmp.ne.s32.totalorder %s119, %s120
    %p134 = scmp.eq.s32.totalorder %s18, 1
    %p135 = por %p133, %p134
    %p137 = scmp.ne.s32.totalorder %s120, %s136
    %p138 = scmp.eq.s32.totalorder %s18, 0
    %p139 = por %p137, %p138
    %s140 = ssub.s32 %s12, %s19
    %p141 = scmp.eq.s32.totalorder %s140, 0
    %s143 = sadd.s32 %s142, 1
    %s144 = scalar_select %p141, %s142, %s143
    %p147 = pneg %p141
    %p148 = scmp.eq.s32.totalorder %s12, 1
    %p149 = por %p147, %p148
    %p150 = scmp.ne.s32.totalorder %s142, %s145
    %p151 = scmp.eq.s32.totalorder %s12, 0
    %p152 = por %p150, %p151
    %p153 = scmp.ne.s32.totalorder %s142, %s145
    %p154 = scmp.eq.s32.totalorder %s17, 1
    %p155 = por %p153, %p154
    %p156 = scmp.ne.s32.totalorder %s145, %s146
    %p157 = scmp.eq.s32.totalorder %s17, 0
    %p158 = por %p156, %p157
    %p159 = scmp.ne.s32.totalorder %s145, %s146
    %p160 = scmp.eq.s32.totalorder %s18, 1
    %p161 = por %p159, %p160
    %p163 = scmp.ne.s32.totalorder %s146, %s162
    %p164 = scmp.eq.s32.totalorder %s18, 0
    %p165 = por %p163, %p164
    %p166 = scmp.le.s32.totalorder 1, %s12
    %p167 = scmp.lt.s32.totalorder %s12, 3
    %p168 = pnand %p166, %p167
    %p169 = pneg %p168
    // Predicated region
    $region9: #{_lambda_.5} parent=5 // pred_check
      _
    $region10: #{_lambda_.5} parent=5 // pred_check_branch
      %171 = sbr.rel (%p168) target = $region12
    $region11: #{_lambda_.5} parent=5 // pred_region
      %s172 = ssub.s32 %s12, 1
      // Predicated region
      $region13: #{_lambda_.5} parent=11 // pred_check
        %p173 = pneg %p59
      $region14: #{_lambda_.5} parent=11 // pred_check_branch
        %175 = sbr.rel (%p173) target = $region16
      $region15: #{_lambda_.5} parent=11 // pred_region
        _
      $region16: #{_lambda_.5} parent=11 // pred_fallthru
        _
      // Predicated region
      $region17: #{_lambda_.5} parent=11 // pred_check
        %p176 = pneg %p80
      $region18: #{_lambda_.5} parent=11 // pred_check_branch
        %178 = sbr.rel (%p176) target = $region20
      $region19: #{_lambda_.5} parent=11 // pred_region
        _
      $region20: #{_lambda_.5} parent=11 // pred_fallthru
        _
    $region12: #{_lambda_.5} parent=5 // pred_fallthru
      _
    %p179 = scmp.lt.s32.totalorder %s12, 2
    // Predicated region
    $region21: #{_lambda_.5} parent=5 // pred_check
      %p180 = pneg %p179
    $region22: #{_lambda_.5} parent=5 // pred_check_branch
      %182 = sbr.rel (%p180) target = $region24
    $region23: #{_lambda_.5} parent=5 // pred_region
      // Predicated region
      $region25: #{_lambda_.5} parent=23 // pred_check
        %p183 = pneg %p32
      $region26: #{_lambda_.5} parent=23 // pred_check_branch
        %185 = sbr.rel (%p183) target = $region28
      $region27: #{_lambda_.5} parent=23 // pred_region
        %s186 = smul.u32 32, %s12
        %p187 = scmp.lt.s32.totalorder %s186, 63
        %s188 = scalar_select %p187, %s186, 63
        %s189 = smul.addr %s188, 4
        %s190 = scalar_lea.vmem %s0, %s189
        %s191 = smul.u32 32, %s12
      $region28: #{_lambda_.5} parent=23 // pred_fallthru
        _
    $region24: #{_lambda_.5} parent=5 // pred_fallthru
      _
    %p192 = scmp.le.s32.totalorder 1, %s12
    %p193 = scmp.lt.s32.totalorder %s12, 3
    %p194 = pnand %p192, %p193
    %p195 = pneg %p194
    // Predicated region
    $region29: #{_lambda_.5} parent=5 // pred_check
      _
    $region30: #{_lambda_.5} parent=5 // pred_check_branch
      %197 = sbr.rel (%p194) target = $region32
    $region31: #{_lambda_.5} parent=5 // pred_region
      %s198 = ssub.s32 %s12, 1
      %s199 = smul.u32 32, %s17
      %p200 = scmp.lt.s32.totalorder %s199, 63
      %s201 = scalar_select %p200, %s199, 63
      %s202 = smul.addr %s201, 4
      %s203 = scalar_lea.vmem %s0, %s202
      %p204 = pneg %p38
      %p205 = pneg %p35
      %p206 = pneg %p59
      %p207 = pneg %p56
      %p208 = pneg %p80
      %p209 = pneg %p77
      %p210 = pneg %p106
      %p211 = pneg %p103
      %s212 = smul.u32 32, %s17
      %p213 = scmp.lt.s32.totalorder %s212, 63
      %s214 = scalar_select %p213, %s212, 63
      %s215 = smul.addr %s214, 4
      %s216 = scalar_lea.vmem %s3, %s215
      %p217 = pneg %p132
      %p218 = pneg %p129
      %s219 = smul.u32 32, %s17
      %p220 = scmp.lt.s32.totalorder %s219, 63
      %s221 = scalar_select %p220, %s219, 63
      %s222 = smul.addr %s221, 4
      %s223 = scalar_lea.vmem %s4, %s222
      %p224 = pneg %p158
      %p225 = pneg %p155
      %s226 = smul.u32 32, %s17
      %p227 = scmp.lt.s32.totalorder %s226, 63
      %s228 = scalar_select %p227, %s226, 63
      %s229 = smul.addr %s228, 4
      %s230 = scalar_lea.vmem %s5, %s229
      %s231 = smul.u32 32, %s17
      %p232 = scmp.lt.s32.totalorder %s231, 63
      %s233 = scalar_select %p232, %s231, 63
      %s234 = smul.addr %s233, 4
      %s235 = scalar_lea.vmem %s0, %s234
      %s236 = smul.u32 32, %s17
      %s237 = smul.u32 32, %s17
      %p238 = scmp.lt.s32.totalorder %s237, 63
      %s239 = scalar_select %p238, %s237, 63
      %s240 = smul.addr %s239, 4
      %s241 = scalar_lea.vmem %s3, %s240
      %s242 = smul.u32 32, %s17
      %s243 = smul.u32 32, %s17
      %p244 = scmp.lt.s32.totalorder %s243, 63
      %s245 = scalar_select %p244, %s243, 63
      %s246 = smul.addr %s245, 4
      %s247 = scalar_lea.vmem %s4, %s246
      %s248 = smul.u32 32, %s17
      %s249 = smul.u32 32, %s17
      %p250 = scmp.lt.s32.totalorder %s249, 63
      %s251 = scalar_select %p250, %s249, 63
      %s252 = smul.addr %s251, 4
      %s253 = scalar_lea.vmem %s5, %s252
      %s254 = smul.u32 32, %s17
      %v256 = vld [vmem:[%s235] sm:$0xf]
      %v257 = vld [vmem:[%s235 + $0x4] sm:$0xf]
      %v258 = vld [vmem:[%s235 + $0x8] sm:$0xf]
      %v259 = vld [vmem:[%s235 + $0xc] sm:$0xf]
      %v260 = vld [vmem:[%s235 + $0x10] sm:$0xf]
      %v261 = vld [vmem:[%s235 + $0x14] sm:$0xf]
      %v262 = vld [vmem:[%s235 + $0x18] sm:$0xf]
      %v263 = vld [vmem:[%s235 + $0x1c] sm:$0xf]
      %v264 = vld [vmem:[%s235 + $0x20] sm:$0xf]
      %v265 = vld [vmem:[%s235 + $0x24] sm:$0xf]
      %v266 = vld [vmem:[%s235 + $0x28] sm:$0xf]
      %v267 = vld [vmem:[%s235 + $0x2c] sm:$0xf]
      %v268 = vld [vmem:[%s235 + $0x30] sm:$0xf]
      %v269 = vld [vmem:[%s235 + $0x34] sm:$0xf]
      %v270 = vld [vmem:[%s235 + $0x38] sm:$0xf]
      %v271 = vld [vmem:[%s235 + $0x3c] sm:$0xf]
      %v272 = vld [vmem:[%s235 + $0x40] sm:$0xf]
      %v273 = vld [vmem:[%s235 + $0x44] sm:$0xf]
      %v274 = vld [vmem:[%s235 + $0x48] sm:$0xf]
      %v275 = vld [vmem:[%s235 + $0x4c] sm:$0xf]
      %v276 = vld [vmem:[%s235 + $0x50] sm:$0xf]
      %v277 = vld [vmem:[%s235 + $0x54] sm:$0xf]
      %v278 = vld [vmem:[%s235 + $0x58] sm:$0xf]
      %v279 = vld [vmem:[%s235 + $0x5c] sm:$0xf]
      %v280 = vld [vmem:[%s235 + $0x60] sm:$0xf]
      %v281 = vld [vmem:[%s235 + $0x64] sm:$0xf]
      %v282 = vld [vmem:[%s235 + $0x68] sm:$0xf]
      %v283 = vld [vmem:[%s235 + $0x6c] sm:$0xf]
      %v284 = vld [vmem:[%s235 + $0x70] sm:$0xf]
      %v285 = vld [vmem:[%s235 + $0x74] sm:$0xf]
      %v286 = vld [vmem:[%s235 + $0x78] sm:$0xf]
      %v287 = vld [vmem:[%s235 + $0x7c] sm:$0xf]
      %v288 = vld [vmem:[%s1] sm:$0xff]
      %v289 = vld [vmem:[%s1 + $0x8] sm:$0xf]
      %v290 = vld [vmem:[%s1 + $0xc] sm:$0xff]
      %v291 = vld [vmem:[%s1 + $0x14] sm:$0xf]
      %v292 = vld [vmem:[%s1 + $0x18] sm:$0xff]
      %v293 = vld [vmem:[%s1 + $0x20] sm:$0xf]
      %v294 = vld [vmem:[%s1 + $0x24] sm:$0xff]
      %v295 = vld [vmem:[%s1 + $0x2c] sm:$0xf]
      %v296 = vld [vmem:[%s2] sm:$0x7]
      %v298 = vlaneseq
      %v299 = vshrl.u32 %v298, 7
      %v300 = vsub.s32 0, %v299
      %v301 = vrot.slane %v296, %v300
      %v302 = vlaneseq
      %v303 = vshrl.u32 %v302, 7
      %v304 = vsub.s32 1, %v303
      %v305 = vrot.slane %v296, %v304
      %v306 = vlaneseq
      %v307 = vshrl.u32 %v306, 7
      %v308 = vsub.s32 2, %v307
      %v309 = vrot.slane %v296, %v308
      %v345 = vunpack.c.l.b16 %v256
      %v346 = vunpack.c.l.b16 %v257
      %v347 = vunpack.c.l.b16 %v258
      %v348 = vunpack.c.l.b16 %v259
      %v349 = vunpack.c.l.b16 %v260
      %v350 = vunpack.c.l.b16 %v261
      %v351 = vunpack.c.l.b16 %v262
      %v352 = vunpack.c.l.b16 %v263
      %v353 = vunpack.c.l.b16 %v264
      %v354 = vunpack.c.l.b16 %v265
      %v355 = vunpack.c.l.b16 %v266
      %v356 = vunpack.c.l.b16 %v267
      %v357 = vunpack.c.l.b16 %v268
      %v358 = vunpack.c.l.b16 %v269
      %v359 = vunpack.c.l.b16 %v270
      %v360 = vunpack.c.l.b16 %v271
      %v361 = vunpack.c.l.b16 %v272
      %v362 = vunpack.c.l.b16 %v273
      %v363 = vunpack.c.l.b16 %v274
      %v364 = vunpack.c.l.b16 %v275
      %v365 = vunpack.c.l.b16 %v276
      %v366 = vunpack.c.l.b16 %v277
      %v367 = vunpack.c.l.b16 %v278
      %v368 = vunpack.c.l.b16 %v279
      %v369 = vunpack.c.l.b16 %v280
      %v370 = vunpack.c.l.b16 %v281
      %v371 = vunpack.c.l.b16 %v282
      %v372 = vunpack.c.l.b16 %v283
      %v373 = vunpack.c.l.b16 %v284
      %v374 = vunpack.c.l.b16 %v285
      %v375 = vunpack.c.l.b16 %v286
      %v376 = vunpack.c.l.b16 %v287
      %v377 = vpack.c.b16 %v346, %v345
      %v378 = vpack.c.b16 %v348, %v347
      %v379 = vpack.c.b16 %v350, %v349
      %v380 = vpack.c.b16 %v352, %v351
      %v381 = vpack.c.b16 %v354, %v353
      %v382 = vpack.c.b16 %v356, %v355
      %v383 = vpack.c.b16 %v358, %v357
      %v384 = vpack.c.b16 %v360, %v359
      %v385 = vpack.c.b16 %v362, %v361
      %v386 = vpack.c.b16 %v364, %v363
      %v387 = vpack.c.b16 %v366, %v365
      %v388 = vpack.c.b16 %v368, %v367
      %v389 = vpack.c.b16 %v370, %v369
      %v390 = vpack.c.b16 %v372, %v371
      %v391 = vpack.c.b16 %v374, %v373
      %v392 = vpack.c.b16 %v376, %v375
      %v401 = vunpack.c.l.b16 %v288
      %v402 = vunpack.c.h.b16 %v288
      %v403 = vunpack.c.l.b16 %v289
      %v404 = vunpack.c.l.b16 %v290
      %v405 = vunpack.c.h.b16 %v290
      %v406 = vunpack.c.l.b16 %v291
      %v407 = vunpack.c.l.b16 %v292
      %v408 = vunpack.c.h.b16 %v292
      %v409 = vunpack.c.l.b16 %v293
      %v410 = vunpack.c.l.b16 %v294
      %v411 = vunpack.c.h.b16 %v294
      %v412 = vunpack.c.l.b16 %v295
      %v413 = vpack.c.b16 %v404, %v401
      %v414 = vpack.c.b16 %v405, %v402
      %v415 = vpack.c.b16 %v406, %v403
      %v416 = vpack.c.b16 %v410, %v407
      %v417 = vpack.c.b16 %v411, %v408
      %v418 = vpack.c.b16 %v412, %v409
      %vm425 = vcmask 261120
      %v427 = vsel %vm425, %v377, 0
      %v430 = vsel %vm425, %v378, 0
      %v433 = vsel %vm425, %v379, 0
      %v436 = vsel %vm425, %v380, 0
      %v439 = vsel %vm425, %v381, 0
      %v442 = vsel %vm425, %v382, 0
      %v445 = vsel %vm425, %v383, 0
      %v448 = vsel %vm425, %v384, 0
      %v451 = vsel %vm425, %v385, 0
      %v454 = vsel %vm425, %v386, 0
      %v457 = vsel %vm425, %v387, 0
      %v460 = vsel %vm425, %v388, 0
      %v463 = vsel %vm425, %v389, 0
      %v466 = vsel %vm425, %v390, 0
      %v469 = vsel %vm425, %v391, 0
      %v472 = vsel %vm425, %v392, 0
      %474 = vmatprep.subr.bf16.mxu0 %v414
      %475 = vmatpush1.bf16.msra.mxu0 %v413
      %476 = vmatprep.subr.bf16.mxu0 %v417
      %477 = vmatpush1.bf16.msra.mxu0 %v416
      %478 = vmatprep.subr.bf16.mxu0 0
      %479 = vmatpush1.bf16.msra.mxu0 0
      %480 = vmatprep.subr.bf16.mxu0 0
      %481 = vmatpush1.bf16.msra.mxu0 0
      %482 = vmatprep.subr.bf16.mxu0 0
      %483 = vmatpush1.bf16.msra.mxu0 0
      %484 = vmatprep.subr.bf16.mxu0 0
      %485 = vmatpush1.bf16.msra.mxu0 0
      %486 = vmatprep.subr.bf16.mxu0 0
      %487 = vmatpush1.bf16.msra.mxu0 0
      %488 = vmatprep.subr.bf16.mxu0 0
      %489 = vmatpush1.bf16.msra.mxu0 0
      %490 = vmatprep.subr.bf16.mxu0 0
      %491 = vmatpush1.bf16.msra.mxu0 0
      %492 = vmatprep.subr.bf16.mxu0 0
      %493 = vmatpush1.bf16.msra.mxu0 0
      %494 = vmatprep.subr.bf16.mxu0 0
      %495 = vmatpush1.bf16.msra.mxu0 0
      %496 = vmatprep.subr.bf16.mxu0 0
      %497 = vmatpush1.bf16.msra.mxu0 0
      %498 = vmatprep.subr.bf16.mxu0 0
      %499 = vmatpush1.bf16.msra.mxu0 0
      %500 = vmatprep.subr.bf16.mxu0 0
      %501 = vmatpush1.bf16.msra.mxu0 0
      %502 = vmatprep.subr.bf16.mxu0 0
      %503 = vmatpush1.bf16.msra.mxu0 0
      %504 = vmatprep.subr.bf16.mxu0 0
      %505 = vmatpush1.bf16.msra.mxu0 0
      %506 = vmatprep.mubr.bf16.mxu0 0
      %507 = vmatmul.mubr.bf16.gmra.mrb[0].mxu0 %v427
      %v508 = vpop.f32.mrb[0].mxu0
      %v509 = vadd.f32 %v301, %v508
      %v510 = vpop.f32.mrb[0].mxu0
      %v511 = vadd.f32 %v305, %v510
      %v512 = vpop.f32.mrb[0].mxu0
      %v513 = vadd.f32 %v301, %v512
      %v514 = vpop.f32.mrb[0].mxu0
      %v515 = vadd.f32 %v305, %v514
      %516 = vmatprep.mubr.bf16.mxu0 0
      %517 = vmatmul.mubr.bf16.gmra.mrb[0].mxu0 %v430
      %v518 = vpop.f32.mrb[0].mxu0
      %v519 = vadd.f32 %v301, %v518
      %v520 = vpop.f32.mrb[0].mxu0
      %v521 = vadd.f32 %v305, %v520
      %v522 = vpop.f32.mrb[0].mxu0
      %v523 = vadd.f32 %v301, %v522
      %v524 = vpop.f32.mrb[0].mxu0
      %v525 = vadd.f32 %v305, %v524
      %526 = vmatprep.mubr.bf16.mxu0 0
      %527 = vmatmul.mubr.bf16.gmra.mrb[0].mxu0 %v433
      %v528 = vpop.f32.mrb[0].mxu0
      %v529 = vadd.f32 %v301, %v528
      %v530 = vpop.f32.mrb[0].mxu0
      %v531 = vadd.f32 %v305, %v530
      %v532 = vpop.f32.mrb[0].mxu0
      %v533 = vadd.f32 %v301, %v532
      %v534 = vpop.f32.mrb[0].mxu0
      %v535 = vadd.f32 %v305, %v534
      %536 = vmatprep.mubr.bf16.mxu0 0
      %537 = vmatmul.mubr.bf16.gmra.mrb[0].mxu0 %v436
      %v538 = vpop.f32.mrb[0].mxu0
      %v539 = vadd.f32 %v301, %v538
      %v540 = vpop.f32.mrb[0].mxu0
      %v541 = vadd.f32 %v305, %v540
      %v542 = vpop.f32.mrb[0].mxu0
      %v543 = vadd.f32 %v301, %v542
      %v544 = vpop.f32.mrb[0].mxu0
      %v545 = vadd.f32 %v305, %v544
      %546 = vmatprep.mubr.bf16.mxu0 0
      %547 = vmatmul.mubr.bf16.gmra.mrb[0].mxu0 %v439
      %v548 = vpop.f32.mrb[0].mxu0
      %v549 = vadd.f32 %v301, %v548
      %v550 = vpop.f32.mrb[0].mxu0
      %v551 = vadd.f32 %v305, %v550
      %v552 = vpop.f32.mrb[0].mxu0
      %v553 = vadd.f32 %v301, %v552
      %v554 = vpop.f32.mrb[0].mxu0
      %v555 = vadd.f32 %v305, %v554
      %556 = vmatprep.mubr.bf16.mxu0 0
      %557 = vmatmul.mubr.bf16.gmra.mrb[0].mxu0 %v442
      %v558 = vpop.f32.mrb[0].mxu0
      %v559 = vadd.f32 %v301, %v558
      %v560 = vpop.f32.mrb[0].mxu0
      %v561 = vadd.f32 %v305, %v560
      %v562 = vpop.f32.mrb[0].mxu0
      %v563 = vadd.f32 %v301, %v562
      %v564 = vpop.f32.mrb[0].mxu0
      %v565 = vadd.f32 %v305, %v564
      %566 = vmatprep.mubr.bf16.mxu0 0
      %567 = vmatmul.mubr.bf16.gmra.mrb[0].mxu0 %v445
      %v568 = vpop.f32.mrb[0].mxu0
      %v569 = vadd.f32 %v301, %v568
      %v570 = vpop.f32.mrb[0].mxu0
      %v571 = vadd.f32 %v305, %v570
      %v572 = vpop.f32.mrb[0].mxu0
      %v573 = vadd.f32 %v301, %v572
      %v574 = vpop.f32.mrb[0].mxu0
      %v575 = vadd.f32 %v305, %v574
      %576 = vmatprep.mubr.bf16.mxu0 0
      %577 = vmatmul.mubr.bf16.gmra.mrb[0].mxu0 %v448
      %v578 = vpop.f32.mrb[0].mxu0
      %v579 = vadd.f32 %v301, %v578
      %v580 = vpop.f32.mrb[0].mxu0
      %v581 = vadd.f32 %v305, %v580
      %v582 = vpop.f32.mrb[0].mxu0
      %v583 = vadd.f32 %v301, %v582
      %v584 = vpop.f32.mrb[0].mxu0
      %v585 = vadd.f32 %v305, %v584
      %586 = vmatprep.mubr.bf16.mxu0 0
      %587 = vmatmul.mubr.bf16.gmra.mrb[0].mxu0 %v451
      %v588 = vpop.f32.mrb[0].mxu0
      %v589 = vadd.f32 %v301, %v588
      %v590 = vpop.f32.mrb[0].mxu0
      %v591 = vadd.f32 %v305, %v590
      %v592 = vpop.f32.mrb[0].mxu0
      %v593 = vadd.f32 %v301, %v592
      %v594 = vpop.f32.mrb[0].mxu0
      %v595 = vadd.f32 %v305, %v594
      %596 = vmatprep.mubr.bf16.mxu0 0
      %597 = vmatmul.mubr.bf16.gmra.mrb[0].mxu0 %v454
      %v598 = vpop.f32.mrb[0].mxu0
      %v599 = vadd.f32 %v301, %v598
      %v600 = vpop.f32.mrb[0].mxu0
      %v601 = vadd.f32 %v305, %v600
      %v602 = vpop.f32.mrb[0].mxu0
      %v603 = vadd.f32 %v301, %v602
      %v604 = vpop.f32.mrb[0].mxu0
      %v605 = vadd.f32 %v305, %v604
      %606 = vmatprep.mubr.bf16.mxu0 0
      %607 = vmatmul.mubr.bf16.gmra.mrb[0].mxu0 %v457
      %v608 = vpop.f32.mrb[0].mxu0
      %v609 = vadd.f32 %v301, %v608
      %v610 = vpop.f32.mrb[0].mxu0
      %v611 = vadd.f32 %v305, %v610
      %v612 = vpop.f32.mrb[0].mxu0
      %v613 = vadd.f32 %v301, %v612
      %v614 = vpop.f32.mrb[0].mxu0
      %v615 = vadd.f32 %v305, %v614
      %616 = vmatprep.mubr.bf16.mxu0 0
      %617 = vmatmul.mubr.bf16.gmra.mrb[0].mxu0 %v460
      %v618 = vpop.f32.mrb[0].mxu0
      %v619 = vadd.f32 %v301, %v618
      %v620 = vpop.f32.mrb[0].mxu0
      %v621 = vadd.f32 %v305, %v620
      %v622 = vpop.f32.mrb[0].mxu0
      %v623 = vadd.f32 %v301, %v622
      %v624 = vpop.f32.mrb[0].mxu0
      %v625 = vadd.f32 %v305, %v624
      %626 = vmatprep.mubr.bf16.mxu0 0
      %627 = vmatmul.mubr.bf16.gmra.mrb[0].mxu0 %v463
      %v628 = vpop.f32.mrb[0].mxu0
      %v629 = vadd.f32 %v301, %v628
      %v630 = vpop.f32.mrb[0].mxu0
      %v631 = vadd.f32 %v305, %v630
      %v632 = vpop.f32.mrb[0].mxu0
      %v633 = vadd.f32 %v301, %v632
      %v634 = vpop.f32.mrb[0].mxu0
      %v635 = vadd.f32 %v305, %v634
      %636 = vmatprep.mubr.bf16.mxu0 0
      %637 = vmatmul.mubr.bf16.gmra.mrb[0].mxu0 %v466
      %v638 = vpop.f32.mrb[0].mxu0
      %v639 = vadd.f32 %v301, %v638
      %v640 = vpop.f32.mrb[0].mxu0
      %v641 = vadd.f32 %v305, %v640
      %v642 = vpop.f32.mrb[0].mxu0
      %v643 = vadd.f32 %v301, %v642
      %v644 = vpop.f32.mrb[0].mxu0
      %v645 = vadd.f32 %v305, %v644
      %646 = vmatprep.mubr.bf16.mxu0 0
      %647 = vmatmul.mubr.bf16.gmra.mrb[0].mxu0 %v469
      %v648 = vpop.f32.mrb[0].mxu0
      %v649 = vadd.f32 %v301, %v648
      %v650 = vpop.f32.mrb[0].mxu0
      %v651 = vadd.f32 %v305, %v650
      %v652 = vpop.f32.mrb[0].mxu0
      %v653 = vadd.f32 %v301, %v652
      %v654 = vpop.f32.mrb[0].mxu0
      %v655 = vadd.f32 %v305, %v654
      %656 = vmatprep.mubr.bf16.mxu0 0
      %657 = vmatmul.mubr.bf16.gmra.mrb[0].mxu0 %v472
      %v658 = vpop.f32.mrb[0].mxu0
      %v659 = vadd.f32 %v301, %v658
      %v660 = vpop.f32.mrb[0].mxu0
      %v661 = vadd.f32 %v305, %v660
      %v662 = vpop.f32.mrb[0].mxu0
      %v663 = vadd.f32 %v301, %v662
      %v664 = vpop.f32.mrb[0].mxu0
      %v665 = vadd.f32 %v305, %v664
      %666 = vdwg.mxu0
      %667 = vmatprep.subr.bf16.mxu0 0
      %668 = vmatpush1.bf16.msra.mxu0 %v415
      %669 = vmatprep.subr.bf16.mxu0 0
      %670 = vmatpush1.bf16.msra.mxu0 %v418
      %671 = vmatprep.subr.bf16.mxu0 0
      %672 = vmatpush1.bf16.msra.mxu0 0
      %673 = vmatprep.subr.bf16.mxu0 0
      %674 = vmatpush1.bf16.msra.mxu0 0
      %675 = vmatprep.subr.bf16.mxu0 0
      %676 = vmatpush1.bf16.msra.mxu0 0
      %677 = vmatprep.subr.bf16.mxu0 0
      %678 = vmatpush1.bf16.msra.mxu0 0
      %679 = vmatprep.subr.bf16.mxu0 0
      %680 = vmatpush1.bf16.msra.mxu0 0
      %681 = vmatprep.subr.bf16.mxu0 0
      %682 = vmatpush1.bf16.msra.mxu0 0
      %683 = vmatprep.subr.bf16.mxu0 0
      %684 = vmatpush1.bf16.msra.mxu0 0
      %685 = vmatprep.subr.bf16.mxu0 0
      %686 = vmatpush1.bf16.msra.mxu0 0
      %687 = vmatprep.subr.bf16.mxu0 0
      %688 = vmatpush1.bf16.msra.mxu0 0
      %689 = vmatprep.subr.bf16.mxu0 0
      %690 = vmatpush1.bf16.msra.mxu0 0
      %691 = vmatprep.subr.bf16.mxu0 0
      %692 = vmatpush1.bf16.msra.mxu0 0
      %693 = vmatprep.subr.bf16.mxu0 0
      %694 = vmatpush1.bf16.msra.mxu0 0
      %695 = vmatprep.subr.bf16.mxu0 0
      %696 = vmatpush1.bf16.msra.mxu0 0
      %697 = vmatprep.subr.bf16.mxu0 0
      %698 = vmatpush1.bf16.msra.mxu0 0
      %699 = vmatprep.mubr.bf16.mxu0 0
      %700 = vmatmul.mubr.bf16.gmra.mrb[0].mxu0 %v427
      %v701 = vpop.f32.mrb[0].mxu0
      %v702 = vadd.f32 %v309, %v701
      %v703 = vpop.f32.mrb[0].mxu0
      %v704 = vpop.f32.mrb[0].mxu0
      %v705 = vadd.f32 %v309, %v704
      %v706 = vpop.f32.mrb[0].mxu0
      %707 = vmatprep.mubr.bf16.mxu0 0
      %708 = vmatmul.mubr.bf16.gmra.mrb[0].mxu0 %v430
      %v709 = vpop.f32.mrb[0].mxu0
      %v710 = vadd.f32 %v309, %v709
      %v711 = vpop.f32.mrb[0].mxu0
      %v712 = vpop.f32.mrb[0].mxu0
      %v713 = vadd.f32 %v309, %v712
      %v714 = vpop.f32.mrb[0].mxu0
      %715 = vmatprep.mubr.bf16.mxu0 0
      %716 = vmatmul.mubr.bf16.gmra.mrb[0].mxu0 %v433
      %v717 = vpop.f32.mrb[0].mxu0
      %v718 = vadd.f32 %v309, %v717
      %v719 = vpop.f32.mrb[0].mxu0
      %v720 = vpop.f32.mrb[0].mxu0
      %v721 = vadd.f32 %v309, %v720
      %v722 = vpop.f32.mrb[0].mxu0
      %723 = vmatprep.mubr.bf16.mxu0 0
      %724 = vmatmul.mubr.bf16.gmra.mrb[0].mxu0 %v436
      %v725 = vpop.f32.mrb[0].mxu0
      %v726 = vadd.f32 %v309, %v725
      %v727 = vpop.f32.mrb[0].mxu0
      %v728 = vpop.f32.mrb[0].mxu0
      %v729 = vadd.f32 %v309, %v728
      %v730 = vpop.f32.mrb[0].mxu0
      %731 = vmatprep.mubr.bf16.mxu0 0
      %732 = vmatmul.mubr.bf16.gmra.mrb[0].mxu0 %v439
      %v733 = vpop.f32.mrb[0].mxu0
      %v734 = vadd.f32 %v309, %v733
      %v735 = vpop.f32.mrb[0].mxu0
      %v736 = vpop.f32.mrb[0].mxu0
      %v737 = vadd.f32 %v309, %v736
      %v738 = vpop.f32.mrb[0].mxu0
      %739 = vmatprep.mubr.bf16.mxu0 0
      %740 = vmatmul.mubr.bf16.gmra.mrb[0].mxu0 %v442
      %v741 = vpop.f32.mrb[0].mxu0
      %v742 = vadd.f32 %v309, %v741
      %v743 = vpop.f32.mrb[0].mxu0
      %v744 = vpop.f32.mrb[0].mxu0
      %v745 = vadd.f32 %v309, %v744
      %v746 = vpop.f32.mrb[0].mxu0
      %747 = vmatprep.mubr.bf16.mxu0 0
      %748 = vmatmul.mubr.bf16.gmra.mrb[0].mxu0 %v445
      %v749 = vpop.f32.mrb[0].mxu0
      %v750 = vadd.f32 %v309, %v749
      %v751 = vpop.f32.mrb[0].mxu0
      %v752 = vpop.f32.mrb[0].mxu0
      %v753 = vadd.f32 %v309, %v752
      %v754 = vpop.f32.mrb[0].mxu0
      %755 = vmatprep.mubr.bf16.mxu0 0
      %756 = vmatmul.mubr.bf16.gmra.mrb[0].mxu0 %v448
      %v757 = vpop.f32.mrb[0].mxu0
      %v758 = vadd.f32 %v309, %v757
      %v759 = vpop.f32.mrb[0].mxu0
      %v760 = vpop.f32.mrb[0].mxu0
      %v761 = vadd.f32 %v309, %v760
      %v762 = vpop.f32.mrb[0].mxu0
      %763 = vmatprep.mubr.bf16.mxu0 0
      %764 = vmatmul.mubr.bf16.gmra.mrb[0].mxu0 %v451
      %v765 = vpop.f32.mrb[0].mxu0
      %v766 = vadd.f32 %v309, %v765
      %v767 = vpop.f32.mrb[0].mxu0
      %v768 = vpop.f32.mrb[0].mxu0
      %v769 = vadd.f32 %v309, %v768
      %v770 = vpop.f32.mrb[0].mxu0
      %771 = vmatprep.mubr.bf16.mxu0 0
      %772 = vmatmul.mubr.bf16.gmra.mrb[0].mxu0 %v454
      %v773 = vpop.f32.mrb[0].mxu0
      %v774 = vadd.f32 %v309, %v773
      %v775 = vpop.f32.mrb[0].mxu0
      %v776 = vpop.f32.mrb[0].mxu0
      %v777 = vadd.f32 %v309, %v776
      %v778 = vpop.f32.mrb[0].mxu0
      %779 = vmatprep.mubr.bf16.mxu0 0
      %780 = vmatmul.mubr.bf16.gmra.mrb[0].mxu0 %v457
      %v781 = vpop.f32.mrb[0].mxu0
      %v782 = vadd.f32 %v309, %v781
      %v783 = vpop.f32.mrb[0].mxu0
      %v784 = vpop.f32.mrb[0].mxu0
      %v785 = vadd.f32 %v309, %v784
      %v786 = vpop.f32.mrb[0].mxu0
      %787 = vmatprep.mubr.bf16.mxu0 0
      %788 = vmatmul.mubr.bf16.gmra.mrb[0].mxu0 %v460
      %v789 = vpop.f32.mrb[0].mxu0
      %v790 = vadd.f32 %v309, %v789
      %v791 = vpop.f32.mrb[0].mxu0
      %v792 = vpop.f32.mrb[0].mxu0
      %v793 = vadd.f32 %v309, %v792
      %v794 = vpop.f32.mrb[0].mxu0
      %795 = vmatprep.mubr.bf16.mxu0 0
      %796 = vmatmul.mubr.bf16.gmra.mrb[0].mxu0 %v463
      %v797 = vpop.f32.mrb[0].mxu0
      %v798 = vadd.f32 %v309, %v797
      %v799 = vpop.f32.mrb[0].mxu0
      %v800 = vpop.f32.mrb[0].mxu0
      %v801 = vadd.f32 %v309, %v800
      %v802 = vpop.f32.mrb[0].mxu0
      %803 = vmatprep.mubr.bf16.mxu0 0
      %804 = vmatmul.mubr.bf16.gmra.mrb[0].mxu0 %v466
      %v805 = vpop.f32.mrb[0].mxu0
      %v806 = vadd.f32 %v309, %v805
      %v807 = vpop.f32.mrb[0].mxu0
      %v808 = vpop.f32.mrb[0].mxu0
      %v809 = vadd.f32 %v309, %v808
      %v810 = vpop.f32.mrb[0].mxu0
      %811 = vmatprep.mubr.bf16.mxu0 0
      %812 = vmatmul.mubr.bf16.gmra.mrb[0].mxu0 %v469
      %v813 = vpop.f32.mrb[0].mxu0
      %v814 = vadd.f32 %v309, %v813
      %v815 = vpop.f32.mrb[0].mxu0
      %v816 = vpop.f32.mrb[0].mxu0
      %v817 = vadd.f32 %v309, %v816
      %v818 = vpop.f32.mrb[0].mxu0
      %819 = vmatprep.mubr.bf16.mxu0 0
      %820 = vmatmul.mubr.bf16.gmra.mrb[0].mxu0 %v472
      %v821 = vpop.f32.mrb[0].mxu0
      %v822 = vadd.f32 %v309, %v821
      %v823 = vpop.f32.mrb[0].mxu0
      %v824 = vpop.f32.mrb[0].mxu0
      %v825 = vadd.f32 %v309, %v824
      %v826 = vpop.f32.mrb[0].mxu0
      %827 = vdwg.mxu0
      %v828 = vmax.f32 %v509, 0.0
      %v829 = vmax.f32 %v511, 0.0
      %v830 = vmax.f32 %v702, 0.0
      %v831 = vmax.f32 %v513, 0.0
      %v832 = vmax.f32 %v515, 0.0
      %v833 = vmax.f32 %v705, 0.0
      %v834 = vmax.f32 %v519, 0.0
      %v835 = vmax.f32 %v521, 0.0
      %v836 = vmax.f32 %v710, 0.0
      %v837 = vmax.f32 %v523, 0.0
      %v838 = vmax.f32 %v525, 0.0
      %v839 = vmax.f32 %v713, 0.0
      %v840 = vmax.f32 %v529, 0.0
      %v841 = vmax.f32 %v531, 0.0
      %v842 = vmax.f32 %v718, 0.0
      %v843 = vmax.f32 %v533, 0.0
      %v844 = vmax.f32 %v535, 0.0
      %v845 = vmax.f32 %v721, 0.0
      %v846 = vmax.f32 %v539, 0.0
      %v847 = vmax.f32 %v541, 0.0
      %v848 = vmax.f32 %v726, 0.0
      %v849 = vmax.f32 %v543, 0.0
      %v850 = vmax.f32 %v545, 0.0
      %v851 = vmax.f32 %v729, 0.0
      %v852 = vmax.f32 %v549, 0.0
      %v853 = vmax.f32 %v551, 0.0
      %v854 = vmax.f32 %v734, 0.0
      %v855 = vmax.f32 %v553, 0.0
      %v856 = vmax.f32 %v555, 0.0
      %v857 = vmax.f32 %v737, 0.0
      %v858 = vmax.f32 %v559, 0.0
      %v859 = vmax.f32 %v561, 0.0
      %v860 = vmax.f32 %v742, 0.0
      %v861 = vmax.f32 %v563, 0.0
      %v862 = vmax.f32 %v565, 0.0
      %v863 = vmax.f32 %v745, 0.0
      %v864 = vmax.f32 %v569, 0.0
      %v865 = vmax.f32 %v571, 0.0
      %v866 = vmax.f32 %v750, 0.0
      %v867 = vmax.f32 %v573, 0.0
      %v868 = vmax.f32 %v575, 0.0
      %v869 = vmax.f32 %v753, 0.0
      %v870 = vmax.f32 %v579, 0.0
      %v871 = vmax.f32 %v581, 0.0
      %v872 = vmax.f32 %v758, 0.0
      %v873 = vmax.f32 %v583, 0.0
      %v874 = vmax.f32 %v585, 0.0
      %v875 = vmax.f32 %v761, 0.0
      %v876 = vmax.f32 %v589, 0.0
      %v877 = vmax.f32 %v591, 0.0
      %v878 = vmax.f32 %v766, 0.0
      %v879 = vmax.f32 %v593, 0.0
      %v880 = vmax.f32 %v595, 0.0
      %v881 = vmax.f32 %v769, 0.0
      %v882 = vmax.f32 %v599, 0.0
      %v883 = vmax.f32 %v601, 0.0
      %v884 = vmax.f32 %v774, 0.0
      %v885 = vmax.f32 %v603, 0.0
      %v886 = vmax.f32 %v605, 0.0
      %v887 = vmax.f32 %v777, 0.0
      %v888 = vmax.f32 %v609, 0.0
      %v889 = vmax.f32 %v611, 0.0
      %v890 = vmax.f32 %v782, 0.0
      %v891 = vmax.f32 %v613, 0.0
      %v892 = vmax.f32 %v615, 0.0
      %v893 = vmax.f32 %v785, 0.0
      %v894 = vmax.f32 %v619, 0.0
      %v895 = vmax.f32 %v621, 0.0
      %v896 = vmax.f32 %v790, 0.0
      %v897 = vmax.f32 %v623, 0.0
      %v898 = vmax.f32 %v625, 0.0
      %v899 = vmax.f32 %v793, 0.0
      %v900 = vmax.f32 %v629, 0.0
      %v901 = vmax.f32 %v631, 0.0
      %v902 = vmax.f32 %v798, 0.0
      %v903 = vmax.f32 %v633, 0.0
      %v904 = vmax.f32 %v635, 0.0
      %v905 = vmax.f32 %v801, 0.0
      %v906 = vmax.f32 %v639, 0.0
      %v907 = vmax.f32 %v641, 0.0
      %v908 = vmax.f32 %v806, 0.0
      %v909 = vmax.f32 %v643, 0.0
      %v910 = vmax.f32 %v645, 0.0
      %v911 = vmax.f32 %v809, 0.0
      %v912 = vmax.f32 %v649, 0.0
      %v913 = vmax.f32 %v651, 0.0
      %v914 = vmax.f32 %v814, 0.0
      %v915 = vmax.f32 %v653, 0.0
      %v916 = vmax.f32 %v655, 0.0
      %v917 = vmax.f32 %v817, 0.0
      %v918 = vmax.f32 %v659, 0.0
      %v919 = vmax.f32 %v661, 0.0
      %v920 = vmax.f32 %v822, 0.0
      %v921 = vmax.f32 %v663, 0.0
      %v922 = vmax.f32 %v665, 0.0
      %v923 = vmax.f32 %v825, 0.0
      %v924 = vpack.c.bf16 %v831, %v828
      %v925 = vpack.c.bf16 %v837, %v834
      %v926 = vpack.c.bf16 %v843, %v840
      %v927 = vpack.c.bf16 %v849, %v846
      %v928 = vpack.c.bf16 %v855, %v852
      %v929 = vpack.c.bf16 %v861, %v858
      %v930 = vpack.c.bf16 %v867, %v864
      %v931 = vpack.c.bf16 %v873, %v870
      %v932 = vpack.c.bf16 %v879, %v876
      %v933 = vpack.c.bf16 %v885, %v882
      %v934 = vpack.c.bf16 %v891, %v888
      %v935 = vpack.c.bf16 %v897, %v894
      %v936 = vpack.c.bf16 %v903, %v900
      %v937 = vpack.c.bf16 %v909, %v906
      %v938 = vpack.c.bf16 %v915, %v912
      %v939 = vpack.c.bf16 %v921, %v918
      %v956 = vunpack.c.l.b16 %v924
      %v957 = vunpack.c.h.b16 %v924
      %v958 = vunpack.c.l.b16 %v925
      %v959 = vunpack.c.h.b16 %v925
      %v960 = vunpack.c.l.b16 %v926
      %v961 = vunpack.c.h.b16 %v926
      %v962 = vunpack.c.l.b16 %v927
      %v963 = vunpack.c.h.b16 %v927
      %v964 = vunpack.c.l.b16 %v928
      %v965 = vunpack.c.h.b16 %v928
      %v966 = vunpack.c.l.b16 %v929
      %v967 = vunpack.c.h.b16 %v929
      %v968 = vunpack.c.l.b16 %v930
      %v969 = vunpack.c.h.b16 %v930
      %v970 = vunpack.c.l.b16 %v931
      %v971 = vunpack.c.h.b16 %v931
      %v972 = vunpack.c.l.b16 %v932
      %v973 = vunpack.c.h.b16 %v932
      %v974 = vunpack.c.l.b16 %v933
      %v975 = vunpack.c.h.b16 %v933
      %v976 = vunpack.c.l.b16 %v934
      %v977 = vunpack.c.h.b16 %v934
      %v978 = vunpack.c.l.b16 %v935
      %v979 = vunpack.c.h.b16 %v935
      %v980 = vunpack.c.l.b16 %v936
      %v981 = vunpack.c.h.b16 %v936
      %v982 = vunpack.c.l.b16 %v937
      %v983 = vunpack.c.h.b16 %v937
      %v984 = vunpack.c.l.b16 %v938
      %v985 = vunpack.c.h.b16 %v938
      %v986 = vunpack.c.l.b16 %v939
      %v987 = vunpack.c.h.b16 %v939
      %v988 = vpack.c.b16 %v956, %v956
      %v989 = vpack.c.b16 %v957, %v957
      %v990 = vpack.c.b16 %v958, %v958
      %v991 = vpack.c.b16 %v959, %v959
      %v992 = vpack.c.b16 %v960, %v960
      %v993 = vpack.c.b16 %v961, %v961
      %v994 = vpack.c.b16 %v962, %v962
      %v995 = vpack.c.b16 %v963, %v963
      %v996 = vpack.c.b16 %v964, %v964
      %v997 = vpack.c.b16 %v965, %v965
      %v998 = vpack.c.b16 %v966, %v966
      %v999 = vpack.c.b16 %v967, %v967
      %v1000 = vpack.c.b16 %v968, %v968
      %v1001 = vpack.c.b16 %v969, %v969
      %v1002 = vpack.c.b16 %v970, %v970
      %v1003 = vpack.c.b16 %v971, %v971
      %v1004 = vpack.c.b16 %v972, %v972
      %v1005 = vpack.c.b16 %v973, %v973
      %v1006 = vpack.c.b16 %v974, %v974
      %v1007 = vpack.c.b16 %v975, %v975
      %v1008 = vpack.c.b16 %v976, %v976
      %v1009 = vpack.c.b16 %v977, %v977
      %v1010 = vpack.c.b16 %v978, %v978
      %v1011 = vpack.c.b16 %v979, %v979
      %v1012 = vpack.c.b16 %v980, %v980
      %v1013 = vpack.c.b16 %v981, %v981
      %v1014 = vpack.c.b16 %v982, %v982
      %v1015 = vpack.c.b16 %v983, %v983
      %v1016 = vpack.c.b16 %v984, %v984
      %v1017 = vpack.c.b16 %v985, %v985
      %v1018 = vpack.c.b16 %v986, %v986
      %v1019 = vpack.c.b16 %v987, %v987
      %1052 = vst [vmem:[%s241] sm:$0xf] %v988
      %1053 = vst [vmem:[%s241 + $0x4] sm:$0xf] %v989
      %1054 = vst [vmem:[%s241 + $0x8] sm:$0xf] %v990
      %1055 = vst [vmem:[%s241 + $0xc] sm:$0xf] %v991
      %1056 = vst [vmem:[%s241 + $0x10] sm:$0xf] %v992
      %1057 = vst [vmem:[%s241 + $0x14] sm:$0xf] %v993
      %1058 = vst [vmem:[%s241 + $0x18] sm:$0xf] %v994
      %1059 = vst [vmem:[%s241 + $0x1c] sm:$0xf] %v995
      %1060 = vst [vmem:[%s241 + $0x20] sm:$0xf] %v996
      %1061 = vst [vmem:[%s241 + $0x24] sm:$0xf] %v997
      %1062 = vst [vmem:[%s241 + $0x28] sm:$0xf] %v998
      %1063 = vst [vmem:[%s241 + $0x2c] sm:$0xf] %v999
      %1064 = vst [vmem:[%s241 + $0x30] sm:$0xf] %v1000
      %1065 = vst [vmem:[%s241 + $0x34] sm:$0xf] %v1001
      %1066 = vst [vmem:[%s241 + $0x38] sm:$0xf] %v1002
      %1067 = vst [vmem:[%s241 + $0x3c] sm:$0xf] %v1003
      %1068 = vst [vmem:[%s241 + $0x40] sm:$0xf] %v1004
      %1069 = vst [vmem:[%s241 + $0x44] sm:$0xf] %v1005
      %1070 = vst [vmem:[%s241 + $0x48] sm:$0xf] %v1006
      %1071 = vst [vmem:[%s241 + $0x4c] sm:$0xf] %v1007
      %1072 = vst [vmem:[%s241 + $0x50] sm:$0xf] %v1008
      %1073 = vst [vmem:[%s241 + $0x54] sm:$0xf] %v1009
      %1074 = vst [vmem:[%s241 + $0x58] sm:$0xf] %v1010
      %1075 = vst [vmem:[%s241 + $0x5c] sm:$0xf] %v1011
      %1076 = vst [vmem:[%s241 + $0x60] sm:$0xf] %v1012
      %1077 = vst [vmem:[%s241 + $0x64] sm:$0xf] %v1013
      %1078 = vst [vmem:[%s241 + $0x68] sm:$0xf] %v1014
      %1079 = vst [vmem:[%s241 + $0x6c] sm:$0xf] %v1015
      %1080 = vst [vmem:[%s241 + $0x70] sm:$0xf] %v1016
      %1081 = vst [vmem:[%s241 + $0x74] sm:$0xf] %v1017
      %1082 = vst [vmem:[%s241 + $0x78] sm:$0xf] %v1018
      %1083 = vst [vmem:[%s241 + $0x7c] sm:$0xf] %v1019
      %v1084 = vpack.c.bf16 %v832, %v829
      %v1085 = vpack.c.bf16 %v838, %v835
      %v1086 = vpack.c.bf16 %v844, %v841
      %v1087 = vpack.c.bf16 %v850, %v847
      %v1088 = vpack.c.bf16 %v856, %v853
      %v1089 = vpack.c.bf16 %v862, %v859
      %v1090 = vpack.c.bf16 %v868, %v865
      %v1091 = vpack.c.bf16 %v874, %v871
      %v1092 = vpack.c.bf16 %v880, %v877
      %v1093 = vpack.c.bf16 %v886, %v883
      %v1094 = vpack.c.bf16 %v892, %v889
      %v1095 = vpack.c.bf16 %v898, %v895
      %v1096 = vpack.c.bf16 %v904, %v901
      %v1097 = vpack.c.bf16 %v910, %v907
      %v1098 = vpack.c.bf16 %v916, %v913
      %v1099 = vpack.c.bf16 %v922, %v919
      %v1116 = vunpack.c.l.b16 %v1084
      %v1117 = vunpack.c.h.b16 %v1084
      %v1118 = vunpack.c.l.b16 %v1085
      %v1119 = vunpack.c.h.b16 %v1085
      %v1120 = vunpack.c.l.b16 %v1086
      %v1121 = vunpack.c.h.b16 %v1086
      %v1122 = vunpack.c.l.b16 %v1087
      %v1123 = vunpack.c.h.b16 %v1087
      %v1124 = vunpack.c.l.b16 %v1088
      %v1125 = vunpack.c.h.b16 %v1088
      %v1126 = vunpack.c.l.b16 %v1089
      %v1127 = vunpack.c.h.b16 %v1089
      %v1128 = vunpack.c.l.b16 %v1090
      %v1129 = vunpack.c.h.b16 %v1090
      %v1130 = vunpack.c.l.b16 %v1091
      %v1131 = vunpack.c.h.b16 %v1091
      %v1132 = vunpack.c.l.b16 %v1092
      %v1133 = vunpack.c.h.b16 %v1092
      %v1134 = vunpack.c.l.b16 %v1093
      %v1135 = vunpack.c.h.b16 %v1093
      %v1136 = vunpack.c.l.b16 %v1094
      %v1137 = vunpack.c.h.b16 %v1094
      %v1138 = vunpack.c.l.b16 %v1095
      %v1139 = vunpack.c.h.b16 %v1095
      %v1140 = vunpack.c.l.b16 %v1096
      %v1141 = vunpack.c.h.b16 %v1096
      %v1142 = vunpack.c.l.b16 %v1097
      %v1143 = vunpack.c.h.b16 %v1097
      %v1144 = vunpack.c.l.b16 %v1098
      %v1145 = vunpack.c.h.b16 %v1098
      %v1146 = vunpack.c.l.b16 %v1099
      %v1147 = vunpack.c.h.b16 %v1099
      %v1148 = vpack.c.b16 %v1116, %v1116
      %v1149 = vpack.c.b16 %v1117, %v1117
      %v1150 = vpack.c.b16 %v1118, %v1118
      %v1151 = vpack.c.b16 %v1119, %v1119
      %v1152 = vpack.c.b16 %v1120, %v1120
      %v1153 = vpack.c.b16 %v1121, %v1121
      %v1154 = vpack.c.b16 %v1122, %v1122
      %v1155 = vpack.c.b16 %v1123, %v1123
      %v1156 = vpack.c.b16 %v1124, %v1124
      %v1157 = vpack.c.b16 %v1125, %v1125
      %v1158 = vpack.c.b16 %v1126, %v1126
      %v1159 = vpack.c.b16 %v1127, %v1127
      %v1160 = vpack.c.b16 %v1128, %v1128
      %v1161 = vpack.c.b16 %v1129, %v1129
      %v1162 = vpack.c.b16 %v1130, %v1130
      %v1163 = vpack.c.b16 %v1131, %v1131
      %v1164 = vpack.c.b16 %v1132, %v1132
      %v1165 = vpack.c.b16 %v1133, %v1133
      %v1166 = vpack.c.b16 %v1134, %v1134
      %v1167 = vpack.c.b16 %v1135, %v1135
      %v1168 = vpack.c.b16 %v1136, %v1136
      %v1169 = vpack.c.b16 %v1137, %v1137
      %v1170 = vpack.c.b16 %v1138, %v1138
      %v1171 = vpack.c.b16 %v1139, %v1139
      %v1172 = vpack.c.b16 %v1140, %v1140
      %v1173 = vpack.c.b16 %v1141, %v1141
      %v1174 = vpack.c.b16 %v1142, %v1142
      %v1175 = vpack.c.b16 %v1143, %v1143
      %v1176 = vpack.c.b16 %v1144, %v1144
      %v1177 = vpack.c.b16 %v1145, %v1145
      %v1178 = vpack.c.b16 %v1146, %v1146
      %v1179 = vpack.c.b16 %v1147, %v1147
      %1212 = vst [vmem:[%s247] sm:$0xf] %v1148
      %1213 = vst [vmem:[%s247 + $0x4] sm:$0xf] %v1149
      %1214 = vst [vmem:[%s247 + $0x8] sm:$0xf] %v1150
      %1215 = vst [vmem:[%s247 + $0xc] sm:$0xf] %v1151
      %1216 = vst [vmem:[%s247 + $0x10] sm:$0xf] %v1152
      %1217 = vst [vmem:[%s247 + $0x14] sm:$0xf] %v1153
      %1218 = vst [vmem:[%s247 + $0x18] sm:$0xf] %v1154
      %1219 = vst [vmem:[%s247 + $0x1c] sm:$0xf] %v1155
      %1220 = vst [vmem:[%s247 + $0x20] sm:$0xf] %v1156
      %1221 = vst [vmem:[%s247 + $0x24] sm:$0xf] %v1157
      %1222 = vst [vmem:[%s247 + $0x28] sm:$0xf] %v1158
      %1223 = vst [vmem:[%s247 + $0x2c] sm:$0xf] %v1159
      %1224 = vst [vmem:[%s247 + $0x30] sm:$0xf] %v1160
      %1225 = vst [vmem:[%s247 + $0x34] sm:$0xf] %v1161
      %1226 = vst [vmem:[%s247 + $0x38] sm:$0xf] %v1162
      %1227 = vst [vmem:[%s247 + $0x3c] sm:$0xf] %v1163
      %1228 = vst [vmem:[%s247 + $0x40] sm:$0xf] %v1164
      %1229 = vst [vmem:[%s247 + $0x44] sm:$0xf] %v1165
      %1230 = vst [vmem:[%s247 + $0x48] sm:$0xf] %v1166
      %1231 = vst [vmem:[%s247 + $0x4c] sm:$0xf] %v1167
      %1232 = vst [vmem:[%s247 + $0x50] sm:$0xf] %v1168
      %1233 = vst [vmem:[%s247 + $0x54] sm:$0xf] %v1169
      %1234 = vst [vmem:[%s247 + $0x58] sm:$0xf] %v1170
      %1235 = vst [vmem:[%s247 + $0x5c] sm:$0xf] %v1171
      %1236 = vst [vmem:[%s247 + $0x60] sm:$0xf] %v1172
      %1237 = vst [vmem:[%s247 + $0x64] sm:$0xf] %v1173
      %1238 = vst [vmem:[%s247 + $0x68] sm:$0xf] %v1174
      %1239 = vst [vmem:[%s247 + $0x6c] sm:$0xf] %v1175
      %1240 = vst [vmem:[%s247 + $0x70] sm:$0xf] %v1176
      %1241 = vst [vmem:[%s247 + $0x74] sm:$0xf] %v1177
      %1242 = vst [vmem:[%s247 + $0x78] sm:$0xf] %v1178
      %1243 = vst [vmem:[%s247 + $0x7c] sm:$0xf] %v1179
      %v1244 = vpack.c.bf16 %v833, %v830
      %v1245 = vpack.c.bf16 %v839, %v836
      %v1246 = vpack.c.bf16 %v845, %v842
      %v1247 = vpack.c.bf16 %v851, %v848
      %v1248 = vpack.c.bf16 %v857, %v854
      %v1249 = vpack.c.bf16 %v863, %v860
      %v1250 = vpack.c.bf16 %v869, %v866
      %v1251 = vpack.c.bf16 %v875, %v872
      %v1252 = vpack.c.bf16 %v881, %v878
      %v1253 = vpack.c.bf16 %v887, %v884
      %v1254 = vpack.c.bf16 %v893, %v890
      %v1255 = vpack.c.bf16 %v899, %v896
      %v1256 = vpack.c.bf16 %v905, %v902
      %v1257 = vpack.c.bf16 %v911, %v908
      %v1258 = vpack.c.bf16 %v917, %v914
      %v1259 = vpack.c.bf16 %v923, %v920
      %v1276 = vunpack.c.l.b16 %v1244
      %v1277 = vunpack.c.h.b16 %v1244
      %v1278 = vunpack.c.l.b16 %v1245
      %v1279 = vunpack.c.h.b16 %v1245
      %v1280 = vunpack.c.l.b16 %v1246
      %v1281 = vunpack.c.h.b16 %v1246
      %v1282 = vunpack.c.l.b16 %v1247
      %v1283 = vunpack.c.h.b16 %v1247
      %v1284 = vunpack.c.l.b16 %v1248
      %v1285 = vunpack.c.h.b16 %v1248
      %v1286 = vunpack.c.l.b16 %v1249
      %v1287 = vunpack.c.h.b16 %v1249
      %v1288 = vunpack.c.l.b16 %v1250
      %v1289 = vunpack.c.h.b16 %v1250
      %v1290 = vunpack.c.l.b16 %v1251
      %v1291 = vunpack.c.h.b16 %v1251
      %v1292 = vunpack.c.l.b16 %v1252
      %v1293 = vunpack.c.h.b16 %v1252
      %v1294 = vunpack.c.l.b16 %v1253
      %v1295 = vunpack.c.h.b16 %v1253
      %v1296 = vunpack.c.l.b16 %v1254
      %v1297 = vunpack.c.h.b16 %v1254
      %v1298 = vunpack.c.l.b16 %v1255
      %v1299 = vunpack.c.h.b16 %v1255
      %v1300 = vunpack.c.l.b16 %v1256
      %v1301 = vunpack.c.h.b16 %v1256
      %v1302 = vunpack.c.l.b16 %v1257
      %v1303 = vunpack.c.h.b16 %v1257
      %v1304 = vunpack.c.l.b16 %v1258
      %v1305 = vunpack.c.h.b16 %v1258
      %v1306 = vunpack.c.l.b16 %v1259
      %v1307 = vunpack.c.h.b16 %v1259
      %v1308 = vpack.c.b16 %v1276, %v1276
      %v1309 = vpack.c.b16 %v1277, %v1277
      %v1310 = vpack.c.b16 %v1278, %v1278
      %v1311 = vpack.c.b16 %v1279, %v1279
      %v1312 = vpack.c.b16 %v1280, %v1280
      %v1313 = vpack.c.b16 %v1281, %v1281
      %v1314 = vpack.c.b16 %v1282, %v1282
      %v1315 = vpack.c.b16 %v1283, %v1283
      %v1316 = vpack.c.b16 %v1284, %v1284
      %v1317 = vpack.c.b16 %v1285, %v1285
      %v1318 = vpack.c.b16 %v1286, %v1286
      %v1319 = vpack.c.b16 %v1287, %v1287
      %v1320 = vpack.c.b16 %v1288, %v1288
      %v1321 = vpack.c.b16 %v1289, %v1289
      %v1322 = vpack.c.b16 %v1290, %v1290
      %v1323 = vpack.c.b16 %v1291, %v1291
      %v1324 = vpack.c.b16 %v1292, %v1292
      %v1325 = vpack.c.b16 %v1293, %v1293
      %v1326 = vpack.c.b16 %v1294, %v1294
      %v1327 = vpack.c.b16 %v1295, %v1295
      %v1328 = vpack.c.b16 %v1296, %v1296
      %v1329 = vpack.c.b16 %v1297, %v1297
      %v1330 = vpack.c.b16 %v1298, %v1298
      %v1331 = vpack.c.b16 %v1299, %v1299
      %v1332 = vpack.c.b16 %v1300, %v1300
      %v1333 = vpack.c.b16 %v1301, %v1301
      %v1334 = vpack.c.b16 %v1302, %v1302
      %v1335 = vpack.c.b16 %v1303, %v1303
      %v1336 = vpack.c.b16 %v1304, %v1304
      %v1337 = vpack.c.b16 %v1305, %v1305
      %v1338 = vpack.c.b16 %v1306, %v1306
      %v1339 = vpack.c.b16 %v1307, %v1307
      %1372 = vst [vmem:[%s253] sm:$0xf] %v1308
      %1373 = vst [vmem:[%s253 + $0x4] sm:$0xf] %v1309
      %1374 = vst [vmem:[%s253 + $0x8] sm:$0xf] %v1310
      %1375 = vst [vmem:[%s253 + $0xc] sm:$0xf] %v1311
      %1376 = vst [vmem:[%s253 + $0x10] sm:$0xf] %v1312
      %1377 = vst [vmem:[%s253 + $0x14] sm:$0xf] %v1313
      %1378 = vst [vmem:[%s253 + $0x18] sm:$0xf] %v1314
      %1379 = vst [vmem:[%s253 + $0x1c] sm:$0xf] %v1315
      %1380 = vst [vmem:[%s253 + $0x20] sm:$0xf] %v1316
      %1381 = vst [vmem:[%s253 + $0x24] sm:$0xf] %v1317
      %1382 = vst [vmem:[%s253 + $0x28] sm:$0xf] %v1318
      %1383 = vst [vmem:[%s253 + $0x2c] sm:$0xf] %v1319
      %1384 = vst [vmem:[%s253 + $0x30] sm:$0xf] %v1320
      %1385 = vst [vmem:[%s253 + $0x34] sm:$0xf] %v1321
      %1386 = vst [vmem:[%s253 + $0x38] sm:$0xf] %v1322
      %1387 = vst [vmem:[%s253 + $0x3c] sm:$0xf] %v1323
      %1388 = vst [vmem:[%s253 + $0x40] sm:$0xf] %v1324
      %1389 = vst [vmem:[%s253 + $0x44] sm:$0xf] %v1325
      %1390 = vst [vmem:[%s253 + $0x48] sm:$0xf] %v1326
      %1391 = vst [vmem:[%s253 + $0x4c] sm:$0xf] %v1327
      %1392 = vst [vmem:[%s253 + $0x50] sm:$0xf] %v1328
      %1393 = vst [vmem:[%s253 + $0x54] sm:$0xf] %v1329
      %1394 = vst [vmem:[%s253 + $0x58] sm:$0xf] %v1330
      %1395 = vst [vmem:[%s253 + $0x5c] sm:$0xf] %v1331
      %1396 = vst [vmem:[%s253 + $0x60] sm:$0xf] %v1332
      %1397 = vst [vmem:[%s253 + $0x64] sm:$0xf] %v1333
      %1398 = vst [vmem:[%s253 + $0x68] sm:$0xf] %v1334
      %1399 = vst [vmem:[%s253 + $0x6c] sm:$0xf] %v1335
      %1400 = vst [vmem:[%s253 + $0x70] sm:$0xf] %v1336
      %1401 = vst [vmem:[%s253 + $0x74] sm:$0xf] %v1337
      %1402 = vst [vmem:[%s253 + $0x78] sm:$0xf] %v1338
      %1403 = vst [vmem:[%s253 + $0x7c] sm:$0xf] %v1339
      %s1404 = smul.u32 32, %s17
      %p1405 = scmp.lt.s32.totalorder %s1404, 63
      %s1406 = scalar_select %p1405, %s1404, 63
      %s1407 = smul.addr %s1406, 4
      %s1408 = scalar_lea.vmem %s3, %s1407
      %s1409 = smul.u32 32, %s17
      %p1410 = scmp.lt.s32.totalorder %s1409, 63
      %s1411 = scalar_select %p1410, %s1409, 63
      %s1412 = smul.addr %s1411, 4
      %s1413 = scalar_lea.vmem %s4, %s1412
      %s1414 = smul.u32 32, %s17
      %p1415 = scmp.lt.s32.totalorder %s1414, 63
      %s1416 = scalar_select %p1415, %s1414, 63
      %s1417 = smul.addr %s1416, 4
      %s1418 = scalar_lea.vmem %s5, %s1417
      // Predicated region
      $region33: #{_lambda_.5} parent=31 // pred_check
        %p1419 = pneg %p103
      $region34: #{_lambda_.5} parent=31 // pred_check_branch
        %1421 = sbr.rel (%p1419) target = $region36
      $region35: #{_lambda_.5} parent=31 // pred_region
        %s1422 = smul.u32 32, %s17
      $region36: #{_lambda_.5} parent=31 // pred_fallthru
        _
      // Predicated region
      $region37: #{_lambda_.5} parent=31 // pred_check
        %p1423 = pneg %p129
      $region38: #{_lambda_.5} parent=31 // pred_check_branch
        %1425 = sbr.rel (%p1423) target = $region40
      $region39: #{_lambda_.5} parent=31 // pred_region
        %s1426 = smul.u32 32, %s17
      $region40: #{_lambda_.5} parent=31 // pred_fallthru
        _
      // Predicated region
      $region41: #{_lambda_.5} parent=31 // pred_check
        %p1427 = pneg %p155
      $region42: #{_lambda_.5} parent=31 // pred_check_branch
        %1429 = sbr.rel (%p1427) target = $region44
      $region43: #{_lambda_.5} parent=31 // pred_region
        %s1430 = smul.u32 32, %s17
      $region44: #{_lambda_.5} parent=31 // pred_fallthru
        _
    $region32: #{_lambda_.5} parent=5 // pred_fallthru
      _
    %p1431 = scmp.le.s32.totalorder 2, %s12
    // Predicated region
    $region45: #{_lambda_.5} parent=5 // pred_check
      %p1432 = pneg %p1431
    $region46: #{_lambda_.5} parent=5 // pred_check_branch
      %1434 = sbr.rel (%p1432) target = $region48
    $region47: #{_lambda_.5} parent=5 // pred_region
      %s1435 = ssub.s32 %s12, 2
      // Predicated region
      $region49: #{_lambda_.5} parent=47 // pred_check
        %p1436 = pneg %p109
      $region50: #{_lambda_.5} parent=47 // pred_check_branch
        %1438 = sbr.rel (%p1436) target = $region52
      $region51: #{_lambda_.5} parent=47 // pred_region
        %s1439 = smul.u32 32, %s18
        %p1440 = scmp.lt.s32.totalorder %s1439, 63
        %s1441 = scalar_select %p1440, %s1439, 63
        %s1442 = smul.addr %s1441, 4
        %s1443 = scalar_lea.vmem %s3, %s1442
      $region52: #{_lambda_.5} parent=47 // pred_fallthru
        _
      // Predicated region
      $region53: #{_lambda_.5} parent=47 // pred_check
        %p1444 = pneg %p135
      $region54: #{_lambda_.5} parent=47 // pred_check_branch
        %1446 = sbr.rel (%p1444) target = $region56
      $region55: #{_lambda_.5} parent=47 // pred_region
        %s1447 = smul.u32 32, %s18
        %p1448 = scmp.lt.s32.totalorder %s1447, 63
        %s1449 = scalar_select %p1448, %s1447, 63
        %s1450 = smul.addr %s1449, 4
        %s1451 = scalar_lea.vmem %s4, %s1450
      $region56: #{_lambda_.5} parent=47 // pred_fallthru
        _
      // Predicated region
      $region57: #{_lambda_.5} parent=47 // pred_check
        %p1452 = pneg %p161
      $region58: #{_lambda_.5} parent=47 // pred_check_branch
        %1454 = sbr.rel (%p1452) target = $region60
      $region59: #{_lambda_.5} parent=47 // pred_region
        %s1455 = smul.u32 32, %s18
        %p1456 = scmp.lt.s32.totalorder %s1455, 63
        %s1457 = scalar_select %p1456, %s1455, 63
        %s1458 = smul.addr %s1457, 4
        %s1459 = scalar_lea.vmem %s5, %s1458
      $region60: #{_lambda_.5} parent=47 // pred_fallthru
        _
    $region48: #{_lambda_.5} parent=5 // pred_fallthru
      _
  $region6: #{_lambda_.5} parent=0 // loop_footer
    %s16 = sadd.s32 1, %s12
  $region7: #{_lambda_.5} parent=0 // loop_footer_branch
    %11 = sbr.rel target = $region3
  $region8: #{_lambda_.5} parent=0 // loop_exit
    _

// kernel: _lambda_.8
$region0: #{_lambda_.8}
  #allocation0 [shape = 'u32[]', space=smem, size = 0x4, offset = 0x4, fixed_abs, tag = 'smem constant byte address 0x4 - core index']
  #allocation1 [shape = 'u32[144,128]{1,0:T(1,128)}', space=vmem, size = 0x12000, scoped, tag = 'internal scratch']
  %s0 = inlined_call_operand.vmem [shape: bf16[2,18,18,128], index: 0, kind: input, shape index: {}]
  %s1 = inlined_call_operand.vmem [shape: bf16[3,3,128,128], index: 1, kind: input, shape index: {}]
  %s2 = inlined_call_operand.vmem [shape: f32[1,128], index: 2, kind: input, shape index: {}]
  %s3 = inlined_call_operand.vmem [shape: bf16[2,16,16,128], index: 3, kind: output, shape index: {}]
  %s4 = sld [smem:[#allocation0]]
  $region45: #{_lambda_.8} parent=0
    _
  %s6 = ssub.s32 1, %s4
  %s7 = scalar_select 0, %s6, %s4
  loop: start=0, step=1, limit=4
  $region2: #{_lambda_.8} parent=0 // loop_pre_header
    _
  $region3: #{_lambda_.8} parent=0 // loop_header
    %s9 = sphi 0, %s13
    %p10 = scmp.ge.s32.totalorder %s9, 4
    %s19 = sphi 0, %s21
    %s22 = sphi 0, %s19
    %s23 = sphi 0, %s22
    %s39 = sphi 0, %s23
    %s43 = sphi 0, %s43
    %s45 = sphi 0, %s43
    %s46 = sphi 0, %s45
    %s60 = sphi 0, %s46
    %s64 = sphi 0, %s64
    %s66 = sphi 0, %s64
    %s67 = sphi 0, %s66
    %s81 = sphi 0, %s67
    %s87 = sphi 0, %s89
    %s90 = sphi 0, %s87
    %s91 = sphi 0, %s90
    %s107 = sphi 0, %s91
  $region4: #{_lambda_.8} parent=0 // loop_header_branch
    %12 = sbr.rel (%p10) target = $region8
  $region5: #{_lambda_.8} parent=0 // loop_body
    %s14 = ssub.s32 %s9, 1
    %s15 = ssub.s32 %s9, 2
    %s16 = sadd.s32 %s9, 1
    %s17 = ssub.s32 %s9, %s16
    %p18 = scmp.eq.s32.totalorder %s17, 0
    %s20 = sadd.s32 %s19, 1
    %s21 = scalar_select %p18, %s19, %s20
    %p24 = pneg %p18
    %p25 = scmp.eq.s32.totalorder %s9, 1
    %p26 = por %p24, %p25
    %p27 = scmp.ne.s32.totalorder %s19, %s22
    %p28 = scmp.eq.s32.totalorder %s9, 0
    %p29 = por %p27, %p28
    %p30 = scmp.ne.s32.totalorder %s19, %s22
    %p31 = scmp.eq.s32.totalorder %s14, 1
    %p32 = por %p30, %p31
    %p33 = scmp.ne.s32.totalorder %s22, %s23
    %p34 = scmp.eq.s32.totalorder %s14, 0
    %p35 = por %p33, %p34
    %p36 = scmp.ne.s32.totalorder %s22, %s23
    %p37 = scmp.eq.s32.totalorder %s15, 1
    %p38 = por %p36, %p37
    %p40 = scmp.ne.s32.totalorder %s23, %s39
    %p41 = scmp.eq.s32.totalorder %s15, 0
    %p42 = por %p40, %p41
    %s44 = sadd.s32 %s43, 1
    %p47 = scmp.eq.s32.totalorder %s9, 1
    %p48 = scmp.ne.s32.totalorder %s43, %s45
    %p49 = scmp.eq.s32.totalorder %s9, 0
    %p50 = por %p48, %p49
    %p51 = scmp.ne.s32.totalorder %s43, %s45
    %p52 = scmp.eq.s32.totalorder %s14, 1
    %p53 = por %p51, %p52
    %p54 = scmp.ne.s32.totalorder %s45, %s46
    %p55 = scmp.eq.s32.totalorder %s14, 0
    %p56 = por %p54, %p55
    %p57 = scmp.ne.s32.totalorder %s45, %s46
    %p58 = scmp.eq.s32.totalorder %s15, 1
    %p59 = por %p57, %p58
    %p61 = scmp.ne.s32.totalorder %s46, %s60
    %p62 = scmp.eq.s32.totalorder %s15, 0
    %p63 = por %p61, %p62
    %s65 = sadd.s32 %s64, 1
    %p68 = scmp.eq.s32.totalorder %s9, 1
    %p69 = scmp.ne.s32.totalorder %s64, %s66
    %p70 = scmp.eq.s32.totalorder %s9, 0
    %p71 = por %p69, %p70
    %p72 = scmp.ne.s32.totalorder %s64, %s66
    %p73 = scmp.eq.s32.totalorder %s14, 1
    %p74 = por %p72, %p73
    %p75 = scmp.ne.s32.totalorder %s66, %s67
    %p76 = scmp.eq.s32.totalorder %s14, 0
    %p77 = por %p75, %p76
    %p78 = scmp.ne.s32.totalorder %s66, %s67
    %p79 = scmp.eq.s32.totalorder %s15, 1
    %p80 = por %p78, %p79
    %p82 = scmp.ne.s32.totalorder %s67, %s81
    %p83 = scmp.eq.s32.totalorder %s15, 0
    %p84 = por %p82, %p83
    %s85 = ssub.s32 %s9, %s16
    %p86 = scmp.eq.s32.totalorder %s85, 0
    %s88 = sadd.s32 %s87, 1
    %s89 = scalar_select %p86, %s87, %s88
    %p92 = pneg %p86
    %p93 = scmp.eq.s32.totalorder %s9, 1
    %p94 = por %p92, %p93
    %p95 = scmp.ne.s32.totalorder %s87, %s90
    %p96 = scmp.eq.s32.totalorder %s9, 0
    %p97 = por %p95, %p96
    %p98 = scmp.ne.s32.totalorder %s87, %s90
    %p99 = scmp.eq.s32.totalorder %s14, 1
    %p100 = por %p98, %p99
    %p101 = scmp.ne.s32.totalorder %s90, %s91
    %p102 = scmp.eq.s32.totalorder %s14, 0
    %p103 = por %p101, %p102
    %p104 = scmp.ne.s32.totalorder %s90, %s91
    %p105 = scmp.eq.s32.totalorder %s15, 1
    %p106 = por %p104, %p105
    %p108 = scmp.ne.s32.totalorder %s91, %s107
    %p109 = scmp.eq.s32.totalorder %s15, 0
    %p110 = por %p108, %p109
    %p111 = scmp.le.s32.totalorder 1, %s9
    %p112 = scmp.lt.s32.totalorder %s9, 3
    %p113 = pnand %p111, %p112
    %p114 = pneg %p113
    // Predicated region
    $region9: #{_lambda_.8} parent=5 // pred_check
      _
    $region10: #{_lambda_.8} parent=5 // pred_check_branch
      %116 = sbr.rel (%p113) target = $region12
    $region11: #{_lambda_.8} parent=5 // pred_region
      %s117 = ssub.s32 %s9, 1
      // Predicated region
      $region13: #{_lambda_.8} parent=11 // pred_check
        %p118 = pneg %p56
      $region14: #{_lambda_.8} parent=11 // pred_check_branch
        %120 = sbr.rel (%p118) target = $region16
      $region15: #{_lambda_.8} parent=11 // pred_region
        _
      $region16: #{_lambda_.8} parent=11 // pred_fallthru
        _
      // Predicated region
      $region17: #{_lambda_.8} parent=11 // pred_check
        %p121 = pneg %p77
      $region18: #{_lambda_.8} parent=11 // pred_check_branch
        %123 = sbr.rel (%p121) target = $region20
      $region19: #{_lambda_.8} parent=11 // pred_region
        _
      $region20: #{_lambda_.8} parent=11 // pred_fallthru
        _
    $region12: #{_lambda_.8} parent=5 // pred_fallthru
      _
    %p124 = scmp.lt.s32.totalorder %s9, 2
    // Predicated region
    $region21: #{_lambda_.8} parent=5 // pred_check
      %p125 = pneg %p124
    $region22: #{_lambda_.8} parent=5 // pred_check_branch
      %127 = sbr.rel (%p125) target = $region24
    $region23: #{_lambda_.8} parent=5 // pred_region
      // Predicated region
      $region25: #{_lambda_.8} parent=23 // pred_check
        %p128 = pneg %p29
      $region26: #{_lambda_.8} parent=23 // pred_check_branch
        %130 = sbr.rel (%p128) target = $region28
      $region27: #{_lambda_.8} parent=23 // pred_region
        %p131 = scmp.lt.s32.totalorder %s9, 1
        %s132 = scalar_select %p131, %s9, 1
        %s133 = smul.addr %s132, 54
        %s134 = smul.addr %s133, 4
        %s135 = scalar_lea.vmem %s0, %s134
      $region28: #{_lambda_.8} parent=23 // pred_fallthru
        _
    $region24: #{_lambda_.8} parent=5 // pred_fallthru
      _
    %p136 = scmp.le.s32.totalorder 1, %s9
    %p137 = scmp.lt.s32.totalorder %s9, 3
    %p138 = pnand %p136, %p137
    %p139 = pneg %p138
    // Predicated region
    $region29: #{_lambda_.8} parent=5 // pred_check
      _
    $region30: #{_lambda_.8} parent=5 // pred_check_branch
      %141 = sbr.rel (%p138) target = $region32
    $region31: #{_lambda_.8} parent=5 // pred_region
      %s142 = ssub.s32 %s9, 1
      %p143 = scmp.lt.s32.totalorder %s14, 1
      %s144 = scalar_select %p143, %s14, 1
      %s145 = smul.addr %s144, 54
      %s146 = smul.addr %s145, 4
      %s147 = scalar_lea.vmem %s0, %s146
      %p148 = pneg %p35
      %p149 = pneg %p32
      %p150 = pneg %p56
      %p151 = pneg %p53
      %p152 = pneg %p77
      %p153 = pneg %p74
      %p154 = pneg %p103
      %p155 = pneg %p100
      %p156 = scmp.lt.s32.totalorder %s14, 1
      %s157 = scalar_select %p156, %s14, 1
      %s158 = smul.addr %s157, 32
      %s159 = smul.addr %s158, 4
      %s160 = scalar_lea.vmem %s3, %s159
      %p161 = scmp.lt.s32.totalorder %s14, 1
      %s162 = scalar_select %p161, %s14, 1
      %s163 = smul.addr %s162, 54
      %s164 = smul.addr %s163, 4
      %s165 = scalar_lea.vmem %s0, %s164
      %p166 = scmp.lt.s32.totalorder %s14, 1
      %s167 = scalar_select %p166, %s14, 1
      %s168 = smul.addr %s167, 32
      %s169 = smul.addr %s168, 4
      %s170 = scalar_lea.vmem %s3, %s169
      %v172 = vld [vmem:[%s165] sm:$0xf]
      %v173 = vld [vmem:[%s165 + $0x4] sm:$0xf]
      %v174 = vld [vmem:[%s165 + $0x8] sm:$0x1]
      %v175 = vld [vmem:[%s165 + $0xc] sm:$0xf]
      %v176 = vld [vmem:[%s165 + $0x10] sm:$0xf]
      %v177 = vld [vmem:[%s165 + $0x14] sm:$0x1]
      %v178 = vld [vmem:[%s165 + $0x18] sm:$0xf]
      %v179 = vld [vmem:[%s165 + $0x1c] sm:$0xf]
      %v180 = vld [vmem:[%s165 + $0x20] sm:$0x1]
      %v181 = vld [vmem:[%s165 + $0x24] sm:$0xf]
      %v182 = vld [vmem:[%s165 + $0x28] sm:$0xf]
      %v183 = vld [vmem:[%s165 + $0x2c] sm:$0x1]
      %v184 = vld [vmem:[%s165 + $0x30] sm:$0xf]
      %v185 = vld [vmem:[%s165 + $0x34] sm:$0xf]
      %v186 = vld [vmem:[%s165 + $0x38] sm:$0x1]
      %v187 = vld [vmem:[%s165 + $0x3c] sm:$0xf]
      %v188 = vld [vmem:[%s165 + $0x40] sm:$0xf]
      %v189 = vld [vmem:[%s165 + $0x44] sm:$0x1]
      %v190 = vld [vmem:[%s165 + $0x48] sm:$0xf]
      %v191 = vld [vmem:[%s165 + $0x4c] sm:$0xf]
      %v192 = vld [vmem:[%s165 + $0x50] sm:$0x1]
      %v193 = vld [vmem:[%s165 + $0x54] sm:$0xf]
      %v194 = vld [vmem:[%s165 + $0x58] sm:$0xf]
      %v195 = vld [vmem:[%s165 + $0x5c] sm:$0x1]
      %v196 = vld [vmem:[%s165 + $0x60] sm:$0xf]
      %v197 = vld [vmem:[%s165 + $0x64] sm:$0xf]
      %v198 = vld [vmem:[%s165 + $0x68] sm:$0x1]
      %v199 = vld [vmem:[%s165 + $0x6c] sm:$0xf]
      %v200 = vld [vmem:[%s165 + $0x70] sm:$0xf]
      %v201 = vld [vmem:[%s165 + $0x74] sm:$0x1]
      %v202 = vld [vmem:[%s165 + $0x78] sm:$0xf]
      %v203 = vld [vmem:[%s165 + $0x7c] sm:$0xf]
      %v204 = vld [vmem:[%s165 + $0x80] sm:$0x1]
      %v205 = vld [vmem:[%s165 + $0x84] sm:$0xf]
      %v206 = vld [vmem:[%s165 + $0x88] sm:$0xf]
      %v207 = vld [vmem:[%s165 + $0x8c] sm:$0x1]
      %v208 = vld [vmem:[%s165 + $0x90] sm:$0xf]
      %v209 = vld [vmem:[%s165 + $0x94] sm:$0xf]
      %v210 = vld [vmem:[%s165 + $0x98] sm:$0x1]
      %v211 = vld [vmem:[%s165 + $0x9c] sm:$0xf]
      %v212 = vld [vmem:[%s165 + $0xa0] sm:$0xf]
      %v213 = vld [vmem:[%s165 + $0xa4] sm:$0x1]
      %v214 = vld [vmem:[%s165 + $0xa8] sm:$0xf]
      %v215 = vld [vmem:[%s165 + $0xac] sm:$0xf]
      %v216 = vld [vmem:[%s165 + $0xb0] sm:$0x1]
      %v217 = vld [vmem:[%s165 + $0xb4] sm:$0xf]
      %v218 = vld [vmem:[%s165 + $0xb8] sm:$0xf]
      %v219 = vld [vmem:[%s165 + $0xbc] sm:$0x1]
      %v220 = vld [vmem:[%s165 + $0xc0] sm:$0xf]
      %v221 = vld [vmem:[%s165 + $0xc4] sm:$0xf]
      %v222 = vld [vmem:[%s165 + $0xc8] sm:$0x1]
      %v223 = vld [vmem:[%s165 + $0xcc] sm:$0xf]
      %v224 = vld [vmem:[%s165 + $0xd0] sm:$0xf]
      %v225 = vld [vmem:[%s165 + $0xd4] sm:$0x1]
      %v226 = vunpack.c.l.bf16 %v172
      %v227 = vunpack.c.l.bf16 %v173
      %v228 = vunpack.c.l.bf16 %v174
      %v229 = vunpack.c.l.bf16 %v175
      %v230 = vunpack.c.l.bf16 %v176
      %v231 = vunpack.c.l.bf16 %v177
      %v232 = vunpack.c.l.bf16 %v178
      %v233 = vunpack.c.l.bf16 %v179
      %v234 = vunpack.c.l.bf16 %v180
      %v235 = vunpack.c.l.bf16 %v181
      %v236 = vunpack.c.l.bf16 %v182
      %v237 = vunpack.c.l.bf16 %v183
      %v238 = vunpack.c.l.bf16 %v184
      %v239 = vunpack.c.l.bf16 %v185
      %v240 = vunpack.c.l.bf16 %v186
      %v241 = vunpack.c.l.bf16 %v187
      %v242 = vunpack.c.l.bf16 %v188
      %v243 = vunpack.c.l.bf16 %v189
      %v244 = vunpack.c.l.bf16 %v190
      %v245 = vunpack.c.l.bf16 %v191
      %v246 = vunpack.c.l.bf16 %v192
      %v247 = vunpack.c.l.bf16 %v193
      %v248 = vunpack.c.l.bf16 %v194
      %v249 = vunpack.c.l.bf16 %v195
      %v250 = vunpack.c.l.bf16 %v196
      %v251 = vunpack.c.l.bf16 %v197
      %v252 = vunpack.c.l.bf16 %v198
      %v253 = vunpack.c.l.bf16 %v199
      %v254 = vunpack.c.l.bf16 %v200
      %v255 = vunpack.c.l.bf16 %v201
      %v256 = vunpack.c.l.bf16 %v202
      %v257 = vunpack.c.l.bf16 %v203
      %v258 = vunpack.c.l.bf16 %v204
      %v259 = vunpack.c.l.bf16 %v205
      %v260 = vunpack.c.l.bf16 %v206
      %v261 = vunpack.c.l.bf16 %v207
      %v262 = vunpack.c.l.bf16 %v208
      %v263 = vunpack.c.l.bf16 %v209
      %v264 = vunpack.c.l.bf16 %v210
      %v265 = vunpack.c.l.bf16 %v211
      %v266 = vunpack.c.l.bf16 %v212
      %v267 = vunpack.c.l.bf16 %v213
      %v268 = vunpack.c.l.bf16 %v214
      %v269 = vunpack.c.l.bf16 %v215
      %v270 = vunpack.c.l.bf16 %v216
      %v271 = vunpack.c.l.bf16 %v217
      %v272 = vunpack.c.l.bf16 %v218
      %v273 = vunpack.c.l.bf16 %v219
      %v274 = vunpack.c.l.bf16 %v220
      %v275 = vunpack.c.l.bf16 %v221
      %v276 = vunpack.c.l.bf16 %v222
      %v277 = vunpack.c.l.bf16 %v223
      %v278 = vunpack.c.l.bf16 %v224
      %v279 = vunpack.c.l.bf16 %v225
      %v280 = vpack.c.bf16 %v227, %v226
      %v281 = vpack.c.bf16 %v230, %v229
      %v282 = vpack.c.bf16 %v233, %v232
      %v283 = vpack.c.bf16 %v236, %v235
      %v284 = vpack.c.bf16 %v239, %v238
      %v285 = vpack.c.bf16 %v242, %v241
      %v286 = vpack.c.bf16 %v245, %v244
      %v287 = vpack.c.bf16 %v248, %v247
      %v288 = vpack.c.bf16 %v251, %v250
      %v289 = vpack.c.bf16 %v254, %v253
      %v290 = vpack.c.bf16 %v257, %v256
      %v291 = vpack.c.bf16 %v260, %v259
      %v292 = vpack.c.bf16 %v263, %v262
      %v293 = vpack.c.bf16 %v266, %v265
      %v294 = vpack.c.bf16 %v269, %v268
      %v295 = vpack.c.bf16 %v272, %v271
      %v296 = vld [vmem:[%s1] sm:$0xf]
      %v297 = vld [vmem:[%s1 + $0x4] sm:$0xf]
      %v298 = vld [vmem:[%s1 + $0x8] sm:$0xf]
      %v299 = vld [vmem:[%s1 + $0xc] sm:$0xf]
      %v300 = vld [vmem:[%s1 + $0x10] sm:$0xf]
      %v301 = vld [vmem:[%s1 + $0x14] sm:$0xf]
      %v302 = vld [vmem:[%s1 + $0x18] sm:$0xf]
      %v303 = vld [vmem:[%s1 + $0x1c] sm:$0xf]
      %v304 = vld [vmem:[%s1 + $0x20] sm:$0xf]
      %v305 = vld [vmem:[%s1 + $0x24] sm:$0xf]
      %v306 = vld [vmem:[%s1 + $0x28] sm:$0xf]
      %v307 = vld [vmem:[%s1 + $0x2c] sm:$0xf]
      %v308 = vld [vmem:[%s1 + $0x30] sm:$0xf]
      %v309 = vld [vmem:[%s1 + $0x34] sm:$0xf]
      %v310 = vld [vmem:[%s1 + $0x38] sm:$0xf]
      %v311 = vld [vmem:[%s1 + $0x3c] sm:$0xf]
      %vm360 = vcmask 1046528
      %v361 = vrot.slane %v226, 1
      %v362 = vrot.slane %v227, 1
      %v363 = vsel %vm360, %v361, %v362
      %v364 = vrot.slane %v228, 1
      %v365 = vsel %vm360, %v362, %v364
      %v366 = vrot.slane %v229, 1
      %v367 = vrot.slane %v230, 1
      %v368 = vsel %vm360, %v366, %v367
      %v369 = vrot.slane %v231, 1
      %v370 = vsel %vm360, %v367, %v369
      %v371 = vrot.slane %v232, 1
      %v372 = vrot.slane %v233, 1
      %v373 = vsel %vm360, %v371, %v372
      %v374 = vrot.slane %v234, 1
      %v375 = vsel %vm360, %v372, %v374
      %v376 = vrot.slane %v235, 1
      %v377 = vrot.slane %v236, 1
      %v378 = vsel %vm360, %v376, %v377
      %v379 = vrot.slane %v237, 1
      %v380 = vsel %vm360, %v377, %v379
      %v381 = vrot.slane %v238, 1
      %v382 = vrot.slane %v239, 1
      %v383 = vsel %vm360, %v381, %v382
      %v384 = vrot.slane %v240, 1
      %v385 = vsel %vm360, %v382, %v384
      %v386 = vrot.slane %v241, 1
      %v387 = vrot.slane %v242, 1
      %v388 = vsel %vm360, %v386, %v387
      %v389 = vrot.slane %v243, 1
      %v390 = vsel %vm360, %v387, %v389
      %v391 = vrot.slane %v244, 1
      %v392 = vrot.slane %v245, 1
      %v393 = vsel %vm360, %v391, %v392
      %v394 = vrot.slane %v246, 1
      %v395 = vsel %vm360, %v392, %v394
      %v396 = vrot.slane %v247, 1
      %v397 = vrot.slane %v248, 1
      %v398 = vsel %vm360, %v396, %v397
      %v399 = vrot.slane %v249, 1
      %v400 = vsel %vm360, %v397, %v399
      %v401 = vrot.slane %v250, 1
      %v402 = vrot.slane %v251, 1
      %v403 = vsel %vm360, %v401, %v402
      %v404 = vrot.slane %v252, 1
      %v405 = vsel %vm360, %v402, %v404
      %v406 = vrot.slane %v253, 1
      %v407 = vrot.slane %v254, 1
      %v408 = vsel %vm360, %v406, %v407
      %v409 = vrot.slane %v255, 1
      %v410 = vsel %vm360, %v407, %v409
      %v411 = vrot.slane %v256, 1
      %v412 = vrot.slane %v257, 1
      %v413 = vsel %vm360, %v411, %v412
      %v414 = vrot.slane %v258, 1
      %v415 = vsel %vm360, %v412, %v414
      %v416 = vrot.slane %v259, 1
      %v417 = vrot.slane %v260, 1
      %v418 = vsel %vm360, %v416, %v417
      %v419 = vrot.slane %v261, 1
      %v420 = vsel %vm360, %v417, %v419
      %v421 = vrot.slane %v262, 1
      %v422 = vrot.slane %v263, 1
      %v423 = vsel %vm360, %v421, %v422
      %v424 = vrot.slane %v264, 1
      %v425 = vsel %vm360, %v422, %v424
      %v426 = vrot.slane %v265, 1
      %v427 = vrot.slane %v266, 1
      %v428 = vsel %vm360, %v426, %v427
      %v429 = vrot.slane %v267, 1
      %v430 = vsel %vm360, %v427, %v429
      %v431 = vrot.slane %v268, 1
      %v432 = vrot.slane %v269, 1
      %v433 = vsel %vm360, %v431, %v432
      %v434 = vrot.slane %v270, 1
      %v435 = vsel %vm360, %v432, %v434
      %v436 = vrot.slane %v271, 1
      %v437 = vrot.slane %v272, 1
      %v438 = vsel %vm360, %v436, %v437
      %v439 = vrot.slane %v273, 1
      %v440 = vsel %vm360, %v437, %v439
      %v473 = vpack.c.bf16 %v365, %v363
      %v474 = vpack.c.bf16 %v370, %v368
      %v475 = vpack.c.bf16 %v375, %v373
      %v476 = vpack.c.bf16 %v380, %v378
      %v477 = vpack.c.bf16 %v385, %v383
      %v478 = vpack.c.bf16 %v390, %v388
      %v479 = vpack.c.bf16 %v395, %v393
      %v480 = vpack.c.bf16 %v400, %v398
      %v481 = vpack.c.bf16 %v405, %v403
      %v482 = vpack.c.bf16 %v410, %v408
      %v483 = vpack.c.bf16 %v415, %v413
      %v484 = vpack.c.bf16 %v420, %v418
      %v485 = vpack.c.bf16 %v425, %v423
      %v486 = vpack.c.bf16 %v430, %v428
      %v487 = vpack.c.bf16 %v435, %v433
      %v488 = vpack.c.bf16 %v440, %v438
      %s489 = scalar_lea.vmem %s1, 64
      %v490 = vld [vmem:[%s489] sm:$0xf]
      %v491 = vld [vmem:[%s489 + $0x4] sm:$0xf]
      %v492 = vld [vmem:[%s489 + $0x8] sm:$0xf]
      %v493 = vld [vmem:[%s489 + $0xc] sm:$0xf]
      %v494 = vld [vmem:[%s489 + $0x10] sm:$0xf]
      %v495 = vld [vmem:[%s489 + $0x14] sm:$0xf]
      %v496 = vld [vmem:[%s489 + $0x18] sm:$0xf]
      %v497 = vld [vmem:[%s489 + $0x1c] sm:$0xf]
      %v498 = vld [vmem:[%s489 + $0x20] sm:$0xf]
      %v499 = vld [vmem:[%s489 + $0x24] sm:$0xf]
      %v500 = vld [vmem:[%s489 + $0x28] sm:$0xf]
      %v501 = vld [vmem:[%s489 + $0x2c] sm:$0xf]
      %v502 = vld [vmem:[%s489 + $0x30] sm:$0xf]
      %v503 = vld [vmem:[%s489 + $0x34] sm:$0xf]
      %v504 = vld [vmem:[%s489 + $0x38] sm:$0xf]
      %v505 = vld [vmem:[%s489 + $0x3c] sm:$0xf]
      %v522 = vunpack.c.l.b16 %v490
      %v523 = vunpack.c.l.b16 %v491
      %v524 = vunpack.c.l.b16 %v492
      %v525 = vunpack.c.l.b16 %v493
      %v526 = vunpack.c.l.b16 %v494
      %v527 = vunpack.c.l.b16 %v495
      %v528 = vunpack.c.l.b16 %v496
      %v529 = vunpack.c.l.b16 %v497
      %v530 = vunpack.c.l.b16 %v498
      %v531 = vunpack.c.l.b16 %v499
      %v532 = vunpack.c.l.b16 %v500
      %v533 = vunpack.c.l.b16 %v501
      %v534 = vunpack.c.l.b16 %v502
      %v535 = vunpack.c.l.b16 %v503
      %v536 = vunpack.c.l.b16 %v504
      %v537 = vunpack.c.l.b16 %v505
      %v538 = vpack.c.b16 %v523, %v522
      %v539 = vpack.c.b16 %v525, %v524
      %v540 = vpack.c.b16 %v527, %v526
      %v541 = vpack.c.b16 %v529, %v528
      %v542 = vpack.c.b16 %v531, %v530
      %v543 = vpack.c.b16 %v533, %v532
      %v544 = vpack.c.b16 %v535, %v534
      %v545 = vpack.c.b16 %v537, %v536
      %554 = vmatprep.subr.bf16.mxu0 0
      %555 = vmatpush1.bf16.msra.mxu0 %v538
      %556 = vmatprep.subr.bf16.mxu0 0
      %557 = vmatpush1.bf16.msra.mxu0 %v539
      %558 = vmatprep.subr.bf16.mxu0 0
      %559 = vmatpush1.bf16.msra.mxu0 %v540
      %560 = vmatprep.subr.bf16.mxu0 0
      %561 = vmatpush1.bf16.msra.mxu0 %v541
      %562 = vmatprep.subr.bf16.mxu0 0
      %563 = vmatpush1.bf16.msra.mxu0 %v542
      %564 = vmatprep.subr.bf16.mxu0 0
      %565 = vmatpush1.bf16.msra.mxu0 %v543
      %566 = vmatprep.subr.bf16.mxu0 0
      %567 = vmatpush1.bf16.msra.mxu0 %v544
      %568 = vmatprep.subr.bf16.mxu0 0
      %569 = vmatpush1.bf16.msra.mxu0 %v545
      %570 = vmatprep.subr.bf16.mxu0 0
      %571 = vmatpush1.bf16.msra.mxu0 0
      %572 = vmatprep.subr.bf16.mxu0 0
      %573 = vmatpush1.bf16.msra.mxu0 0
      %574 = vmatprep.subr.bf16.mxu0 0
      %575 = vmatpush1.bf16.msra.mxu0 0
      %576 = vmatprep.subr.bf16.mxu0 0
      %577 = vmatpush1.bf16.msra.mxu0 0
      %578 = vmatprep.subr.bf16.mxu0 0
      %579 = vmatpush1.bf16.msra.mxu0 0
      %580 = vmatprep.subr.bf16.mxu0 0
      %581 = vmatpush1.bf16.msra.mxu0 0
      %582 = vmatprep.subr.bf16.mxu0 0
      %583 = vmatpush1.bf16.msra.mxu0 0
      %584 = vmatprep.subr.bf16.mxu0 0
      %585 = vmatpush1.bf16.msra.mxu0 0
      %586 = vmatprep.mubr.bf16.mxu0 0
      %587 = vmatmul.mubr.bf16.gmra.mrb[0].mxu0 %v473
      %v588 = vpop.f32.mrb[0].mxu0
      %v589 = vadd.f32 0.0, %v588
      %v590 = vpop.f32.mrb[0].mxu0
      %v591 = vpop.f32.mrb[0].mxu0
      %v592 = vadd.f32 0.0, %v591
      %v593 = vpop.f32.mrb[0].mxu0
      %594 = vmatprep.mubr.bf16.mxu0 0
      %595 = vmatmul.mubr.bf16.gmra.mrb[0].mxu0 %v474
      %v596 = vpop.f32.mrb[0].mxu0
      %v597 = vadd.f32 0.0, %v596
      %v598 = vpop.f32.mrb[0].mxu0
      %v599 = vpop.f32.mrb[0].mxu0
      %v600 = vadd.f32 0.0, %v599
      %v601 = vpop.f32.mrb[0].mxu0
      %602 = vmatprep.mubr.bf16.mxu0 0
      %603 = vmatmul.mubr.bf16.gmra.mrb[0].mxu0 %v475
      %v604 = vpop.f32.mrb[0].mxu0
      %v605 = vadd.f32 0.0, %v604
      %v606 = vpop.f32.mrb[0].mxu0
      %v607 = vpop.f32.mrb[0].mxu0
      %v608 = vadd.f32 0.0, %v607
      %v609 = vpop.f32.mrb[0].mxu0
      %610 = vmatprep.mubr.bf16.mxu0 0
      %611 = vmatmul.mubr.bf16.gmra.mrb[0].mxu0 %v476
      %v612 = vpop.f32.mrb[0].mxu0
      %v613 = vadd.f32 0.0, %v612
      %v614 = vpop.f32.mrb[0].mxu0
      %v615 = vpop.f32.mrb[0].mxu0
      %v616 = vadd.f32 0.0, %v615
      %v617 = vpop.f32.mrb[0].mxu0
      %618 = vmatprep.mubr.bf16.mxu0 0
      %619 = vmatmul.mubr.bf16.gmra.mrb[0].mxu0 %v477
      %v620 = vpop.f32.mrb[0].mxu0
      %v621 = vadd.f32 0.0, %v620
      %v622 = vpop.f32.mrb[0].mxu0
      %v623 = vpop.f32.mrb[0].mxu0
      %v624 = vadd.f32 0.0, %v623
      %v625 = vpop.f32.mrb[0].mxu0
      %626 = vmatprep.mubr.bf16.mxu0 0
      %627 = vmatmul.mubr.bf16.gmra.mrb[0].mxu0 %v478
      %v628 = vpop.f32.mrb[0].mxu0
      %v629 = vadd.f32 0.0, %v628
      %v630 = vpop.f32.mrb[0].mxu0
      %v631 = vpop.f32.mrb[0].mxu0
      %v632 = vadd.f32 0.0, %v631
      %v633 = vpop.f32.mrb[0].mxu0
      %634 = vmatprep.mubr.bf16.mxu0 0
      %635 = vmatmul.mubr.bf16.gmra.mrb[0].mxu0 %v479
      %v636 = vpop.f32.mrb[0].mxu0
      %v637 = vadd.f32 0.0, %v636
      %v638 = vpop.f32.mrb[0].mxu0
      %v639 = vpop.f32.mrb[0].mxu0
      %v640 = vadd.f32 0.0, %v639
      %v641 = vpop.f32.mrb[0].mxu0
      %642 = vmatprep.mubr.bf16.mxu0 0
      %643 = vmatmul.mubr.bf16.gmra.mrb[0].mxu0 %v480
      %v644 = vpop.f32.mrb[0].mxu0
      %v645 = vadd.f32 0.0, %v644
      %v646 = vpop.f32.mrb[0].mxu0
      %v647 = vpop.f32.mrb[0].mxu0
      %v648 = vadd.f32 0.0, %v647
      %v649 = vpop.f32.mrb[0].mxu0
      %650 = vmatprep.mubr.bf16.mxu0 0
      %651 = vmatmul.mubr.bf16.gmra.mrb[0].mxu0 %v481
      %v652 = vpop.f32.mrb[0].mxu0
      %v653 = vadd.f32 0.0, %v652
      %v654 = vpop.f32.mrb[0].mxu0
      %v655 = vpop.f32.mrb[0].mxu0
      %v656 = vadd.f32 0.0, %v655
      %v657 = vpop.f32.mrb[0].mxu0
      %658 = vmatprep.mubr.bf16.mxu0 0
      %659 = vmatmul.mubr.bf16.gmra.mrb[0].mxu0 %v482
      %v660 = vpop.f32.mrb[0].mxu0
      %v661 = vadd.f32 0.0, %v660
      %v662 = vpop.f32.mrb[0].mxu0
      %v663 = vpop.f32.mrb[0].mxu0
      %v664 = vadd.f32 0.0, %v663
      %v665 = vpop.f32.mrb[0].mxu0
      %666 = vmatprep.mubr.bf16.mxu0 0
      %667 = vmatmul.mubr.bf16.gmra.mrb[0].mxu0 %v483
      %v668 = vpop.f32.mrb[0].mxu0
      %v669 = vadd.f32 0.0, %v668
      %v670 = vpop.f32.mrb[0].mxu0
      %v671 = vpop.f32.mrb[0].mxu0
      %v672 = vadd.f32 0.0, %v671
      %v673 = vpop.f32.mrb[0].mxu0
      %674 = vmatprep.mubr.bf16.mxu0 0
      %675 = vmatmul.mubr.bf16.gmra.mrb[0].mxu0 %v484
      %v676 = vpop.f32.mrb[0].mxu0
      %v677 = vadd.f32 0.0, %v676
      %v678 = vpop.f32.mrb[0].mxu0
      %v679 = vpop.f32.mrb[0].mxu0
      %v680 = vadd.f32 0.0, %v679
      %v681 = vpop.f32.mrb[0].mxu0
      %682 = vmatprep.mubr.bf16.mxu0 0
      %683 = vmatmul.mubr.bf16.gmra.mrb[0].mxu0 %v485
      %v684 = vpop.f32.mrb[0].mxu0
      %v685 = vadd.f32 0.0, %v684
      %v686 = vpop.f32.mrb[0].mxu0
      %v687 = vpop.f32.mrb[0].mxu0
      %v688 = vadd.f32 0.0, %v687
      %v689 = vpop.f32.mrb[0].mxu0
      %690 = vmatprep.mubr.bf16.mxu0 0
      %691 = vmatmul.mubr.bf16.gmra.mrb[0].mxu0 %v486
      %v692 = vpop.f32.mrb[0].mxu0
      %v693 = vadd.f32 0.0, %v692
      %v694 = vpop.f32.mrb[0].mxu0
      %v695 = vpop.f32.mrb[0].mxu0
      %v696 = vadd.f32 0.0, %v695
      %v697 = vpop.f32.mrb[0].mxu0
      %698 = vmatprep.mubr.bf16.mxu0 0
      %699 = vmatmul.mubr.bf16.gmra.mrb[0].mxu0 %v487
      %v700 = vpop.f32.mrb[0].mxu0
      %v701 = vadd.f32 0.0, %v700
      %v702 = vpop.f32.mrb[0].mxu0
      %v703 = vpop.f32.mrb[0].mxu0
      %v704 = vadd.f32 0.0, %v703
      %v705 = vpop.f32.mrb[0].mxu0
      %706 = vmatprep.mubr.bf16.mxu0 0
      %707 = vmatmul.mubr.bf16.gmra.mrb[0].mxu0 %v488
      %v708 = vpop.f32.mrb[0].mxu0
      %v709 = vadd.f32 0.0, %v708
      %v710 = vpop.f32.mrb[0].mxu0
      %v711 = vpop.f32.mrb[0].mxu0
      %v712 = vadd.f32 0.0, %v711
      %v713 = vpop.f32.mrb[0].mxu0
      %714 = vdwg.mxu0
      %v731 = vunpack.c.l.b16 %v296
      %v732 = vunpack.c.l.b16 %v297
      %v733 = vunpack.c.l.b16 %v298
      %v734 = vunpack.c.l.b16 %v299
      %v735 = vunpack.c.l.b16 %v300
      %v736 = vunpack.c.l.b16 %v301
      %v737 = vunpack.c.l.b16 %v302
      %v738 = vunpack.c.l.b16 %v303
      %v739 = vunpack.c.l.b16 %v304
      %v740 = vunpack.c.l.b16 %v305
      %v741 = vunpack.c.l.b16 %v306
      %v742 = vunpack.c.l.b16 %v307
      %v743 = vunpack.c.l.b16 %v308
      %v744 = vunpack.c.l.b16 %v309
      %v745 = vunpack.c.l.b16 %v310
      %v746 = vunpack.c.l.b16 %v311
      %v747 = vpack.c.b16 %v732, %v731
      %v748 = vpack.c.b16 %v734, %v733
      %v749 = vpack.c.b16 %v736, %v735
      %v750 = vpack.c.b16 %v738, %v737
      %v751 = vpack.c.b16 %v740, %v739
      %v752 = vpack.c.b16 %v742, %v741
      %v753 = vpack.c.b16 %v744, %v743
      %v754 = vpack.c.b16 %v746, %v745
      %763 = vmatprep.subr.bf16.mxu0 0
      %764 = vmatpush1.bf16.msra.mxu0 %v747
      %765 = vmatprep.subr.bf16.mxu0 0
      %766 = vmatpush1.bf16.msra.mxu0 %v748
      %767 = vmatprep.subr.bf16.mxu0 0
      %768 = vmatpush1.bf16.msra.mxu0 %v749
      %769 = vmatprep.subr.bf16.mxu0 0
      %770 = vmatpush1.bf16.msra.mxu0 %v750
      %771 = vmatprep.subr.bf16.mxu0 0
      %772 = vmatpush1.bf16.msra.mxu0 %v751
      %773 = vmatprep.subr.bf16.mxu0 0
      %774 = vmatpush1.bf16.msra.mxu0 %v752
      %775 = vmatprep.subr.bf16.mxu0 0
      %776 = vmatpush1.bf16.msra.mxu0 %v753
      %777 = vmatprep.subr.bf16.mxu0 0
      %778 = vmatpush1.bf16.msra.mxu0 %v754
      %779 = vmatprep.subr.bf16.mxu0 0
      %780 = vmatpush1.bf16.msra.mxu0 0
      %781 = vmatprep.subr.bf16.mxu0 0
      %782 = vmatpush1.bf16.msra.mxu0 0
      %783 = vmatprep.subr.bf16.mxu0 0
      %784 = vmatpush1.bf16.msra.mxu0 0
      %785 = vmatprep.subr.bf16.mxu0 0
      %786 = vmatpush1.bf16.msra.mxu0 0
      %787 = vmatprep.subr.bf16.mxu0 0
      %788 = vmatpush1.bf16.msra.mxu0 0
      %789 = vmatprep.subr.bf16.mxu0 0
      %790 = vmatpush1.bf16.msra.mxu0 0
      %791 = vmatprep.subr.bf16.mxu0 0
      %792 = vmatpush1.bf16.msra.mxu0 0
      %793 = vmatprep.subr.bf16.mxu0 0
      %794 = vmatpush1.bf16.msra.mxu0 0
      %795 = vmatprep.mubr.bf16.mxu0 0
      %796 = vmatmul.mubr.bf16.gmra.mrb[0].mxu0 %v280
      %v797 = vpop.f32.mrb[0].mxu0
      %v798 = vadd.f32 %v589, %v797
      %v799 = vpop.f32.mrb[0].mxu0
      %v800 = vpop.f32.mrb[0].mxu0
      %v801 = vadd.f32 %v592, %v800
      %v802 = vpop.f32.mrb[0].mxu0
      %803 = vmatprep.mubr.bf16.mxu0 0
      %804 = vmatmul.mubr.bf16.gmra.mrb[0].mxu0 %v281
      %v805 = vpop.f32.mrb[0].mxu0
      %v806 = vadd.f32 %v597, %v805
      %v807 = vpop.f32.mrb[0].mxu0
      %v808 = vpop.f32.mrb[0].mxu0
      %v809 = vadd.f32 %v600, %v808
      %v810 = vpop.f32.mrb[0].mxu0
      %811 = vmatprep.mubr.bf16.mxu0 0
      %812 = vmatmul.mubr.bf16.gmra.mrb[0].mxu0 %v282
      %v813 = vpop.f32.mrb[0].mxu0
      %v814 = vadd.f32 %v605, %v813
      %v815 = vpop.f32.mrb[0].mxu0
      %v816 = vpop.f32.mrb[0].mxu0
      %v817 = vadd.f32 %v608, %v816
      %v818 = vpop.f32.mrb[0].mxu0
      %819 = vmatprep.mubr.bf16.mxu0 0
      %820 = vmatmul.mubr.bf16.gmra.mrb[0].mxu0 %v283
      %v821 = vpop.f32.mrb[0].mxu0
      %v822 = vadd.f32 %v613, %v821
      %v823 = vpop.f32.mrb[0].mxu0
      %v824 = vpop.f32.mrb[0].mxu0
      %v825 = vadd.f32 %v616, %v824
      %v826 = vpop.f32.mrb[0].mxu0
      %827 = vmatprep.mubr.bf16.mxu0 0
      %828 = vmatmul.mubr.bf16.gmra.mrb[0].mxu0 %v284
      %v829 = vpop.f32.mrb[0].mxu0
      %v830 = vadd.f32 %v621, %v829
      %v831 = vpop.f32.mrb[0].mxu0
      %v832 = vpop.f32.mrb[0].mxu0
      %v833 = vadd.f32 %v624, %v832
      %v834 = vpop.f32.mrb[0].mxu0
      %835 = vmatprep.mubr.bf16.mxu0 0
      %836 = vmatmul.mubr.bf16.gmra.mrb[0].mxu0 %v285
      %v837 = vpop.f32.mrb[0].mxu0
      %v838 = vadd.f32 %v629, %v837
      %v839 = vpop.f32.mrb[0].mxu0
      %v840 = vpop.f32.mrb[0].mxu0
      %v841 = vadd.f32 %v632, %v840
      %v842 = vpop.f32.mrb[0].mxu0
      %843 = vmatprep.mubr.bf16.mxu0 0
      %844 = vmatmul.mubr.bf16.gmra.mrb[0].mxu0 %v286
      %v845 = vpop.f32.mrb[0].mxu0
      %v846 = vadd.f32 %v637, %v845
      %v847 = vpop.f32.mrb[0].mxu0
      %v848 = vpop.f32.mrb[0].mxu0
      %v849 = vadd.f32 %v640, %v848
      %v850 = vpop.f32.mrb[0].mxu0
      %851 = vmatprep.mubr.bf16.mxu0 0
      %852 = vmatmul.mubr.bf16.gmra.mrb[0].mxu0 %v287
      %v853 = vpop.f32.mrb[0].mxu0
      %v854 = vadd.f32 %v645, %v853
      %v855 = vpop.f32.mrb[0].mxu0
      %v856 = vpop.f32.mrb[0].mxu0
      %v857 = vadd.f32 %v648, %v856
      %v858 = vpop.f32.mrb[0].mxu0
      %859 = vmatprep.mubr.bf16.mxu0 0
      %860 = vmatmul.mubr.bf16.gmra.mrb[0].mxu0 %v288
      %v861 = vpop.f32.mrb[0].mxu0
      %v862 = vadd.f32 %v653, %v861
      %v863 = vpop.f32.mrb[0].mxu0
      %v864 = vpop.f32.mrb[0].mxu0
      %v865 = vadd.f32 %v656, %v864
      %v866 = vpop.f32.mrb[0].mxu0
      %867 = vmatprep.mubr.bf16.mxu0 0
      %868 = vmatmul.mubr.bf16.gmra.mrb[0].mxu0 %v289
      %v869 = vpop.f32.mrb[0].mxu0
      %v870 = vadd.f32 %v661, %v869
      %v871 = vpop.f32.mrb[0].mxu0
      %v872 = vpop.f32.mrb[0].mxu0
      %v873 = vadd.f32 %v664, %v872
      %v874 = vpop.f32.mrb[0].mxu0
      %875 = vmatprep.mubr.bf16.mxu0 0
      %876 = vmatmul.mubr.bf16.gmra.mrb[0].mxu0 %v290
      %v877 = vpop.f32.mrb[0].mxu0
      %v878 = vadd.f32 %v669, %v877
      %v879 = vpop.f32.mrb[0].mxu0
      %v880 = vpop.f32.mrb[0].mxu0
      %v881 = vadd.f32 %v672, %v880
      %v882 = vpop.f32.mrb[0].mxu0
      %883 = vmatprep.mubr.bf16.mxu0 0
      %884 = vmatmul.mubr.bf16.gmra.mrb[0].mxu0 %v291
      %v885 = vpop.f32.mrb[0].mxu0
      %v886 = vadd.f32 %v677, %v885
      %v887 = vpop.f32.mrb[0].mxu0
      %v888 = vpop.f32.mrb[0].mxu0
      %v889 = vadd.f32 %v680, %v888
      %v890 = vpop.f32.mrb[0].mxu0
      %891 = vmatprep.mubr.bf16.mxu0 0
      %892 = vmatmul.mubr.bf16.gmra.mrb[0].mxu0 %v292
      %v893 = vpop.f32.mrb[0].mxu0
      %v894 = vadd.f32 %v685, %v893
      %v895 = vpop.f32.mrb[0].mxu0
      %v896 = vpop.f32.mrb[0].mxu0
      %v897 = vadd.f32 %v688, %v896
      %v898 = vpop.f32.mrb[0].mxu0
      %899 = vmatprep.mubr.bf16.mxu0 0
      %900 = vmatmul.mubr.bf16.gmra.mrb[0].mxu0 %v293
      %v901 = vpop.f32.mrb[0].mxu0
      %v902 = vadd.f32 %v693, %v901
      %v903 = vpop.f32.mrb[0].mxu0
      %v904 = vpop.f32.mrb[0].mxu0
      %v905 = vadd.f32 %v696, %v904
      %v906 = vpop.f32.mrb[0].mxu0
      %907 = vmatprep.mubr.bf16.mxu0 0
      %908 = vmatmul.mubr.bf16.gmra.mrb[0].mxu0 %v294
      %v909 = vpop.f32.mrb[0].mxu0
      %v910 = vadd.f32 %v701, %v909
      %v911 = vpop.f32.mrb[0].mxu0
      %v912 = vpop.f32.mrb[0].mxu0
      %v913 = vadd.f32 %v704, %v912
      %v914 = vpop.f32.mrb[0].mxu0
      %915 = vmatprep.mubr.bf16.mxu0 0
      %916 = vmatmul.mubr.bf16.gmra.mrb[0].mxu0 %v295
      %v917 = vpop.f32.mrb[0].mxu0
      %v918 = vadd.f32 %v709, %v917
      %v919 = vpop.f32.mrb[0].mxu0
      %v920 = vpop.f32.mrb[0].mxu0
      %v921 = vadd.f32 %v712, %v920
      %v922 = vpop.f32.mrb[0].mxu0
      %923 = vdwg.mxu0
      %vm924 = vcmask 1045504
      %v925 = vrot.slane %v226, 2
      %v926 = vrot.slane %v227, 2
      %v927 = vsel %vm924, %v925, %v926
      %v928 = vrot.slane %v228, 2
      %v929 = vsel %vm924, %v926, %v928
      %v930 = vrot.slane %v229, 2
      %v931 = vrot.slane %v230, 2
      %v932 = vsel %vm924, %v930, %v931
      %v933 = vrot.slane %v231, 2
      %v934 = vsel %vm924, %v931, %v933
      %v935 = vrot.slane %v232, 2
      %v936 = vrot.slane %v233, 2
      %v937 = vsel %vm924, %v935, %v936
      %v938 = vrot.slane %v234, 2
      %v939 = vsel %vm924, %v936, %v938
      %v940 = vrot.slane %v235, 2
      %v941 = vrot.slane %v236, 2
      %v942 = vsel %vm924, %v940, %v941
      %v943 = vrot.slane %v237, 2
      %v944 = vsel %vm924, %v941, %v943
      %v945 = vrot.slane %v238, 2
      %v946 = vrot.slane %v239, 2
      %v947 = vsel %vm924, %v945, %v946
      %v948 = vrot.slane %v240, 2
      %v949 = vsel %vm924, %v946, %v948
      %v950 = vrot.slane %v241, 2
      %v951 = vrot.slane %v242, 2
      %v952 = vsel %vm924, %v950, %v951
      %v953 = vrot.slane %v243, 2
      %v954 = vsel %vm924, %v951, %v953
      %v955 = vrot.slane %v244, 2
      %v956 = vrot.slane %v245, 2
      %v957 = vsel %vm924, %v955, %v956
      %v958 = vrot.slane %v246, 2
      %v959 = vsel %vm924, %v956, %v958
      %v960 = vrot.slane %v247, 2
      %v961 = vrot.slane %v248, 2
      %v962 = vsel %vm924, %v960, %v961
      %v963 = vrot.slane %v249, 2
      %v964 = vsel %vm924, %v961, %v963
      %v965 = vrot.slane %v250, 2
      %v966 = vrot.slane %v251, 2
      %v967 = vsel %vm924, %v965, %v966
      %v968 = vrot.slane %v252, 2
      %v969 = vsel %vm924, %v966, %v968
      %v970 = vrot.slane %v253, 2
      %v971 = vrot.slane %v254, 2
      %v972 = vsel %vm924, %v970, %v971
      %v973 = vrot.slane %v255, 2
      %v974 = vsel %vm924, %v971, %v973
      %v975 = vrot.slane %v256, 2
      %v976 = vrot.slane %v257, 2
      %v977 = vsel %vm924, %v975, %v976
      %v978 = vrot.slane %v258, 2
      %v979 = vsel %vm924, %v976, %v978
      %v980 = vrot.slane %v259, 2
      %v981 = vrot.slane %v260, 2
      %v982 = vsel %vm924, %v980, %v981
      %v983 = vrot.slane %v261, 2
      %v984 = vsel %vm924, %v981, %v983
      %v985 = vrot.slane %v262, 2
      %v986 = vrot.slane %v263, 2
      %v987 = vsel %vm924, %v985, %v986
      %v988 = vrot.slane %v264, 2
      %v989 = vsel %vm924, %v986, %v988
      %v990 = vrot.slane %v265, 2
      %v991 = vrot.slane %v266, 2
      %v992 = vsel %vm924, %v990, %v991
      %v993 = vrot.slane %v267, 2
      %v994 = vsel %vm924, %v991, %v993
      %v995 = vrot.slane %v268, 2
      %v996 = vrot.slane %v269, 2
      %v997 = vsel %vm924, %v995, %v996
      %v998 = vrot.slane %v270, 2
      %v999 = vsel %vm924, %v996, %v998
      %v1000 = vrot.slane %v271, 2
      %v1001 = vrot.slane %v272, 2
      %v1002 = vsel %vm924, %v1000, %v1001
      %v1003 = vrot.slane %v273, 2
      %v1004 = vsel %vm924, %v1001, %v1003
      %v1037 = vpack.c.bf16 %v929, %v927
      %v1038 = vpack.c.bf16 %v934, %v932
      %v1039 = vpack.c.bf16 %v939, %v937
      %v1040 = vpack.c.bf16 %v944, %v942
      %v1041 = vpack.c.bf16 %v949, %v947
      %v1042 = vpack.c.bf16 %v954, %v952
      %v1043 = vpack.c.bf16 %v959, %v957
      %v1044 = vpack.c.bf16 %v964, %v962
      %v1045 = vpack.c.bf16 %v969, %v967
      %v1046 = vpack.c.bf16 %v974, %v972
      %v1047 = vpack.c.bf16 %v979, %v977
      %v1048 = vpack.c.bf16 %v984, %v982
      %v1049 = vpack.c.bf16 %v989, %v987
      %v1050 = vpack.c.bf16 %v994, %v992
      %v1051 = vpack.c.bf16 %v999, %v997
      %v1052 = vpack.c.bf16 %v1004, %v1002
      %s1053 = scalar_lea.vmem %s1, 128
      %v1054 = vld [vmem:[%s1053] sm:$0xf]
      %v1055 = vld [vmem:[%s1053 + $0x4] sm:$0xf]
      %v1056 = vld [vmem:[%s1053 + $0x8] sm:$0xf]
      %v1057 = vld [vmem:[%s1053 + $0xc] sm:$0xf]
      %v1058 = vld [vmem:[%s1053 + $0x10] sm:$0xf]
      %v1059 = vld [vmem:[%s1053 + $0x14] sm:$0xf]
      %v1060 = vld [vmem:[%s1053 + $0x18] sm:$0xf]
      %v1061 = vld [vmem:[%s1053 + $0x1c] sm:$0xf]
      %v1062 = vld [vmem:[%s1053 + $0x20] sm:$0xf]
      %v1063 = vld [vmem:[%s1053 + $0x24] sm:$0xf]
      %v1064 = vld [vmem:[%s1053 + $0x28] sm:$0xf]
      %v1065 = vld [vmem:[%s1053 + $0x2c] sm:$0xf]
      %v1066 = vld [vmem:[%s1053 + $0x30] sm:$0xf]
      %v1067 = vld [vmem:[%s1053 + $0x34] sm:$0xf]
      %v1068 = vld [vmem:[%s1053 + $0x38] sm:$0xf]
      %v1069 = vld [vmem:[%s1053 + $0x3c] sm:$0xf]
      %v1086 = vunpack.c.l.b16 %v1054
      %v1087 = vunpack.c.l.b16 %v1055
      %v1088 = vunpack.c.l.b16 %v1056
      %v1089 = vunpack.c.l.b16 %v1057
      %v1090 = vunpack.c.l.b16 %v1058
      %v1091 = vunpack.c.l.b16 %v1059
      %v1092 = vunpack.c.l.b16 %v1060
      %v1093 = vunpack.c.l.b16 %v1061
      %v1094 = vunpack.c.l.b16 %v1062
      %v1095 = vunpack.c.l.b16 %v1063
      %v1096 = vunpack.c.l.b16 %v1064
      %v1097 = vunpack.c.l.b16 %v1065
      %v1098 = vunpack.c.l.b16 %v1066
      %v1099 = vunpack.c.l.b16 %v1067
      %v1100 = vunpack.c.l.b16 %v1068
      %v1101 = vunpack.c.l.b16 %v1069
      %v1102 = vpack.c.b16 %v1087, %v1086
      %v1103 = vpack.c.b16 %v1089, %v1088
      %v1104 = vpack.c.b16 %v1091, %v1090
      %v1105 = vpack.c.b16 %v1093, %v1092
      %v1106 = vpack.c.b16 %v1095, %v1094
      %v1107 = vpack.c.b16 %v1097, %v1096
      %v1108 = vpack.c.b16 %v1099, %v1098
      %v1109 = vpack.c.b16 %v1101, %v1100
      %1118 = vmatprep.subr.bf16.mxu0 0
      %1119 = vmatpush1.bf16.msra.mxu0 %v1102
      %1120 = vmatprep.subr.bf16.mxu0 0
      %1121 = vmatpush1.bf16.msra.mxu0 %v1103
      %1122 = vmatprep.subr.bf16.mxu0 0
      %1123 = vmatpush1.bf16.msra.mxu0 %v1104
      %1124 = vmatprep.subr.bf16.mxu0 0
      %1125 = vmatpush1.bf16.msra.mxu0 %v1105
      %1126 = vmatprep.subr.bf16.mxu0 0
      %1127 = vmatpush1.bf16.msra.mxu0 %v1106
      %1128 = vmatprep.subr.bf16.mxu0 0
      %1129 = vmatpush1.bf16.msra.mxu0 %v1107
      %1130 = vmatprep.subr.bf16.mxu0 0
      %1131 = vmatpush1.bf16.msra.mxu0 %v1108
      %1132 = vmatprep.subr.bf16.mxu0 0
      %1133 = vmatpush1.bf16.msra.mxu0 %v1109
      %1134 = vmatprep.subr.bf16.mxu0 0
      %1135 = vmatpush1.bf16.msra.mxu0 0
      %1136 = vmatprep.subr.bf16.mxu0 0
      %1137 = vmatpush1.bf16.msra.mxu0 0
      %1138 = vmatprep.subr.bf16.mxu0 0
      %1139 = vmatpush1.bf16.msra.mxu0 0
      %1140 = vmatprep.subr.bf16.mxu0 0
      %1141 = vmatpush1.bf16.msra.mxu0 0
      %1142 = vmatprep.subr.bf16.mxu0 0
      %1143 = vmatpush1.bf16.msra.mxu0 0
      %1144 = vmatprep.subr.bf16.mxu0 0
      %1145 = vmatpush1.bf16.msra.mxu0 0
      %1146 = vmatprep.subr.bf16.mxu0 0
      %1147 = vmatpush1.bf16.msra.mxu0 0
      %1148 = vmatprep.subr.bf16.mxu0 0
      %1149 = vmatpush1.bf16.msra.mxu0 0
      %1150 = vmatprep.mubr.bf16.mxu0 0
      %1151 = vmatmul.mubr.bf16.gmra.mrb[0].mxu0 %v1037
      %v1152 = vpop.f32.mrb[0].mxu0
      %v1153 = vadd.f32 0.0, %v1152
      %v1154 = vpop.f32.mrb[0].mxu0
      %v1155 = vpop.f32.mrb[0].mxu0
      %v1156 = vadd.f32 0.0, %v1155
      %v1157 = vpop.f32.mrb[0].mxu0
      %1158 = vmatprep.mubr.bf16.mxu0 0
      %1159 = vmatmul.mubr.bf16.gmra.mrb[0].mxu0 %v1038
      %v1160 = vpop.f32.mrb[0].mxu0
      %v1161 = vadd.f32 0.0, %v1160
      %v1162 = vpop.f32.mrb[0].mxu0
      %v1163 = vpop.f32.mrb[0].mxu0
      %v1164 = vadd.f32 0.0, %v1163
      %v1165 = vpop.f32.mrb[0].mxu0
      %1166 = vmatprep.mubr.bf16.mxu0 0
      %1167 = vmatmul.mubr.bf16.gmra.mrb[0].mxu0 %v1039
      %v1168 = vpop.f32.mrb[0].mxu0
      %v1169 = vadd.f32 0.0, %v1168
      %v1170 = vpop.f32.mrb[0].mxu0
      %v1171 = vpop.f32.mrb[0].mxu0
      %v1172 = vadd.f32 0.0, %v1171
      %v1173 = vpop.f32.mrb[0].mxu0
      %1174 = vmatprep.mubr.bf16.mxu0 0
      %1175 = vmatmul.mubr.bf16.gmra.mrb[0].mxu0 %v1040
      %v1176 = vpop.f32.mrb[0].mxu0
      %v1177 = vadd.f32 0.0, %v1176
      %v1178 = vpop.f32.mrb[0].mxu0
      %v1179 = vpop.f32.mrb[0].mxu0
      %v1180 = vadd.f32 0.0, %v1179
      %v1181 = vpop.f32.mrb[0].mxu0
      %1182 = vmatprep.mubr.bf16.mxu0 0
      %1183 = vmatmul.mubr.bf16.gmra.mrb[0].mxu0 %v1041
      %v1184 = vpop.f32.mrb[0].mxu0
      %v1185 = vadd.f32 0.0, %v1184
      %v1186 = vpop.f32.mrb[0].mxu0
      %v1187 = vpop.f32.mrb[0].mxu0
      %v1188 = vadd.f32 0.0, %v1187
      %v1189 = vpop.f32.mrb[0].mxu0
      %1190 = vmatprep.mubr.bf16.mxu0 0
      %1191 = vmatmul.mubr.bf16.gmra.mrb[0].mxu0 %v1042
      %v1192 = vpop.f32.mrb[0].mxu0
      %v1193 = vadd.f32 0.0, %v1192
      %v1194 = vpop.f32.mrb[0].mxu0
      %v1195 = vpop.f32.mrb[0].mxu0
      %v1196 = vadd.f32 0.0, %v1195
      %v1197 = vpop.f32.mrb[0].mxu0
      %1198 = vmatprep.mubr.bf16.mxu0 0
      %1199 = vmatmul.mubr.bf16.gmra.mrb[0].mxu0 %v1043
      %v1200 = vpop.f32.mrb[0].mxu0
      %v1201 = vadd.f32 0.0, %v1200
      %v1202 = vpop.f32.mrb[0].mxu0
      %v1203 = vpop.f32.mrb[0].mxu0
      %v1204 = vadd.f32 0.0, %v1203
      %v1205 = vpop.f32.mrb[0].mxu0
      %1206 = vmatprep.mubr.bf16.mxu0 0
      %1207 = vmatmul.mubr.bf16.gmra.mrb[0].mxu0 %v1044
      %v1208 = vpop.f32.mrb[0].mxu0
      %v1209 = vadd.f32 0.0, %v1208
      %v1210 = vpop.f32.mrb[0].mxu0
      %v1211 = vpop.f32.mrb[0].mxu0
      %v1212 = vadd.f32 0.0, %v1211
      %v1213 = vpop.f32.mrb[0].mxu0
      %1214 = vmatprep.mubr.bf16.mxu0 0
      %1215 = vmatmul.mubr.bf16.gmra.mrb[0].mxu0 %v1045
      %v1216 = vpop.f32.mrb[0].mxu0
      %v1217 = vadd.f32 0.0, %v1216
      %v1218 = vpop.f32.mrb[0].mxu0
      %v1219 = vpop.f32.mrb[0].mxu0
      %v1220 = vadd.f32 0.0, %v1219
      %v1221 = vpop.f32.mrb[0].mxu0
      %1222 = vmatprep.mubr.bf16.mxu0 0
      %1223 = vmatmul.mubr.bf16.gmra.mrb[0].mxu0 %v1046
      %v1224 = vpop.f32.mrb[0].mxu0
      %v1225 = vadd.f32 0.0, %v1224
      %v1226 = vpop.f32.mrb[0].mxu0
      %v1227 = vpop.f32.mrb[0].mxu0
      %v1228 = vadd.f32 0.0, %v1227
      %v1229 = vpop.f32.mrb[0].mxu0
      %1230 = vmatprep.mubr.bf16.mxu0 0
      %1231 = vmatmul.mubr.bf16.gmra.mrb[0].mxu0 %v1047
      %v1232 = vpop.f32.mrb[0].mxu0
      %v1233 = vadd.f32 0.0, %v1232
      %v1234 = vpop.f32.mrb[0].mxu0
      %v1235 = vpop.f32.mrb[0].mxu0
      %v1236 = vadd.f32 0.0, %v1235
      %v1237 = vpop.f32.mrb[0].mxu0
      %1238 = vmatprep.mubr.bf16.mxu0 0
      %1239 = vmatmul.mubr.bf16.gmra.mrb[0].mxu0 %v1048
      %v1240 = vpop.f32.mrb[0].mxu0
      %v1241 = vadd.f32 0.0, %v1240
      %v1242 = vpop.f32.mrb[0].mxu0
      %v1243 = vpop.f32.mrb[0].mxu0
      %v1244 = vadd.f32 0.0, %v1243
      %v1245 = vpop.f32.mrb[0].mxu0
      %1246 = vmatprep.mubr.bf16.mxu0 0
      %1247 = vmatmul.mubr.bf16.gmra.mrb[0].mxu0 %v1049
      %v1248 = vpop.f32.mrb[0].mxu0
      %v1249 = vadd.f32 0.0, %v1248
      %v1250 = vpop.f32.mrb[0].mxu0
      %v1251 = vpop.f32.mrb[0].mxu0
      %v1252 = vadd.f32 0.0, %v1251
      %v1253 = vpop.f32.mrb[0].mxu0
      %1254 = vmatprep.mubr.bf16.mxu0 0
      %1255 = vmatmul.mubr.bf16.gmra.mrb[0].mxu0 %v1050
      %v1256 = vpop.f32.mrb[0].mxu0
      %v1257 = vadd.f32 0.0, %v1256
      %v1258 = vpop.f32.mrb[0].mxu0
      %v1259 = vpop.f32.mrb[0].mxu0
      %v1260 = vadd.f32 0.0, %v1259
      %v1261 = vpop.f32.mrb[0].mxu0
      %1262 = vmatprep.mubr.bf16.mxu0 0
      %1263 = vmatmul.mubr.bf16.gmra.mrb[0].mxu0 %v1051
      %v1264 = vpop.f32.mrb[0].mxu0
      %v1265 = vadd.f32 0.0, %v1264
      %v1266 = vpop.f32.mrb[0].mxu0
      %v1267 = vpop.f32.mrb[0].mxu0
      %v1268 = vadd.f32 0.0, %v1267
      %v1269 = vpop.f32.mrb[0].mxu0
      %1270 = vmatprep.mubr.bf16.mxu0 0
      %1271 = vmatmul.mubr.bf16.gmra.mrb[0].mxu0 %v1052
      %v1272 = vpop.f32.mrb[0].mxu0
      %v1273 = vadd.f32 0.0, %v1272
      %v1274 = vpop.f32.mrb[0].mxu0
      %v1275 = vpop.f32.mrb[0].mxu0
      %v1276 = vadd.f32 0.0, %v1275
      %v1277 = vpop.f32.mrb[0].mxu0
      %1278 = vdwg.mxu0
      %v1279 = vadd.f32 %v798, %v1153
      %v1280 = vadd.f32 %v801, %v1156
      %v1281 = vadd.f32 %v806, %v1161
      %v1282 = vadd.f32 %v809, %v1164
      %v1283 = vadd.f32 %v814, %v1169
      %v1284 = vadd.f32 %v817, %v1172
      %v1285 = vadd.f32 %v822, %v1177
      %v1286 = vadd.f32 %v825, %v1180
      %v1287 = vadd.f32 %v830, %v1185
      %v1288 = vadd.f32 %v833, %v1188
      %v1289 = vadd.f32 %v838, %v1193
      %v1290 = vadd.f32 %v841, %v1196
      %v1291 = vadd.f32 %v846, %v1201
      %v1292 = vadd.f32 %v849, %v1204
      %v1293 = vadd.f32 %v854, %v1209
      %v1294 = vadd.f32 %v857, %v1212
      %v1295 = vadd.f32 %v862, %v1217
      %v1296 = vadd.f32 %v865, %v1220
      %v1297 = vadd.f32 %v870, %v1225
      %v1298 = vadd.f32 %v873, %v1228
      %v1299 = vadd.f32 %v878, %v1233
      %v1300 = vadd.f32 %v881, %v1236
      %v1301 = vadd.f32 %v886, %v1241
      %v1302 = vadd.f32 %v889, %v1244
      %v1303 = vadd.f32 %v894, %v1249
      %v1304 = vadd.f32 %v897, %v1252
      %v1305 = vadd.f32 %v902, %v1257
      %v1306 = vadd.f32 %v905, %v1260
      %v1307 = vadd.f32 %v910, %v1265
      %v1308 = vadd.f32 %v913, %v1268
      %v1309 = vadd.f32 %v918, %v1273
      %v1310 = vadd.f32 %v921, %v1276
      %v1311 = vpack.c.bf16 %v275, %v274
      %s1312 = scalar_lea.vmem %s1, 192
      %v1313 = vld [vmem:[%s1312] sm:$0xf]
      %v1314 = vld [vmem:[%s1312 + $0x4] sm:$0xf]
      %v1315 = vld [vmem:[%s1312 + $0x8] sm:$0xf]
      %v1316 = vld [vmem:[%s1312 + $0xc] sm:$0xf]
      %v1317 = vld [vmem:[%s1312 + $0x10] sm:$0xf]
      %v1318 = vld [vmem:[%s1312 + $0x14] sm:$0xf]
      %v1319 = vld [vmem:[%s1312 + $0x18] sm:$0xf]
      %v1320 = vld [vmem:[%s1312 + $0x1c] sm:$0xf]
      %v1321 = vld [vmem:[%s1312 + $0x20] sm:$0xf]
      %v1322 = vld [vmem:[%s1312 + $0x24] sm:$0xf]
      %v1323 = vld [vmem:[%s1312 + $0x28] sm:$0xf]
      %v1324 = vld [vmem:[%s1312 + $0x2c] sm:$0xf]
      %v1325 = vld [vmem:[%s1312 + $0x30] sm:$0xf]
      %v1326 = vld [vmem:[%s1312 + $0x34] sm:$0xf]
      %v1327 = vld [vmem:[%s1312 + $0x38] sm:$0xf]
      %v1328 = vld [vmem:[%s1312 + $0x3c] sm:$0xf]
      %v1345 = vunpack.c.l.b16 %v1313
      %v1346 = vunpack.c.l.b16 %v1314
      %v1347 = vunpack.c.l.b16 %v1315
      %v1348 = vunpack.c.l.b16 %v1316
      %v1349 = vunpack.c.l.b16 %v1317
      %v1350 = vunpack.c.l.b16 %v1318
      %v1351 = vunpack.c.l.b16 %v1319
      %v1352 = vunpack.c.l.b16 %v1320
      %v1353 = vunpack.c.l.b16 %v1321
      %v1354 = vunpack.c.l.b16 %v1322
      %v1355 = vunpack.c.l.b16 %v1323
      %v1356 = vunpack.c.l.b16 %v1324
      %v1357 = vunpack.c.l.b16 %v1325
      %v1358 = vunpack.c.l.b16 %v1326
      %v1359 = vunpack.c.l.b16 %v1327
      %v1360 = vunpack.c.l.b16 %v1328
      %v1361 = vpack.c.b16 %v1346, %v1345
      %v1362 = vpack.c.b16 %v1348, %v1347
      %v1363 = vpack.c.b16 %v1350, %v1349
      %v1364 = vpack.c.b16 %v1352, %v1351
      %v1365 = vpack.c.b16 %v1354, %v1353
      %v1366 = vpack.c.b16 %v1356, %v1355
      %v1367 = vpack.c.b16 %v1358, %v1357
      %v1368 = vpack.c.b16 %v1360, %v1359
      %1377 = vmatprep.subr.bf16.mxu0 0
      %1378 = vmatpush1.bf16.msra.mxu0 %v1361
      %1379 = vmatprep.subr.bf16.mxu0 0
      %1380 = vmatpush1.bf16.msra.mxu0 %v1362
      %1381 = vmatprep.subr.bf16.mxu0 0
      %1382 = vmatpush1.bf16.msra.mxu0 %v1363
      %1383 = vmatprep.subr.bf16.mxu0 0
      %1384 = vmatpush1.bf16.msra.mxu0 %v1364
      %1385 = vmatprep.subr.bf16.mxu0 0
      %1386 = vmatpush1.bf16.msra.mxu0 %v1365
      %1387 = vmatprep.subr.bf16.mxu0 0
      %1388 = vmatpush1.bf16.msra.mxu0 %v1366
      %1389 = vmatprep.subr.bf16.mxu0 0
      %1390 = vmatpush1.bf16.msra.mxu0 %v1367
      %1391 = vmatprep.subr.bf16.mxu0 0
      %1392 = vmatpush1.bf16.msra.mxu0 %v1368
      %1393 = vmatprep.subr.bf16.mxu0 0
      %1394 = vmatpush1.bf16.msra.mxu0 0
      %1395 = vmatprep.subr.bf16.mxu0 0
      %1396 = vmatpush1.bf16.msra.mxu0 0
      %1397 = vmatprep.subr.bf16.mxu0 0
      %1398 = vmatpush1.bf16.msra.mxu0 0
      %1399 = vmatprep.subr.bf16.mxu0 0
      %1400 = vmatpush1.bf16.msra.mxu0 0
      %1401 = vmatprep.subr.bf16.mxu0 0
      %1402 = vmatpush1.bf16.msra.mxu0 0
      %1403 = vmatprep.subr.bf16.mxu0 0
      %1404 = vmatpush1.bf16.msra.mxu0 0
      %1405 = vmatprep.subr.bf16.mxu0 0
      %1406 = vmatpush1.bf16.msra.mxu0 0
      %1407 = vmatprep.subr.bf16.mxu0 0
      %1408 = vmatpush1.bf16.msra.mxu0 0
      %1409 = vmatprep.mubr.bf16.mxu0 0
      %1410 = vmatmul.mubr.bf16.gmra.mrb[0].mxu0 %v281
      %v1411 = vpop.f32.mrb[0].mxu0
      %v1412 = vadd.f32 0.0, %v1411
      %v1413 = vpop.f32.mrb[0].mxu0
      %v1414 = vpop.f32.mrb[0].mxu0
      %v1415 = vadd.f32 0.0, %v1414
      %v1416 = vpop.f32.mrb[0].mxu0
      %1417 = vmatprep.mubr.bf16.mxu0 0
      %1418 = vmatmul.mubr.bf16.gmra.mrb[0].mxu0 %v282
      %v1419 = vpop.f32.mrb[0].mxu0
      %v1420 = vadd.f32 0.0, %v1419
      %v1421 = vpop.f32.mrb[0].mxu0
      %v1422 = vpop.f32.mrb[0].mxu0
      %v1423 = vadd.f32 0.0, %v1422
      %v1424 = vpop.f32.mrb[0].mxu0
      %1425 = vmatprep.mubr.bf16.mxu0 0
      %1426 = vmatmul.mubr.bf16.gmra.mrb[0].mxu0 %v283
      %v1427 = vpop.f32.mrb[0].mxu0
      %v1428 = vadd.f32 0.0, %v1427
      %v1429 = vpop.f32.mrb[0].mxu0
      %v1430 = vpop.f32.mrb[0].mxu0
      %v1431 = vadd.f32 0.0, %v1430
      %v1432 = vpop.f32.mrb[0].mxu0
      %1433 = vmatprep.mubr.bf16.mxu0 0
      %1434 = vmatmul.mubr.bf16.gmra.mrb[0].mxu0 %v284
      %v1435 = vpop.f32.mrb[0].mxu0
      %v1436 = vadd.f32 0.0, %v1435
      %v1437 = vpop.f32.mrb[0].mxu0
      %v1438 = vpop.f32.mrb[0].mxu0
      %v1439 = vadd.f32 0.0, %v1438
      %v1440 = vpop.f32.mrb[0].mxu0
      %1441 = vmatprep.mubr.bf16.mxu0 0
      %1442 = vmatmul.mubr.bf16.gmra.mrb[0].mxu0 %v285
      %v1443 = vpop.f32.mrb[0].mxu0
      %v1444 = vadd.f32 0.0, %v1443
      %v1445 = vpop.f32.mrb[0].mxu0
      %v1446 = vpop.f32.mrb[0].mxu0
      %v1447 = vadd.f32 0.0, %v1446
      %v1448 = vpop.f32.mrb[0].mxu0
      %1449 = vmatprep.mubr.bf16.mxu0 0
      %1450 = vmatmul.mubr.bf16.gmra.mrb[0].mxu0 %v286
      %v1451 = vpop.f32.mrb[0].mxu0
      %v1452 = vadd.f32 0.0, %v1451
      %v1453 = vpop.f32.mrb[0].mxu0
      %v1454 = vpop.f32.mrb[0].mxu0
      %v1455 = vadd.f32 0.0, %v1454
      %v1456 = vpop.f32.mrb[0].mxu0
      %1457 = vmatprep.mubr.bf16.mxu0 0
      %1458 = vmatmul.mubr.bf16.gmra.mrb[0].mxu0 %v287
      %v1459 = vpop.f32.mrb[0].mxu0
      %v1460 = vadd.f32 0.0, %v1459
      %v1461 = vpop.f32.mrb[0].mxu0
      %v1462 = vpop.f32.mrb[0].mxu0
      %v1463 = vadd.f32 0.0, %v1462
      %v1464 = vpop.f32.mrb[0].mxu0
      %1465 = vmatprep.mubr.bf16.mxu0 0
      %1466 = vmatmul.mubr.bf16.gmra.mrb[0].mxu0 %v288
      %v1467 = vpop.f32.mrb[0].mxu0
      %v1468 = vadd.f32 0.0, %v1467
      %v1469 = vpop.f32.mrb[0].mxu0
      %v1470 = vpop.f32.mrb[0].mxu0
      %v1471 = vadd.f32 0.0, %v1470
      %v1472 = vpop.f32.mrb[0].mxu0
      %1473 = vmatprep.mubr.bf16.mxu0 0
      %1474 = vmatmul.mubr.bf16.gmra.mrb[0].mxu0 %v289
      %v1475 = vpop.f32.mrb[0].mxu0
      %v1476 = vadd.f32 0.0, %v1475
      %v1477 = vpop.f32.mrb[0].mxu0
      %v1478 = vpop.f32.mrb[0].mxu0
      %v1479 = vadd.f32 0.0, %v1478
      %v1480 = vpop.f32.mrb[0].mxu0
      %1481 = vmatprep.mubr.bf16.mxu0 0
      %1482 = vmatmul.mubr.bf16.gmra.mrb[0].mxu0 %v290
      %v1483 = vpop.f32.mrb[0].mxu0
      %v1484 = vadd.f32 0.0, %v1483
      %v1485 = vpop.f32.mrb[0].mxu0
      %v1486 = vpop.f32.mrb[0].mxu0
      %v1487 = vadd.f32 0.0, %v1486
      %v1488 = vpop.f32.mrb[0].mxu0
      %1489 = vmatprep.mubr.bf16.mxu0 0
      %1490 = vmatmul.mubr.bf16.gmra.mrb[0].mxu0 %v291
      %v1491 = vpop.f32.mrb[0].mxu0
      %v1492 = vadd.f32 0.0, %v1491
      %v1493 = vpop.f32.mrb[0].mxu0
      %v1494 = vpop.f32.mrb[0].mxu0
      %v1495 = vadd.f32 0.0, %v1494
      %v1496 = vpop.f32.mrb[0].mxu0
      %1497 = vmatprep.mubr.bf16.mxu0 0
      %1498 = vmatmul.mubr.bf16.gmra.mrb[0].mxu0 %v292
      %v1499 = vpop.f32.mrb[0].mxu0
      %v1500 = vadd.f32 0.0, %v1499
      %v1501 = vpop.f32.mrb[0].mxu0
      %v1502 = vpop.f32.mrb[0].mxu0
      %v1503 = vadd.f32 0.0, %v1502
      %v1504 = vpop.f32.mrb[0].mxu0
      %1505 = vmatprep.mubr.bf16.mxu0 0
      %1506 = vmatmul.mubr.bf16.gmra.mrb[0].mxu0 %v293
      %v1507 = vpop.f32.mrb[0].mxu0
      %v1508 = vadd.f32 0.0, %v1507
      %v1509 = vpop.f32.mrb[0].mxu0
      %v1510 = vpop.f32.mrb[0].mxu0
      %v1511 = vadd.f32 0.0, %v1510
      %v1512 = vpop.f32.mrb[0].mxu0
      %1513 = vmatprep.mubr.bf16.mxu0 0
      %1514 = vmatmul.mubr.bf16.gmra.mrb[0].mxu0 %v294
      %v1515 = vpop.f32.mrb[0].mxu0
      %v1516 = vadd.f32 0.0, %v1515
      %v1517 = vpop.f32.mrb[0].mxu0
      %v1518 = vpop.f32.mrb[0].mxu0
      %v1519 = vadd.f32 0.0, %v1518
      %v1520 = vpop.f32.mrb[0].mxu0
      %1521 = vmatprep.mubr.bf16.mxu0 0
      %1522 = vmatmul.mubr.bf16.gmra.mrb[0].mxu0 %v295
      %v1523 = vpop.f32.mrb[0].mxu0
      %v1524 = vadd.f32 0.0, %v1523
      %v1525 = vpop.f32.mrb[0].mxu0
      %v1526 = vpop.f32.mrb[0].mxu0
      %v1527 = vadd.f32 0.0, %v1526
      %v1528 = vpop.f32.mrb[0].mxu0
      %1529 = vmatprep.mubr.bf16.mxu0 0
      %1530 = vmatmul.mubr.bf16.gmra.mrb[0].mxu0 %v1311
      %v1531 = vpop.f32.mrb[0].mxu0
      %v1532 = vadd.f32 0.0, %v1531
      %v1533 = vpop.f32.mrb[0].mxu0
      %v1534 = vpop.f32.mrb[0].mxu0
      %v1535 = vadd.f32 0.0, %v1534
      %v1536 = vpop.f32.mrb[0].mxu0
      %1537 = vdwg.mxu0
      %v1538 = vadd.f32 %v1279, %v1412
      %v1539 = vadd.f32 %v1280, %v1415
      %v1540 = vadd.f32 %v1281, %v1420
      %v1541 = vadd.f32 %v1282, %v1423
      %v1542 = vadd.f32 %v1283, %v1428
      %v1543 = vadd.f32 %v1284, %v1431
      %v1544 = vadd.f32 %v1285, %v1436
      %v1545 = vadd.f32 %v1286, %v1439
      %v1546 = vadd.f32 %v1287, %v1444
      %v1547 = vadd.f32 %v1288, %v1447
      %v1548 = vadd.f32 %v1289, %v1452
      %v1549 = vadd.f32 %v1290, %v1455
      %v1550 = vadd.f32 %v1291, %v1460
      %v1551 = vadd.f32 %v1292, %v1463
      %v1552 = vadd.f32 %v1293, %v1468
      %v1553 = vadd.f32 %v1294, %v1471
      %v1554 = vadd.f32 %v1295, %v1476
      %v1555 = vadd.f32 %v1296, %v1479
      %v1556 = vadd.f32 %v1297, %v1484
      %v1557 = vadd.f32 %v1298, %v1487
      %v1558 = vadd.f32 %v1299, %v1492
      %v1559 = vadd.f32 %v1300, %v1495
      %v1560 = vadd.f32 %v1301, %v1500
      %v1561 = vadd.f32 %v1302, %v1503
      %v1562 = vadd.f32 %v1303, %v1508
      %v1563 = vadd.f32 %v1304, %v1511
      %v1564 = vadd.f32 %v1305, %v1516
      %v1565 = vadd.f32 %v1306, %v1519
      %v1566 = vadd.f32 %v1307, %v1524
      %v1567 = vadd.f32 %v1308, %v1527
      %v1568 = vadd.f32 %v1309, %v1532
      %v1569 = vadd.f32 %v1310, %v1535
      %v1573 = vrot.slane %v274, 1
      %v1574 = vrot.slane %v275, 1
      %v1575 = vsel %vm360, %v1573, %v1574
      %v1576 = vrot.slane %v276, 1
      %v1577 = vsel %vm360, %v1574, %v1576
      %v1580 = vpack.c.bf16 %v1577, %v1575
      %s1581 = scalar_lea.vmem %s1, 256
      %v1582 = vld [vmem:[%s1581] sm:$0xf]
      %v1583 = vld [vmem:[%s1581 + $0x4] sm:$0xf]
      %v1584 = vld [vmem:[%s1581 + $0x8] sm:$0xf]
      %v1585 = vld [vmem:[%s1581 + $0xc] sm:$0xf]
      %v1586 = vld [vmem:[%s1581 + $0x10] sm:$0xf]
      %v1587 = vld [vmem:[%s1581 + $0x14] sm:$0xf]
      %v1588 = vld [vmem:[%s1581 + $0x18] sm:$0xf]
      %v1589 = vld [vmem:[%s1581 + $0x1c] sm:$0xf]
      %v1590 = vld [vmem:[%s1581 + $0x20] sm:$0xf]
      %v1591 = vld [vmem:[%s1581 + $0x24] sm:$0xf]
      %v1592 = vld [vmem:[%s1581 + $0x28] sm:$0xf]
      %v1593 = vld [vmem:[%s1581 + $0x2c] sm:$0xf]
      %v1594 = vld [vmem:[%s1581 + $0x30] sm:$0xf]
      %v1595 = vld [vmem:[%s1581 + $0x34] sm:$0xf]
      %v1596 = vld [vmem:[%s1581 + $0x38] sm:$0xf]
      %v1597 = vld [vmem:[%s1581 + $0x3c] sm:$0xf]
      %v1614 = vunpack.c.l.b16 %v1582
      %v1615 = vunpack.c.l.b16 %v1583
      %v1616 = vunpack.c.l.b16 %v1584
      %v1617 = vunpack.c.l.b16 %v1585
      %v1618 = vunpack.c.l.b16 %v1586
      %v1619 = vunpack.c.l.b16 %v1587
      %v1620 = vunpack.c.l.b16 %v1588
      %v1621 = vunpack.c.l.b16 %v1589
      %v1622 = vunpack.c.l.b16 %v1590
      %v1623 = vunpack.c.l.b16 %v1591
      %v1624 = vunpack.c.l.b16 %v1592
      %v1625 = vunpack.c.l.b16 %v1593
      %v1626 = vunpack.c.l.b16 %v1594
      %v1627 = vunpack.c.l.b16 %v1595
      %v1628 = vunpack.c.l.b16 %v1596
      %v1629 = vunpack.c.l.b16 %v1597
      %v1630 = vpack.c.b16 %v1615, %v1614
      %v1631 = vpack.c.b16 %v1617, %v1616
      %v1632 = vpack.c.b16 %v1619, %v1618
      %v1633 = vpack.c.b16 %v1621, %v1620
      %v1634 = vpack.c.b16 %v1623, %v1622
      %v1635 = vpack.c.b16 %v1625, %v1624
      %v1636 = vpack.c.b16 %v1627, %v1626
      %v1637 = vpack.c.b16 %v1629, %v1628
      %1646 = vmatprep.subr.bf16.mxu0 0
      %1647 = vmatpush1.bf16.msra.mxu0 %v1630
      %1648 = vmatprep.subr.bf16.mxu0 0
      %1649 = vmatpush1.bf16.msra.mxu0 %v1631
      %1650 = vmatprep.subr.bf16.mxu0 0
      %1651 = vmatpush1.bf16.msra.mxu0 %v1632
      %1652 = vmatprep.subr.bf16.mxu0 0
      %1653 = vmatpush1.bf16.msra.mxu0 %v1633
      %1654 = vmatprep.subr.bf16.mxu0 0
      %1655 = vmatpush1.bf16.msra.mxu0 %v1634
      %1656 = vmatprep.subr.bf16.mxu0 0
      %1657 = vmatpush1.bf16.msra.mxu0 %v1635
      %1658 = vmatprep.subr.bf16.mxu0 0
      %1659 = vmatpush1.bf16.msra.mxu0 %v1636
      %1660 = vmatprep.subr.bf16.mxu0 0
      %1661 = vmatpush1.bf16.msra.mxu0 %v1637
      %1662 = vmatprep.subr.bf16.mxu0 0
      %1663 = vmatpush1.bf16.msra.mxu0 0
      %1664 = vmatprep.subr.bf16.mxu0 0
      %1665 = vmatpush1.bf16.msra.mxu0 0
      %1666 = vmatprep.subr.bf16.mxu0 0
      %1667 = vmatpush1.bf16.msra.mxu0 0
      %1668 = vmatprep.subr.bf16.mxu0 0
      %1669 = vmatpush1.bf16.msra.mxu0 0
      %1670 = vmatprep.subr.bf16.mxu0 0
      %1671 = vmatpush1.bf16.msra.mxu0 0
      %1672 = vmatprep.subr.bf16.mxu0 0
      %1673 = vmatpush1.bf16.msra.mxu0 0
      %1674 = vmatprep.subr.bf16.mxu0 0
      %1675 = vmatpush1.bf16.msra.mxu0 0
      %1676 = vmatprep.subr.bf16.mxu0 0
      %1677 = vmatpush1.bf16.msra.mxu0 0
      %1678 = vmatprep.mubr.bf16.mxu0 0
      %1679 = vmatmul.mubr.bf16.gmra.mrb[0].mxu0 %v474
      %v1680 = vpop.f32.mrb[0].mxu0
      %v1681 = vadd.f32 0.0, %v1680
      %v1682 = vpop.f32.mrb[0].mxu0
      %v1683 = vpop.f32.mrb[0].mxu0
      %v1684 = vadd.f32 0.0, %v1683
      %v1685 = vpop.f32.mrb[0].mxu0
      %1686 = vmatprep.mubr.bf16.mxu0 0
      %1687 = vmatmul.mubr.bf16.gmra.mrb[0].mxu0 %v475
      %v1688 = vpop.f32.mrb[0].mxu0
      %v1689 = vadd.f32 0.0, %v1688
      %v1690 = vpop.f32.mrb[0].mxu0
      %v1691 = vpop.f32.mrb[0].mxu0
      %v1692 = vadd.f32 0.0, %v1691
      %v1693 = vpop.f32.mrb[0].mxu0
      %1694 = vmatprep.mubr.bf16.mxu0 0
      %1695 = vmatmul.mubr.bf16.gmra.mrb[0].mxu0 %v476
      %v1696 = vpop.f32.mrb[0].mxu0
      %v1697 = vadd.f32 0.0, %v1696
      %v1698 = vpop.f32.mrb[0].mxu0
      %v1699 = vpop.f32.mrb[0].mxu0
      %v1700 = vadd.f32 0.0, %v1699
      %v1701 = vpop.f32.mrb[0].mxu0
      %1702 = vmatprep.mubr.bf16.mxu0 0
      %1703 = vmatmul.mubr.bf16.gmra.mrb[0].mxu0 %v477
      %v1704 = vpop.f32.mrb[0].mxu0
      %v1705 = vadd.f32 0.0, %v1704
      %v1706 = vpop.f32.mrb[0].mxu0
      %v1707 = vpop.f32.mrb[0].mxu0
      %v1708 = vadd.f32 0.0, %v1707
      %v1709 = vpop.f32.mrb[0].mxu0
      %1710 = vmatprep.mubr.bf16.mxu0 0
      %1711 = vmatmul.mubr.bf16.gmra.mrb[0].mxu0 %v478
      %v1712 = vpop.f32.mrb[0].mxu0
      %v1713 = vadd.f32 0.0, %v1712
      %v1714 = vpop.f32.mrb[0].mxu0
      %v1715 = vpop.f32.mrb[0].mxu0
      %v1716 = vadd.f32 0.0, %v1715
      %v1717 = vpop.f32.mrb[0].mxu0
      %1718 = vmatprep.mubr.bf16.mxu0 0
      %1719 = vmatmul.mubr.bf16.gmra.mrb[0].mxu0 %v479
      %v1720 = vpop.f32.mrb[0].mxu0
      %v1721 = vadd.f32 0.0, %v1720
      %v1722 = vpop.f32.mrb[0].mxu0
      %v1723 = vpop.f32.mrb[0].mxu0
      %v1724 = vadd.f32 0.0, %v1723
      %v1725 = vpop.f32.mrb[0].mxu0
      %1726 = vmatprep.mubr.bf16.mxu0 0
      %1727 = vmatmul.mubr.bf16.gmra.mrb[0].mxu0 %v480
      %v1728 = vpop.f32.mrb[0].mxu0
      %v1729 = vadd.f32 0.0, %v1728
      %v1730 = vpop.f32.mrb[0].mxu0
      %v1731 = vpop.f32.mrb[0].mxu0
      %v1732 = vadd.f32 0.0, %v1731
      %v1733 = vpop.f32.mrb[0].mxu0
      %1734 = vmatprep.mubr.bf16.mxu0 0
      %1735 = vmatmul.mubr.bf16.gmra.mrb[0].mxu0 %v481
      %v1736 = vpop.f32.mrb[0].mxu0
      %v1737 = vadd.f32 0.0, %v1736
      %v1738 = vpop.f32.mrb[0].mxu0
      %v1739 = vpop.f32.mrb[0].mxu0
      %v1740 = vadd.f32 0.0, %v1739
      %v1741 = vpop.f32.mrb[0].mxu0
      %1742 = vmatprep.mubr.bf16.mxu0 0
      %1743 = vmatmul.mubr.bf16.gmra.mrb[0].mxu0 %v482
      %v1744 = vpop.f32.mrb[0].mxu0
      %v1745 = vadd.f32 0.0, %v1744
      %v1746 = vpop.f32.mrb[0].mxu0
      %v1747 = vpop.f32.mrb[0].mxu0
      %v1748 = vadd.f32 0.0, %v1747
      %v1749 = vpop.f32.mrb[0].mxu0
      %1750 = vmatprep.mubr.bf16.mxu0 0
      %1751 = vmatmul.mubr.bf16.gmra.mrb[0].mxu0 %v483
      %v1752 = vpop.f32.mrb[0].mxu0
      %v1753 = vadd.f32 0.0, %v1752
      %v1754 = vpop.f32.mrb[0].mxu0
      %v1755 = vpop.f32.mrb[0].mxu0
      %v1756 = vadd.f32 0.0, %v1755
      %v1757 = vpop.f32.mrb[0].mxu0
      %1758 = vmatprep.mubr.bf16.mxu0 0
      %1759 = vmatmul.mubr.bf16.gmra.mrb[0].mxu0 %v484
      %v1760 = vpop.f32.mrb[0].mxu0
      %v1761 = vadd.f32 0.0, %v1760
      %v1762 = vpop.f32.mrb[0].mxu0
      %v1763 = vpop.f32.mrb[0].mxu0
      %v1764 = vadd.f32 0.0, %v1763
      %v1765 = vpop.f32.mrb[0].mxu0
      %1766 = vmatprep.mubr.bf16.mxu0 0
      %1767 = vmatmul.mubr.bf16.gmra.mrb[0].mxu0 %v485
      %v1768 = vpop.f32.mrb[0].mxu0
      %v1769 = vadd.f32 0.0, %v1768
      %v1770 = vpop.f32.mrb[0].mxu0
      %v1771 = vpop.f32.mrb[0].mxu0
      %v1772 = vadd.f32 0.0, %v1771
      %v1773 = vpop.f32.mrb[0].mxu0
      %1774 = vmatprep.mubr.bf16.mxu0 0
      %1775 = vmatmul.mubr.bf16.gmra.mrb[0].mxu0 %v486
      %v1776 = vpop.f32.mrb[0].mxu0
      %v1777 = vadd.f32 0.0, %v1776
      %v1778 = vpop.f32.mrb[0].mxu0
      %v1779 = vpop.f32.mrb[0].mxu0
      %v1780 = vadd.f32 0.0, %v1779
      %v1781 = vpop.f32.mrb[0].mxu0
      %1782 = vmatprep.mubr.bf16.mxu0 0
      %1783 = vmatmul.mubr.bf16.gmra.mrb[0].mxu0 %v487
      %v1784 = vpop.f32.mrb[0].mxu0
      %v1785 = vadd.f32 0.0, %v1784
      %v1786 = vpop.f32.mrb[0].mxu0
      %v1787 = vpop.f32.mrb[0].mxu0
      %v1788 = vadd.f32 0.0, %v1787
      %v1789 = vpop.f32.mrb[0].mxu0
      %1790 = vmatprep.mubr.bf16.mxu0 0
      %1791 = vmatmul.mubr.bf16.gmra.mrb[0].mxu0 %v488
      %v1792 = vpop.f32.mrb[0].mxu0
      %v1793 = vadd.f32 0.0, %v1792
      %v1794 = vpop.f32.mrb[0].mxu0
      %v1795 = vpop.f32.mrb[0].mxu0
      %v1796 = vadd.f32 0.0, %v1795
      %v1797 = vpop.f32.mrb[0].mxu0
      %1798 = vmatprep.mubr.bf16.mxu0 0
      %1799 = vmatmul.mubr.bf16.gmra.mrb[0].mxu0 %v1580
      %v1800 = vpop.f32.mrb[0].mxu0
      %v1801 = vadd.f32 0.0, %v1800
      %v1802 = vpop.f32.mrb[0].mxu0
      %v1803 = vpop.f32.mrb[0].mxu0
      %v1804 = vadd.f32 0.0, %v1803
      %v1805 = vpop.f32.mrb[0].mxu0
      %1806 = vdwg.mxu0
      %v1807 = vadd.f32 %v1538, %v1681
      %v1808 = vadd.f32 %v1539, %v1684
      %v1809 = vadd.f32 %v1540, %v1689
      %v1810 = vadd.f32 %v1541, %v1692
      %v1811 = vadd.f32 %v1542, %v1697
      %v1812 = vadd.f32 %v1543, %v1700
      %v1813 = vadd.f32 %v1544, %v1705
      %v1814 = vadd.f32 %v1545, %v1708
      %v1815 = vadd.f32 %v1546, %v1713
      %v1816 = vadd.f32 %v1547, %v1716
      %v1817 = vadd.f32 %v1548, %v1721
      %v1818 = vadd.f32 %v1549, %v1724
      %v1819 = vadd.f32 %v1550, %v1729
      %v1820 = vadd.f32 %v1551, %v1732
      %v1821 = vadd.f32 %v1552, %v1737
      %v1822 = vadd.f32 %v1553, %v1740
      %v1823 = vadd.f32 %v1554, %v1745
      %v1824 = vadd.f32 %v1555, %v1748
      %v1825 = vadd.f32 %v1556, %v1753
      %v1826 = vadd.f32 %v1557, %v1756
      %v1827 = vadd.f32 %v1558, %v1761
      %v1828 = vadd.f32 %v1559, %v1764
      %v1829 = vadd.f32 %v1560, %v1769
      %v1830 = vadd.f32 %v1561, %v1772
      %v1831 = vadd.f32 %v1562, %v1777
      %v1832 = vadd.f32 %v1563, %v1780
      %v1833 = vadd.f32 %v1564, %v1785
      %v1834 = vadd.f32 %v1565, %v1788
      %v1835 = vadd.f32 %v1566, %v1793
      %v1836 = vadd.f32 %v1567, %v1796
      %v1837 = vadd.f32 %v1568, %v1801
      %v1838 = vadd.f32 %v1569, %v1804
      %v1839 = vrot.slane %v274, 2
      %v1840 = vrot.slane %v275, 2
      %v1841 = vsel %vm924, %v1839, %v1840
      %v1842 = vrot.slane %v276, 2
      %v1843 = vsel %vm924, %v1840, %v1842
      %v1846 = vpack.c.bf16 %v1843, %v1841
      %s1847 = scalar_lea.vmem %s1, 320
      %v1848 = vld [vmem:[%s1847] sm:$0xf]
      %v1849 = vld [vmem:[%s1847 + $0x4] sm:$0xf]
      %v1850 = vld [vmem:[%s1847 + $0x8] sm:$0xf]
      %v1851 = vld [vmem:[%s1847 + $0xc] sm:$0xf]
      %v1852 = vld [vmem:[%s1847 + $0x10] sm:$0xf]
      %v1853 = vld [vmem:[%s1847 + $0x14] sm:$0xf]
      %v1854 = vld [vmem:[%s1847 + $0x18] sm:$0xf]
      %v1855 = vld [vmem:[%s1847 + $0x1c] sm:$0xf]
      %v1856 = vld [vmem:[%s1847 + $0x20] sm:$0xf]
      %v1857 = vld [vmem:[%s1847 + $0x24] sm:$0xf]
      %v1858 = vld [vmem:[%s1847 + $0x28] sm:$0xf]
      %v1859 = vld [vmem:[%s1847 + $0x2c] sm:$0xf]
      %v1860 = vld [vmem:[%s1847 + $0x30] sm:$0xf]
      %v1861 = vld [vmem:[%s1847 + $0x34] sm:$0xf]
      %v1862 = vld [vmem:[%s1847 + $0x38] sm:$0xf]
      %v1863 = vld [vmem:[%s1847 + $0x3c] sm:$0xf]
      %v1880 = vunpack.c.l.b16 %v1848
      %v1881 = vunpack.c.l.b16 %v1849
      %v1882 = vunpack.c.l.b16 %v1850
      %v1883 = vunpack.c.l.b16 %v1851
      %v1884 = vunpack.c.l.b16 %v1852
      %v1885 = vunpack.c.l.b16 %v1853
      %v1886 = vunpack.c.l.b16 %v1854
      %v1887 = vunpack.c.l.b16 %v1855
      %v1888 = vunpack.c.l.b16 %v1856
      %v1889 = vunpack.c.l.b16 %v1857
      %v1890 = vunpack.c.l.b16 %v1858
      %v1891 = vunpack.c.l.b16 %v1859
      %v1892 = vunpack.c.l.b16 %v1860
      %v1893 = vunpack.c.l.b16 %v1861
      %v1894 = vunpack.c.l.b16 %v1862
      %v1895 = vunpack.c.l.b16 %v1863
      %v1896 = vpack.c.b16 %v1881, %v1880
      %v1897 = vpack.c.b16 %v1883, %v1882
      %v1898 = vpack.c.b16 %v1885, %v1884
      %v1899 = vpack.c.b16 %v1887, %v1886
      %v1900 = vpack.c.b16 %v1889, %v1888
      %v1901 = vpack.c.b16 %v1891, %v1890
      %v1902 = vpack.c.b16 %v1893, %v1892
      %v1903 = vpack.c.b16 %v1895, %v1894
      %1912 = vmatprep.subr.bf16.mxu0 0
      %1913 = vmatpush1.bf16.msra.mxu0 %v1896
      %1914 = vmatprep.subr.bf16.mxu0 0
      %1915 = vmatpush1.bf16.msra.mxu0 %v1897
      %1916 = vmatprep.subr.bf16.mxu0 0
      %1917 = vmatpush1.bf16.msra.mxu0 %v1898
      %1918 = vmatprep.subr.bf16.mxu0 0
      %1919 = vmatpush1.bf16.msra.mxu0 %v1899
      %1920 = vmatprep.subr.bf16.mxu0 0
      %1921 = vmatpush1.bf16.msra.mxu0 %v1900
      %1922 = vmatprep.subr.bf16.mxu0 0
      %1923 = vmatpush1.bf16.msra.mxu0 %v1901
      %1924 = vmatprep.subr.bf16.mxu0 0
      %1925 = vmatpush1.bf16.msra.mxu0 %v1902
      %1926 = vmatprep.subr.bf16.mxu0 0
      %1927 = vmatpush1.bf16.msra.mxu0 %v1903
      %1928 = vmatprep.subr.bf16.mxu0 0
      %1929 = vmatpush1.bf16.msra.mxu0 0
      %1930 = vmatprep.subr.bf16.mxu0 0
      %1931 = vmatpush1.bf16.msra.mxu0 0
      %1932 = vmatprep.subr.bf16.mxu0 0
      %1933 = vmatpush1.bf16.msra.mxu0 0
      %1934 = vmatprep.subr.bf16.mxu0 0
      %1935 = vmatpush1.bf16.msra.mxu0 0
      %1936 = vmatprep.subr.bf16.mxu0 0
      %1937 = vmatpush1.bf16.msra.mxu0 0
      %1938 = vmatprep.subr.bf16.mxu0 0
      %1939 = vmatpush1.bf16.msra.mxu0 0
      %1940 = vmatprep.subr.bf16.mxu0 0
      %1941 = vmatpush1.bf16.msra.mxu0 0
      %1942 = vmatprep.subr.bf16.mxu0 0
      %1943 = vmatpush1.bf16.msra.mxu0 0
      %1944 = vmatprep.mubr.bf16.mxu0 0
      %1945 = vmatmul.mubr.bf16.gmra.mrb[0].mxu0 %v1038
      %v1946 = vpop.f32.mrb[0].mxu0
      %v1947 = vadd.f32 0.0, %v1946
      %v1948 = vpop.f32.mrb[0].mxu0
      %v1949 = vpop.f32.mrb[0].mxu0
      %v1950 = vadd.f32 0.0, %v1949
      %v1951 = vpop.f32.mrb[0].mxu0
      %1952 = vmatprep.mubr.bf16.mxu0 0
      %1953 = vmatmul.mubr.bf16.gmra.mrb[0].mxu0 %v1039
      %v1954 = vpop.f32.mrb[0].mxu0
      %v1955 = vadd.f32 0.0, %v1954
      %v1956 = vpop.f32.mrb[0].mxu0
      %v1957 = vpop.f32.mrb[0].mxu0
      %v1958 = vadd.f32 0.0, %v1957
      %v1959 = vpop.f32.mrb[0].mxu0
      %1960 = vmatprep.mubr.bf16.mxu0 0
      %1961 = vmatmul.mubr.bf16.gmra.mrb[0].mxu0 %v1040
      %v1962 = vpop.f32.mrb[0].mxu0
      %v1963 = vadd.f32 0.0, %v1962
      %v1964 = vpop.f32.mrb[0].mxu0
      %v1965 = vpop.f32.mrb[0].mxu0
      %v1966 = vadd.f32 0.0, %v1965
      %v1967 = vpop.f32.mrb[0].mxu0
      %1968 = vmatprep.mubr.bf16.mxu0 0
      %1969 = vmatmul.mubr.bf16.gmra.mrb[0].mxu0 %v1041
      %v1970 = vpop.f32.mrb[0].mxu0
      %v1971 = vadd.f32 0.0, %v1970
      %v1972 = vpop.f32.mrb[0].mxu0
      %v1973 = vpop.f32.mrb[0].mxu0
      %v1974 = vadd.f32 0.0, %v1973
      %v1975 = vpop.f32.mrb[0].mxu0
      %1976 = vmatprep.mubr.bf16.mxu0 0
      %1977 = vmatmul.mubr.bf16.gmra.mrb[0].mxu0 %v1042
      %v1978 = vpop.f32.mrb[0].mxu0
      %v1979 = vadd.f32 0.0, %v1978
      %v1980 = vpop.f32.mrb[0].mxu0
      %v1981 = vpop.f32.mrb[0].mxu0
      %v1982 = vadd.f32 0.0, %v1981
      %v1983 = vpop.f32.mrb[0].mxu0
      %1984 = vmatprep.mubr.bf16.mxu0 0
      %1985 = vmatmul.mubr.bf16.gmra.mrb[0].mxu0 %v1043
      %v1986 = vpop.f32.mrb[0].mxu0
      %v1987 = vadd.f32 0.0, %v1986
      %v1988 = vpop.f32.mrb[0].mxu0
      %v1989 = vpop.f32.mrb[0].mxu0
      %v1990 = vadd.f32 0.0, %v1989
      %v1991 = vpop.f32.mrb[0].mxu0
      %1992 = vmatprep.mubr.bf16.mxu0 0
      %1993 = vmatmul.mubr.bf16.gmra.mrb[0].mxu0 %v1044
      %v1994 = vpop.f32.mrb[0].mxu0
      %v1995 = vadd.f32 0.0, %v1994
      %v1996 = vpop.f32.mrb[0].mxu0
      %v1997 = vpop.f32.mrb[0].mxu0
      %v1998 = vadd.f32 0.0, %v1997
      %v1999 = vpop.f32.mrb[0].mxu0
      %2000 = vmatprep.mubr.bf16.mxu0 0
      %2001 = vmatmul.mubr.bf16.gmra.mrb[0].mxu0 %v1045
      %v2002 = vpop.f32.mrb[0].mxu0
      %v2003 = vadd.f32 0.0, %v2002
      %v2004 = vpop.f32.mrb[0].mxu0
      %v2005 = vpop.f32.mrb[0].mxu0
      %v2006 = vadd.f32 0.0, %v2005
      %v2007 = vpop.f32.mrb[0].mxu0
      %2008 = vmatprep.mubr.bf16.mxu0 0
      %2009 = vmatmul.mubr.bf16.gmra.mrb[0].mxu0 %v1046
      %v2010 = vpop.f32.mrb[0].mxu0
      %v2011 = vadd.f32 0.0, %v2010
      %v2012 = vpop.f32.mrb[0].mxu0
      %v2013 = vpop.f32.mrb[0].mxu0
      %v2014 = vadd.f32 0.0, %v2013
      %v2015 = vpop.f32.mrb[0].mxu0
      %2016 = vmatprep.mubr.bf16.mxu0 0
      %2017 = vmatmul.mubr.bf16.gmra.mrb[0].mxu0 %v1047
      %v2018 = vpop.f32.mrb[0].mxu0
      %v2019 = vadd.f32 0.0, %v2018
      %v2020 = vpop.f32.mrb[0].mxu0
      %v2021 = vpop.f32.mrb[0].mxu0
      %v2022 = vadd.f32 0.0, %v2021
      %v2023 = vpop.f32.mrb[0].mxu0
      %2024 = vmatprep.mubr.bf16.mxu0 0
      %2025 = vmatmul.mubr.bf16.gmra.mrb[0].mxu0 %v1048
      %v2026 = vpop.f32.mrb[0].mxu0
      %v2027 = vadd.f32 0.0, %v2026
      %v2028 = vpop.f32.mrb[0].mxu0
      %v2029 = vpop.f32.mrb[0].mxu0
      %v2030 = vadd.f32 0.0, %v2029
      %v2031 = vpop.f32.mrb[0].mxu0
      %2032 = vmatprep.mubr.bf16.mxu0 0
      %2033 = vmatmul.mubr.bf16.gmra.mrb[0].mxu0 %v1049
      %v2034 = vpop.f32.mrb[0].mxu0
      %v2035 = vadd.f32 0.0, %v2034
      %v2036 = vpop.f32.mrb[0].mxu0
      %v2037 = vpop.f32.mrb[0].mxu0
      %v2038 = vadd.f32 0.0, %v2037
      %v2039 = vpop.f32.mrb[0].mxu0
      %2040 = vmatprep.mubr.bf16.mxu0 0
      %2041 = vmatmul.mubr.bf16.gmra.mrb[0].mxu0 %v1050
      %v2042 = vpop.f32.mrb[0].mxu0
      %v2043 = vadd.f32 0.0, %v2042
      %v2044 = vpop.f32.mrb[0].mxu0
      %v2045 = vpop.f32.mrb[0].mxu0
      %v2046 = vadd.f32 0.0, %v2045
      %v2047 = vpop.f32.mrb[0].mxu0
      %2048 = vmatprep.mubr.bf16.mxu0 0
      %2049 = vmatmul.mubr.bf16.gmra.mrb[0].mxu0 %v1051
      %v2050 = vpop.f32.mrb[0].mxu0
      %v2051 = vadd.f32 0.0, %v2050
      %v2052 = vpop.f32.mrb[0].mxu0
      %v2053 = vpop.f32.mrb[0].mxu0
      %v2054 = vadd.f32 0.0, %v2053
      %v2055 = vpop.f32.mrb[0].mxu0
      %2056 = vmatprep.mubr.bf16.mxu0 0
      %2057 = vmatmul.mubr.bf16.gmra.mrb[0].mxu0 %v1052
      %v2058 = vpop.f32.mrb[0].mxu0
      %v2059 = vadd.f32 0.0, %v2058
      %v2060 = vpop.f32.mrb[0].mxu0
      %v2061 = vpop.f32.mrb[0].mxu0
      %v2062 = vadd.f32 0.0, %v2061
      %v2063 = vpop.f32.mrb[0].mxu0
      %2064 = vmatprep.mubr.bf16.mxu0 0
      %2065 = vmatmul.mubr.bf16.gmra.mrb[0].mxu0 %v1846
      %v2066 = vpop.f32.mrb[0].mxu0
      %v2067 = vadd.f32 0.0, %v2066
      %v2068 = vpop.f32.mrb[0].mxu0
      %v2069 = vpop.f32.mrb[0].mxu0
      %v2070 = vadd.f32 0.0, %v2069
      %v2071 = vpop.f32.mrb[0].mxu0
      %2072 = vdwg.mxu0
      %v2073 = vadd.f32 %v1807, %v1947
      %v2074 = vadd.f32 %v1808, %v1950
      %v2075 = vadd.f32 %v1809, %v1955
      %v2076 = vadd.f32 %v1810, %v1958
      %v2077 = vadd.f32 %v1811, %v1963
      %v2078 = vadd.f32 %v1812, %v1966
      %v2079 = vadd.f32 %v1813, %v1971
      %v2080 = vadd.f32 %v1814, %v1974
      %v2081 = vadd.f32 %v1815, %v1979
      %v2082 = vadd.f32 %v1816, %v1982
      %v2083 = vadd.f32 %v1817, %v1987
      %v2084 = vadd.f32 %v1818, %v1990
      %v2085 = vadd.f32 %v1819, %v1995
      %v2086 = vadd.f32 %v1820, %v1998
      %v2087 = vadd.f32 %v1821, %v2003
      %v2088 = vadd.f32 %v1822, %v2006
      %v2089 = vadd.f32 %v1823, %v2011
      %v2090 = vadd.f32 %v1824, %v2014
      %v2091 = vadd.f32 %v1825, %v2019
      %v2092 = vadd.f32 %v1826, %v2022
      %v2093 = vadd.f32 %v1827, %v2027
      %v2094 = vadd.f32 %v1828, %v2030
      %v2095 = vadd.f32 %v1829, %v2035
      %v2096 = vadd.f32 %v1830, %v2038
      %v2097 = vadd.f32 %v1831, %v2043
      %v2098 = vadd.f32 %v1832, %v2046
      %v2099 = vadd.f32 %v1833, %v2051
      %v2100 = vadd.f32 %v1834, %v2054
      %v2101 = vadd.f32 %v1835, %v2059
      %v2102 = vadd.f32 %v1836, %v2062
      %v2103 = vadd.f32 %v1837, %v2067
      %v2104 = vadd.f32 %v1838, %v2070
      %v2105 = vpack.c.bf16 %v278, %v277
      %s2106 = scalar_lea.vmem %s1, 384
      %v2107 = vld [vmem:[%s2106] sm:$0xf]
      %v2108 = vld [vmem:[%s2106 + $0x4] sm:$0xf]
      %v2109 = vld [vmem:[%s2106 + $0x8] sm:$0xf]
      %v2110 = vld [vmem:[%s2106 + $0xc] sm:$0xf]
      %v2111 = vld [vmem:[%s2106 + $0x10] sm:$0xf]
      %v2112 = vld [vmem:[%s2106 + $0x14] sm:$0xf]
      %v2113 = vld [vmem:[%s2106 + $0x18] sm:$0xf]
      %v2114 = vld [vmem:[%s2106 + $0x1c] sm:$0xf]
      %v2115 = vld [vmem:[%s2106 + $0x20] sm:$0xf]
      %v2116 = vld [vmem:[%s2106 + $0x24] sm:$0xf]
      %v2117 = vld [vmem:[%s2106 + $0x28] sm:$0xf]
      %v2118 = vld [vmem:[%s2106 + $0x2c] sm:$0xf]
      %v2119 = vld [vmem:[%s2106 + $0x30] sm:$0xf]
      %v2120 = vld [vmem:[%s2106 + $0x34] sm:$0xf]
      %v2121 = vld [vmem:[%s2106 + $0x38] sm:$0xf]
      %v2122 = vld [vmem:[%s2106 + $0x3c] sm:$0xf]
      %v2139 = vunpack.c.l.b16 %v2107
      %v2140 = vunpack.c.l.b16 %v2108
      %v2141 = vunpack.c.l.b16 %v2109
      %v2142 = vunpack.c.l.b16 %v2110
      %v2143 = vunpack.c.l.b16 %v2111
      %v2144 = vunpack.c.l.b16 %v2112
      %v2145 = vunpack.c.l.b16 %v2113
      %v2146 = vunpack.c.l.b16 %v2114
      %v2147 = vunpack.c.l.b16 %v2115
      %v2148 = vunpack.c.l.b16 %v2116
      %v2149 = vunpack.c.l.b16 %v2117
      %v2150 = vunpack.c.l.b16 %v2118
      %v2151 = vunpack.c.l.b16 %v2119
      %v2152 = vunpack.c.l.b16 %v2120
      %v2153 = vunpack.c.l.b16 %v2121
      %v2154 = vunpack.c.l.b16 %v2122
      %v2155 = vpack.c.b16 %v2140, %v2139
      %v2156 = vpack.c.b16 %v2142, %v2141
      %v2157 = vpack.c.b16 %v2144, %v2143
      %v2158 = vpack.c.b16 %v2146, %v2145
      %v2159 = vpack.c.b16 %v2148, %v2147
      %v2160 = vpack.c.b16 %v2150, %v2149
      %v2161 = vpack.c.b16 %v2152, %v2151
      %v2162 = vpack.c.b16 %v2154, %v2153
      %2171 = vmatprep.subr.bf16.mxu0 0
      %2172 = vmatpush1.bf16.msra.mxu0 %v2155
      %2173 = vmatprep.subr.bf16.mxu0 0
      %2174 = vmatpush1.bf16.msra.mxu0 %v2156
      %2175 = vmatprep.subr.bf16.mxu0 0
      %2176 = vmatpush1.bf16.msra.mxu0 %v2157
      %2177 = vmatprep.subr.bf16.mxu0 0
      %2178 = vmatpush1.bf16.msra.mxu0 %v2158
      %2179 = vmatprep.subr.bf16.mxu0 0
      %2180 = vmatpush1.bf16.msra.mxu0 %v2159
      %2181 = vmatprep.subr.bf16.mxu0 0
      %2182 = vmatpush1.bf16.msra.mxu0 %v2160
      %2183 = vmatprep.subr.bf16.mxu0 0
      %2184 = vmatpush1.bf16.msra.mxu0 %v2161
      %2185 = vmatprep.subr.bf16.mxu0 0
      %2186 = vmatpush1.bf16.msra.mxu0 %v2162
      %2187 = vmatprep.subr.bf16.mxu0 0
      %2188 = vmatpush1.bf16.msra.mxu0 0
      %2189 = vmatprep.subr.bf16.mxu0 0
      %2190 = vmatpush1.bf16.msra.mxu0 0
      %2191 = vmatprep.subr.bf16.mxu0 0
      %2192 = vmatpush1.bf16.msra.mxu0 0
      %2193 = vmatprep.subr.bf16.mxu0 0
      %2194 = vmatpush1.bf16.msra.mxu0 0
      %2195 = vmatprep.subr.bf16.mxu0 0
      %2196 = vmatpush1.bf16.msra.mxu0 0
      %2197 = vmatprep.subr.bf16.mxu0 0
      %2198 = vmatpush1.bf16.msra.mxu0 0
      %2199 = vmatprep.subr.bf16.mxu0 0
      %2200 = vmatpush1.bf16.msra.mxu0 0
      %2201 = vmatprep.subr.bf16.mxu0 0
      %2202 = vmatpush1.bf16.msra.mxu0 0
      %2203 = vmatprep.mubr.bf16.mxu0 0
      %2204 = vmatmul.mubr.bf16.gmra.mrb[0].mxu0 %v282
      %v2205 = vpop.f32.mrb[0].mxu0
      %v2206 = vadd.f32 0.0, %v2205
      %v2207 = vpop.f32.mrb[0].mxu0
      %v2208 = vpop.f32.mrb[0].mxu0
      %v2209 = vadd.f32 0.0, %v2208
      %v2210 = vpop.f32.mrb[0].mxu0
      %2211 = vmatprep.mubr.bf16.mxu0 0
      %2212 = vmatmul.mubr.bf16.gmra.mrb[0].mxu0 %v283
      %v2213 = vpop.f32.mrb[0].mxu0
      %v2214 = vadd.f32 0.0, %v2213
      %v2215 = vpop.f32.mrb[0].mxu0
      %v2216 = vpop.f32.mrb[0].mxu0
      %v2217 = vadd.f32 0.0, %v2216
      %v2218 = vpop.f32.mrb[0].mxu0
      %2219 = vmatprep.mubr.bf16.mxu0 0
      %2220 = vmatmul.mubr.bf16.gmra.mrb[0].mxu0 %v284
      %v2221 = vpop.f32.mrb[0].mxu0
      %v2222 = vadd.f32 0.0, %v2221
      %v2223 = vpop.f32.mrb[0].mxu0
      %v2224 = vpop.f32.mrb[0].mxu0
      %v2225 = vadd.f32 0.0, %v2224
      %v2226 = vpop.f32.mrb[0].mxu0
      %2227 = vmatprep.mubr.bf16.mxu0 0
      %2228 = vmatmul.mubr.bf16.gmra.mrb[0].mxu0 %v285
      %v2229 = vpop.f32.mrb[0].mxu0
      %v2230 = vadd.f32 0.0, %v2229
      %v2231 = vpop.f32.mrb[0].mxu0
      %v2232 = vpop.f32.mrb[0].mxu0
      %v2233 = vadd.f32 0.0, %v2232
      %v2234 = vpop.f32.mrb[0].mxu0
      %2235 = vmatprep.mubr.bf16.mxu0 0
      %2236 = vmatmul.mubr.bf16.gmra.mrb[0].mxu0 %v286
      %v2237 = vpop.f32.mrb[0].mxu0
      %v2238 = vadd.f32 0.0, %v2237
      %v2239 = vpop.f32.mrb[0].mxu0
      %v2240 = vpop.f32.mrb[0].mxu0
      %v2241 = vadd.f32 0.0, %v2240
      %v2242 = vpop.f32.mrb[0].mxu0
      %2243 = vmatprep.mubr.bf16.mxu0 0
      %2244 = vmatmul.mubr.bf16.gmra.mrb[0].mxu0 %v287
      %v2245 = vpop.f32.mrb[0].mxu0
      %v2246 = vadd.f32 0.0, %v2245
      %v2247 = vpop.f32.mrb[0].mxu0
      %v2248 = vpop.f32.mrb[0].mxu0
      %v2249 = vadd.f32 0.0, %v2248
      %v2250 = vpop.f32.mrb[0].mxu0
      %2251 = vmatprep.mubr.bf16.mxu0 0
      %2252 = vmatmul.mubr.bf16.gmra.mrb[0].mxu0 %v288
      %v2253 = vpop.f32.mrb[0].mxu0
      %v2254 = vadd.f32 0.0, %v2253
      %v2255 = vpop.f32.mrb[0].mxu0
      %v2256 = vpop.f32.mrb[0].mxu0
      %v2257 = vadd.f32 0.0, %v2256
      %v2258 = vpop.f32.mrb[0].mxu0
      %2259 = vmatprep.mubr.bf16.mxu0 0
      %2260 = vmatmul.mubr.bf16.gmra.mrb[0].mxu0 %v289
      %v2261 = vpop.f32.mrb[0].mxu0
      %v2262 = vadd.f32 0.0, %v2261
      %v2263 = vpop.f32.mrb[0].mxu0
      %v2264 = vpop.f32.mrb[0].mxu0
      %v2265 = vadd.f32 0.0, %v2264
      %v2266 = vpop.f32.mrb[0].mxu0
      %2267 = vmatprep.mubr.bf16.mxu0 0
      %2268 = vmatmul.mubr.bf16.gmra.mrb[0].mxu0 %v290
      %v2269 = vpop.f32.mrb[0].mxu0
      %v2270 = vadd.f32 0.0, %v2269
      %v2271 = vpop.f32.mrb[0].mxu0
      %v2272 = vpop.f32.mrb[0].mxu0
      %v2273 = vadd.f32 0.0, %v2272
      %v2274 = vpop.f32.mrb[0].mxu0
      %2275 = vmatprep.mubr.bf16.mxu0 0
      %2276 = vmatmul.mubr.bf16.gmra.mrb[0].mxu0 %v291
      %v2277 = vpop.f32.mrb[0].mxu0
      %v2278 = vadd.f32 0.0, %v2277
      %v2279 = vpop.f32.mrb[0].mxu0
      %v2280 = vpop.f32.mrb[0].mxu0
      %v2281 = vadd.f32 0.0, %v2280
      %v2282 = vpop.f32.mrb[0].mxu0
      %2283 = vmatprep.mubr.bf16.mxu0 0
      %2284 = vmatmul.mubr.bf16.gmra.mrb[0].mxu0 %v292
      %v2285 = vpop.f32.mrb[0].mxu0
      %v2286 = vadd.f32 0.0, %v2285
      %v2287 = vpop.f32.mrb[0].mxu0
      %v2288 = vpop.f32.mrb[0].mxu0
      %v2289 = vadd.f32 0.0, %v2288
      %v2290 = vpop.f32.mrb[0].mxu0
      %2291 = vmatprep.mubr.bf16.mxu0 0
      %2292 = vmatmul.mubr.bf16.gmra.mrb[0].mxu0 %v293
      %v2293 = vpop.f32.mrb[0].mxu0
      %v2294 = vadd.f32 0.0, %v2293
      %v2295 = vpop.f32.mrb[0].mxu0
      %v2296 = vpop.f32.mrb[0].mxu0
      %v2297 = vadd.f32 0.0, %v2296
      %v2298 = vpop.f32.mrb[0].mxu0
      %2299 = vmatprep.mubr.bf16.mxu0 0
      %2300 = vmatmul.mubr.bf16.gmra.mrb[0].mxu0 %v294
      %v2301 = vpop.f32.mrb[0].mxu0
      %v2302 = vadd.f32 0.0, %v2301
      %v2303 = vpop.f32.mrb[0].mxu0
      %v2304 = vpop.f32.mrb[0].mxu0
      %v2305 = vadd.f32 0.0, %v2304
      %v2306 = vpop.f32.mrb[0].mxu0
      %2307 = vmatprep.mubr.bf16.mxu0 0
      %2308 = vmatmul.mubr.bf16.gmra.mrb[0].mxu0 %v295
      %v2309 = vpop.f32.mrb[0].mxu0
      %v2310 = vadd.f32 0.0, %v2309
      %v2311 = vpop.f32.mrb[0].mxu0
      %v2312 = vpop.f32.mrb[0].mxu0
      %v2313 = vadd.f32 0.0, %v2312
      %v2314 = vpop.f32.mrb[0].mxu0
      %2315 = vmatprep.mubr.bf16.mxu0 0
      %2316 = vmatmul.mubr.bf16.gmra.mrb[0].mxu0 %v1311
      %v2317 = vpop.f32.mrb[0].mxu0
      %v2318 = vadd.f32 0.0, %v2317
      %v2319 = vpop.f32.mrb[0].mxu0
      %v2320 = vpop.f32.mrb[0].mxu0
      %v2321 = vadd.f32 0.0, %v2320
      %v2322 = vpop.f32.mrb[0].mxu0
      %2323 = vmatprep.mubr.bf16.mxu0 0
      %2324 = vmatmul.mubr.bf16.gmra.mrb[0].mxu0 %v2105
      %v2325 = vpop.f32.mrb[0].mxu0
      %v2326 = vadd.f32 0.0, %v2325
      %v2327 = vpop.f32.mrb[0].mxu0
      %v2328 = vpop.f32.mrb[0].mxu0
      %v2329 = vadd.f32 0.0, %v2328
      %v2330 = vpop.f32.mrb[0].mxu0
      %2331 = vdwg.mxu0
      %v2332 = vadd.f32 %v2073, %v2206
      %v2333 = vadd.f32 %v2074, %v2209
      %v2334 = vadd.f32 %v2075, %v2214
      %v2335 = vadd.f32 %v2076, %v2217
      %v2336 = vadd.f32 %v2077, %v2222
      %v2337 = vadd.f32 %v2078, %v2225
      %v2338 = vadd.f32 %v2079, %v2230
      %v2339 = vadd.f32 %v2080, %v2233
      %v2340 = vadd.f32 %v2081, %v2238
      %v2341 = vadd.f32 %v2082, %v2241
      %v2342 = vadd.f32 %v2083, %v2246
      %v2343 = vadd.f32 %v2084, %v2249
      %v2344 = vadd.f32 %v2085, %v2254
      %v2345 = vadd.f32 %v2086, %v2257
      %v2346 = vadd.f32 %v2087, %v2262
      %v2347 = vadd.f32 %v2088, %v2265
      %v2348 = vadd.f32 %v2089, %v2270
      %v2349 = vadd.f32 %v2090, %v2273
      %v2350 = vadd.f32 %v2091, %v2278
      %v2351 = vadd.f32 %v2092, %v2281
      %v2352 = vadd.f32 %v2093, %v2286
      %v2353 = vadd.f32 %v2094, %v2289
      %v2354 = vadd.f32 %v2095, %v2294
      %v2355 = vadd.f32 %v2096, %v2297
      %v2356 = vadd.f32 %v2097, %v2302
      %v2357 = vadd.f32 %v2098, %v2305
      %v2358 = vadd.f32 %v2099, %v2310
      %v2359 = vadd.f32 %v2100, %v2313
      %v2360 = vadd.f32 %v2101, %v2318
      %v2361 = vadd.f32 %v2102, %v2321
      %v2362 = vadd.f32 %v2103, %v2326
      %v2363 = vadd.f32 %v2104, %v2329
      %v2367 = vrot.slane %v277, 1
      %v2368 = vrot.slane %v278, 1
      %v2369 = vsel %vm360, %v2367, %v2368
      %v2370 = vrot.slane %v279, 1
      %v2371 = vsel %vm360, %v2368, %v2370
      %v2374 = vpack.c.bf16 %v2371, %v2369
      %s2375 = scalar_lea.vmem %s1, 448
      %v2376 = vld [vmem:[%s2375] sm:$0xf]
      %v2377 = vld [vmem:[%s2375 + $0x4] sm:$0xf]
      %v2378 = vld [vmem:[%s2375 + $0x8] sm:$0xf]
      %v2379 = vld [vmem:[%s2375 + $0xc] sm:$0xf]
      %v2380 = vld [vmem:[%s2375 + $0x10] sm:$0xf]
      %v2381 = vld [vmem:[%s2375 + $0x14] sm:$0xf]
      %v2382 = vld [vmem:[%s2375 + $0x18] sm:$0xf]
      %v2383 = vld [vmem:[%s2375 + $0x1c] sm:$0xf]
      %v2384 = vld [vmem:[%s2375 + $0x20] sm:$0xf]
      %v2385 = vld [vmem:[%s2375 + $0x24] sm:$0xf]
      %v2386 = vld [vmem:[%s2375 + $0x28] sm:$0xf]
      %v2387 = vld [vmem:[%s2375 + $0x2c] sm:$0xf]
      %v2388 = vld [vmem:[%s2375 + $0x30] sm:$0xf]
      %v2389 = vld [vmem:[%s2375 + $0x34] sm:$0xf]
      %v2390 = vld [vmem:[%s2375 + $0x38] sm:$0xf]
      %v2391 = vld [vmem:[%s2375 + $0x3c] sm:$0xf]
      %v2408 = vunpack.c.l.b16 %v2376
      %v2409 = vunpack.c.l.b16 %v2377
      %v2410 = vunpack.c.l.b16 %v2378
      %v2411 = vunpack.c.l.b16 %v2379
      %v2412 = vunpack.c.l.b16 %v2380
      %v2413 = vunpack.c.l.b16 %v2381
      %v2414 = vunpack.c.l.b16 %v2382
      %v2415 = vunpack.c.l.b16 %v2383
      %v2416 = vunpack.c.l.b16 %v2384
      %v2417 = vunpack.c.l.b16 %v2385
      %v2418 = vunpack.c.l.b16 %v2386
      %v2419 = vunpack.c.l.b16 %v2387
      %v2420 = vunpack.c.l.b16 %v2388
      %v2421 = vunpack.c.l.b16 %v2389
      %v2422 = vunpack.c.l.b16 %v2390
      %v2423 = vunpack.c.l.b16 %v2391
      %v2424 = vpack.c.b16 %v2409, %v2408
      %v2425 = vpack.c.b16 %v2411, %v2410
      %v2426 = vpack.c.b16 %v2413, %v2412
      %v2427 = vpack.c.b16 %v2415, %v2414
      %v2428 = vpack.c.b16 %v2417, %v2416
      %v2429 = vpack.c.b16 %v2419, %v2418
      %v2430 = vpack.c.b16 %v2421, %v2420
      %v2431 = vpack.c.b16 %v2423, %v2422
      %2440 = vmatprep.subr.bf16.mxu0 0
      %2441 = vmatpush1.bf16.msra.mxu0 %v2424
      %2442 = vmatprep.subr.bf16.mxu0 0
      %2443 = vmatpush1.bf16.msra.mxu0 %v2425
      %2444 = vmatprep.subr.bf16.mxu0 0
      %2445 = vmatpush1.bf16.msra.mxu0 %v2426
      %2446 = vmatprep.subr.bf16.mxu0 0
      %2447 = vmatpush1.bf16.msra.mxu0 %v2427
      %2448 = vmatprep.subr.bf16.mxu0 0
      %2449 = vmatpush1.bf16.msra.mxu0 %v2428
      %2450 = vmatprep.subr.bf16.mxu0 0
      %2451 = vmatpush1.bf16.msra.mxu0 %v2429
      %2452 = vmatprep.subr.bf16.mxu0 0
      %2453 = vmatpush1.bf16.msra.mxu0 %v2430
      %2454 = vmatprep.subr.bf16.mxu0 0
      %2455 = vmatpush1.bf16.msra.mxu0 %v2431
      %2456 = vmatprep.subr.bf16.mxu0 0
      %2457 = vmatpush1.bf16.msra.mxu0 0
      %2458 = vmatprep.subr.bf16.mxu0 0
      %2459 = vmatpush1.bf16.msra.mxu0 0
      %2460 = vmatprep.subr.bf16.mxu0 0
      %2461 = vmatpush1.bf16.msra.mxu0 0
      %2462 = vmatprep.subr.bf16.mxu0 0
      %2463 = vmatpush1.bf16.msra.mxu0 0
      %2464 = vmatprep.subr.bf16.mxu0 0
      %2465 = vmatpush1.bf16.msra.mxu0 0
      %2466 = vmatprep.subr.bf16.mxu0 0
      %2467 = vmatpush1.bf16.msra.mxu0 0
      %2468 = vmatprep.subr.bf16.mxu0 0
      %2469 = vmatpush1.bf16.msra.mxu0 0
      %2470 = vmatprep.subr.bf16.mxu0 0
      %2471 = vmatpush1.bf16.msra.mxu0 0
      %2472 = vmatprep.mubr.bf16.mxu0 0
      %2473 = vmatmul.mubr.bf16.gmra.mrb[0].mxu0 %v475
      %v2474 = vpop.f32.mrb[0].mxu0
      %v2475 = vadd.f32 0.0, %v2474
      %v2476 = vpop.f32.mrb[0].mxu0
      %v2477 = vpop.f32.mrb[0].mxu0
      %v2478 = vadd.f32 0.0, %v2477
      %v2479 = vpop.f32.mrb[0].mxu0
      %2480 = vmatprep.mubr.bf16.mxu0 0
      %2481 = vmatmul.mubr.bf16.gmra.mrb[0].mxu0 %v476
      %v2482 = vpop.f32.mrb[0].mxu0
      %v2483 = vadd.f32 0.0, %v2482
      %v2484 = vpop.f32.mrb[0].mxu0
      %v2485 = vpop.f32.mrb[0].mxu0
      %v2486 = vadd.f32 0.0, %v2485
      %v2487 = vpop.f32.mrb[0].mxu0
      %2488 = vmatprep.mubr.bf16.mxu0 0
      %2489 = vmatmul.mubr.bf16.gmra.mrb[0].mxu0 %v477
      %v2490 = vpop.f32.mrb[0].mxu0
      %v2491 = vadd.f32 0.0, %v2490
      %v2492 = vpop.f32.mrb[0].mxu0
      %v2493 = vpop.f32.mrb[0].mxu0
      %v2494 = vadd.f32 0.0, %v2493
      %v2495 = vpop.f32.mrb[0].mxu0
      %2496 = vmatprep.mubr.bf16.mxu0 0
      %2497 = vmatmul.mubr.bf16.gmra.mrb[0].mxu0 %v478
      %v2498 = vpop.f32.mrb[0].mxu0
      %v2499 = vadd.f32 0.0, %v2498
      %v2500 = vpop.f32.mrb[0].mxu0
      %v2501 = vpop.f32.mrb[0].mxu0
      %v2502 = vadd.f32 0.0, %v2501
      %v2503 = vpop.f32.mrb[0].mxu0
      %2504 = vmatprep.mubr.bf16.mxu0 0
      %2505 = vmatmul.mubr.bf16.gmra.mrb[0].mxu0 %v479
      %v2506 = vpop.f32.mrb[0].mxu0
      %v2507 = vadd.f32 0.0, %v2506
      %v2508 = vpop.f32.mrb[0].mxu0
      %v2509 = vpop.f32.mrb[0].mxu0
      %v2510 = vadd.f32 0.0, %v2509
      %v2511 = vpop.f32.mrb[0].mxu0
      %2512 = vmatprep.mubr.bf16.mxu0 0
      %2513 = vmatmul.mubr.bf16.gmra.mrb[0].mxu0 %v480
      %v2514 = vpop.f32.mrb[0].mxu0
      %v2515 = vadd.f32 0.0, %v2514
      %v2516 = vpop.f32.mrb[0].mxu0
      %v2517 = vpop.f32.mrb[0].mxu0
      %v2518 = vadd.f32 0.0, %v2517
      %v2519 = vpop.f32.mrb[0].mxu0
      %2520 = vmatprep.mubr.bf16.mxu0 0
      %2521 = vmatmul.mubr.bf16.gmra.mrb[0].mxu0 %v481
      %v2522 = vpop.f32.mrb[0].mxu0
      %v2523 = vadd.f32 0.0, %v2522
      %v2524 = vpop.f32.mrb[0].mxu0
      %v2525 = vpop.f32.mrb[0].mxu0
      %v2526 = vadd.f32 0.0, %v2525
      %v2527 = vpop.f32.mrb[0].mxu0
      %2528 = vmatprep.mubr.bf16.mxu0 0
      %2529 = vmatmul.mubr.bf16.gmra.mrb[0].mxu0 %v482
      %v2530 = vpop.f32.mrb[0].mxu0
      %v2531 = vadd.f32 0.0, %v2530
      %v2532 = vpop.f32.mrb[0].mxu0
      %v2533 = vpop.f32.mrb[0].mxu0
      %v2534 = vadd.f32 0.0, %v2533
      %v2535 = vpop.f32.mrb[0].mxu0
      %2536 = vmatprep.mubr.bf16.mxu0 0
      %2537 = vmatmul.mubr.bf16.gmra.mrb[0].mxu0 %v483
      %v2538 = vpop.f32.mrb[0].mxu0
      %v2539 = vadd.f32 0.0, %v2538
      %v2540 = vpop.f32.mrb[0].mxu0
      %v2541 = vpop.f32.mrb[0].mxu0
      %v2542 = vadd.f32 0.0, %v2541
      %v2543 = vpop.f32.mrb[0].mxu0
      %2544 = vmatprep.mubr.bf16.mxu0 0
      %2545 = vmatmul.mubr.bf16.gmra.mrb[0].mxu0 %v484
      %v2546 = vpop.f32.mrb[0].mxu0
      %v2547 = vadd.f32 0.0, %v2546
      %v2548 = vpop.f32.mrb[0].mxu0
      %v2549 = vpop.f32.mrb[0].mxu0
      %v2550 = vadd.f32 0.0, %v2549
      %v2551 = vpop.f32.mrb[0].mxu0
      %2552 = vmatprep.mubr.bf16.mxu0 0
      %2553 = vmatmul.mubr.bf16.gmra.mrb[0].mxu0 %v485
      %v2554 = vpop.f32.mrb[0].mxu0
      %v2555 = vadd.f32 0.0, %v2554
      %v2556 = vpop.f32.mrb[0].mxu0
      %v2557 = vpop.f32.mrb[0].mxu0
      %v2558 = vadd.f32 0.0, %v2557
      %v2559 = vpop.f32.mrb[0].mxu0
      %2560 = vmatprep.mubr.bf16.mxu0 0
      %2561 = vmatmul.mubr.bf16.gmra.mrb[0].mxu0 %v486
      %v2562 = vpop.f32.mrb[0].mxu0
      %v2563 = vadd.f32 0.0, %v2562
      %v2564 = vpop.f32.mrb[0].mxu0
      %v2565 = vpop.f32.mrb[0].mxu0
      %v2566 = vadd.f32 0.0, %v2565
      %v2567 = vpop.f32.mrb[0].mxu0
      %2568 = vmatprep.mubr.bf16.mxu0 0
      %2569 = vmatmul.mubr.bf16.gmra.mrb[0].mxu0 %v487
      %v2570 = vpop.f32.mrb[0].mxu0
      %v2571 = vadd.f32 0.0, %v2570
      %v2572 = vpop.f32.mrb[0].mxu0
      %v2573 = vpop.f32.mrb[0].mxu0
      %v2574 = vadd.f32 0.0, %v2573
      %v2575 = vpop.f32.mrb[0].mxu0
      %2576 = vmatprep.mubr.bf16.mxu0 0
      %2577 = vmatmul.mubr.bf16.gmra.mrb[0].mxu0 %v488
      %v2578 = vpop.f32.mrb[0].mxu0
      %v2579 = vadd.f32 0.0, %v2578
      %v2580 = vpop.f32.mrb[0].mxu0
      %v2581 = vpop.f32.mrb[0].mxu0
      %v2582 = vadd.f32 0.0, %v2581
      %v2583 = vpop.f32.mrb[0].mxu0
      %2584 = vmatprep.mubr.bf16.mxu0 0
      %2585 = vmatmul.mubr.bf16.gmra.mrb[0].mxu0 %v1580
      %v2586 = vpop.f32.mrb[0].mxu0
      %v2587 = vadd.f32 0.0, %v2586
      %v2588 = vpop.f32.mrb[0].mxu0
      %v2589 = vpop.f32.mrb[0].mxu0
      %v2590 = vadd.f32 0.0, %v2589
      %v2591 = vpop.f32.mrb[0].mxu0
      %2592 = vmatprep.mubr.bf16.mxu0 0
      %2593 = vmatmul.mubr.bf16.gmra.mrb[0].mxu0 %v2374
      %v2594 = vpop.f32.mrb[0].mxu0
      %v2595 = vadd.f32 0.0, %v2594
      %v2596 = vpop.f32.mrb[0].mxu0
      %v2597 = vpop.f32.mrb[0].mxu0
      %v2598 = vadd.f32 0.0, %v2597
      %v2599 = vpop.f32.mrb[0].mxu0
      %2600 = vdwg.mxu0
      %v2601 = vadd.f32 %v2332, %v2475
      %v2602 = vadd.f32 %v2333, %v2478
      %v2603 = vadd.f32 %v2334, %v2483
      %v2604 = vadd.f32 %v2335, %v2486
      %v2605 = vadd.f32 %v2336, %v2491
      %v2606 = vadd.f32 %v2337, %v2494
      %v2607 = vadd.f32 %v2338, %v2499
      %v2608 = vadd.f32 %v2339, %v2502
      %v2609 = vadd.f32 %v2340, %v2507
      %v2610 = vadd.f32 %v2341, %v2510
      %v2611 = vadd.f32 %v2342, %v2515
      %v2612 = vadd.f32 %v2343, %v2518
      %v2613 = vadd.f32 %v2344, %v2523
      %v2614 = vadd.f32 %v2345, %v2526
      %v2615 = vadd.f32 %v2346, %v2531
      %v2616 = vadd.f32 %v2347, %v2534
      %v2617 = vadd.f32 %v2348, %v2539
      %v2618 = vadd.f32 %v2349, %v2542
      %v2619 = vadd.f32 %v2350, %v2547
      %v2620 = vadd.f32 %v2351, %v2550
      %v2621 = vadd.f32 %v2352, %v2555
      %v2622 = vadd.f32 %v2353, %v2558
      %v2623 = vadd.f32 %v2354, %v2563
      %v2624 = vadd.f32 %v2355, %v2566
      %v2625 = vadd.f32 %v2356, %v2571
      %v2626 = vadd.f32 %v2357, %v2574
      %v2627 = vadd.f32 %v2358, %v2579
      %v2628 = vadd.f32 %v2359, %v2582
      %v2629 = vadd.f32 %v2360, %v2587
      %v2630 = vadd.f32 %v2361, %v2590
      %v2631 = vadd.f32 %v2362, %v2595
      %v2632 = vadd.f32 %v2363, %v2598
      %v2633 = vrot.slane %v277, 2
      %v2634 = vrot.slane %v278, 2
      %v2635 = vsel %vm924, %v2633, %v2634
      %v2636 = vrot.slane %v279, 2
      %v2637 = vsel %vm924, %v2634, %v2636
      %v2640 = vpack.c.bf16 %v2637, %v2635
      %s2641 = scalar_lea.vmem %s1, 512
      %v2642 = vld [vmem:[%s2641] sm:$0xf]
      %v2643 = vld [vmem:[%s2641 + $0x4] sm:$0xf]
      %v2644 = vld [vmem:[%s2641 + $0x8] sm:$0xf]
      %v2645 = vld [vmem:[%s2641 + $0xc] sm:$0xf]
      %v2646 = vld [vmem:[%s2641 + $0x10] sm:$0xf]
      %v2647 = vld [vmem:[%s2641 + $0x14] sm:$0xf]
      %v2648 = vld [vmem:[%s2641 + $0x18] sm:$0xf]
      %v2649 = vld [vmem:[%s2641 + $0x1c] sm:$0xf]
      %v2650 = vld [vmem:[%s2641 + $0x20] sm:$0xf]
      %v2651 = vld [vmem:[%s2641 + $0x24] sm:$0xf]
      %v2652 = vld [vmem:[%s2641 + $0x28] sm:$0xf]
      %v2653 = vld [vmem:[%s2641 + $0x2c] sm:$0xf]
      %v2654 = vld [vmem:[%s2641 + $0x30] sm:$0xf]
      %v2655 = vld [vmem:[%s2641 + $0x34] sm:$0xf]
      %v2656 = vld [vmem:[%s2641 + $0x38] sm:$0xf]
      %v2657 = vld [vmem:[%s2641 + $0x3c] sm:$0xf]
      %v2674 = vunpack.c.l.b16 %v2642
      %v2675 = vunpack.c.l.b16 %v2643
      %v2676 = vunpack.c.l.b16 %v2644
      %v2677 = vunpack.c.l.b16 %v2645
      %v2678 = vunpack.c.l.b16 %v2646
      %v2679 = vunpack.c.l.b16 %v2647
      %v2680 = vunpack.c.l.b16 %v2648
      %v2681 = vunpack.c.l.b16 %v2649
      %v2682 = vunpack.c.l.b16 %v2650
      %v2683 = vunpack.c.l.b16 %v2651
      %v2684 = vunpack.c.l.b16 %v2652
      %v2685 = vunpack.c.l.b16 %v2653
      %v2686 = vunpack.c.l.b16 %v2654
      %v2687 = vunpack.c.l.b16 %v2655
      %v2688 = vunpack.c.l.b16 %v2656
      %v2689 = vunpack.c.l.b16 %v2657
      %v2690 = vpack.c.b16 %v2675, %v2674
      %v2691 = vpack.c.b16 %v2677, %v2676
      %v2692 = vpack.c.b16 %v2679, %v2678
      %v2693 = vpack.c.b16 %v2681, %v2680
      %v2694 = vpack.c.b16 %v2683, %v2682
      %v2695 = vpack.c.b16 %v2685, %v2684
      %v2696 = vpack.c.b16 %v2687, %v2686
      %v2697 = vpack.c.b16 %v2689, %v2688
      %2706 = vmatprep.subr.bf16.mxu0 0
      %2707 = vmatpush1.bf16.msra.mxu0 %v2690
      %2708 = vmatprep.subr.bf16.mxu0 0
      %2709 = vmatpush1.bf16.msra.mxu0 %v2691
      %2710 = vmatprep.subr.bf16.mxu0 0
      %2711 = vmatpush1.bf16.msra.mxu0 %v2692
      %2712 = vmatprep.subr.bf16.mxu0 0
      %2713 = vmatpush1.bf16.msra.mxu0 %v2693
      %2714 = vmatprep.subr.bf16.mxu0 0
      %2715 = vmatpush1.bf16.msra.mxu0 %v2694
      %2716 = vmatprep.subr.bf16.mxu0 0
      %2717 = vmatpush1.bf16.msra.mxu0 %v2695
      %2718 = vmatprep.subr.bf16.mxu0 0
      %2719 = vmatpush1.bf16.msra.mxu0 %v2696
      %2720 = vmatprep.subr.bf16.mxu0 0
      %2721 = vmatpush1.bf16.msra.mxu0 %v2697
      %2722 = vmatprep.subr.bf16.mxu0 0
      %2723 = vmatpush1.bf16.msra.mxu0 0
      %2724 = vmatprep.subr.bf16.mxu0 0
      %2725 = vmatpush1.bf16.msra.mxu0 0
      %2726 = vmatprep.subr.bf16.mxu0 0
      %2727 = vmatpush1.bf16.msra.mxu0 0
      %2728 = vmatprep.subr.bf16.mxu0 0
      %2729 = vmatpush1.bf16.msra.mxu0 0
      %2730 = vmatprep.subr.bf16.mxu0 0
      %2731 = vmatpush1.bf16.msra.mxu0 0
      %2732 = vmatprep.subr.bf16.mxu0 0
      %2733 = vmatpush1.bf16.msra.mxu0 0
      %2734 = vmatprep.subr.bf16.mxu0 0
      %2735 = vmatpush1.bf16.msra.mxu0 0
      %2736 = vmatprep.subr.bf16.mxu0 0
      %2737 = vmatpush1.bf16.msra.mxu0 0
      %2738 = vmatprep.mubr.bf16.mxu0 0
      %2739 = vmatmul.mubr.bf16.gmra.mrb[0].mxu0 %v1039
      %v2740 = vpop.f32.mrb[0].mxu0
      %v2741 = vadd.f32 0.0, %v2740
      %v2742 = vpop.f32.mrb[0].mxu0
      %v2743 = vpop.f32.mrb[0].mxu0
      %v2744 = vadd.f32 0.0, %v2743
      %v2745 = vpop.f32.mrb[0].mxu0
      %2746 = vmatprep.mubr.bf16.mxu0 0
      %2747 = vmatmul.mubr.bf16.gmra.mrb[0].mxu0 %v1040
      %v2748 = vpop.f32.mrb[0].mxu0
      %v2749 = vadd.f32 0.0, %v2748
      %v2750 = vpop.f32.mrb[0].mxu0
      %v2751 = vpop.f32.mrb[0].mxu0
      %v2752 = vadd.f32 0.0, %v2751
      %v2753 = vpop.f32.mrb[0].mxu0
      %2754 = vmatprep.mubr.bf16.mxu0 0
      %2755 = vmatmul.mubr.bf16.gmra.mrb[0].mxu0 %v1041
      %v2756 = vpop.f32.mrb[0].mxu0
      %v2757 = vadd.f32 0.0, %v2756
      %v2758 = vpop.f32.mrb[0].mxu0
      %v2759 = vpop.f32.mrb[0].mxu0
      %v2760 = vadd.f32 0.0, %v2759
      %v2761 = vpop.f32.mrb[0].mxu0
      %2762 = vmatprep.mubr.bf16.mxu0 0
      %2763 = vmatmul.mubr.bf16.gmra.mrb[0].mxu0 %v1042
      %v2764 = vpop.f32.mrb[0].mxu0
      %v2765 = vadd.f32 0.0, %v2764
      %v2766 = vpop.f32.mrb[0].mxu0
      %v2767 = vpop.f32.mrb[0].mxu0
      %v2768 = vadd.f32 0.0, %v2767
      %v2769 = vpop.f32.mrb[0].mxu0
      %2770 = vmatprep.mubr.bf16.mxu0 0
      %2771 = vmatmul.mubr.bf16.gmra.mrb[0].mxu0 %v1043
      %v2772 = vpop.f32.mrb[0].mxu0
      %v2773 = vadd.f32 0.0, %v2772
      %v2774 = vpop.f32.mrb[0].mxu0
      %v2775 = vpop.f32.mrb[0].mxu0
      %v2776 = vadd.f32 0.0, %v2775
      %v2777 = vpop.f32.mrb[0].mxu0
      %2778 = vmatprep.mubr.bf16.mxu0 0
      %2779 = vmatmul.mubr.bf16.gmra.mrb[0].mxu0 %v1044
      %v2780 = vpop.f32.mrb[0].mxu0
      %v2781 = vadd.f32 0.0, %v2780
      %v2782 = vpop.f32.mrb[0].mxu0
      %v2783 = vpop.f32.mrb[0].mxu0
      %v2784 = vadd.f32 0.0, %v2783
      %v2785 = vpop.f32.mrb[0].mxu0
      %2786 = vmatprep.mubr.bf16.mxu0 0
      %2787 = vmatmul.mubr.bf16.gmra.mrb[0].mxu0 %v1045
      %v2788 = vpop.f32.mrb[0].mxu0
      %v2789 = vadd.f32 0.0, %v2788
      %v2790 = vpop.f32.mrb[0].mxu0
      %v2791 = vpop.f32.mrb[0].mxu0
      %v2792 = vadd.f32 0.0, %v2791
      %v2793 = vpop.f32.mrb[0].mxu0
      %2794 = vmatprep.mubr.bf16.mxu0 0
      %2795 = vmatmul.mubr.bf16.gmra.mrb[0].mxu0 %v1046
      %v2796 = vpop.f32.mrb[0].mxu0
      %v2797 = vadd.f32 0.0, %v2796
      %v2798 = vpop.f32.mrb[0].mxu0
      %v2799 = vpop.f32.mrb[0].mxu0
      %v2800 = vadd.f32 0.0, %v2799
      %v2801 = vpop.f32.mrb[0].mxu0
      %2802 = vmatprep.mubr.bf16.mxu0 0
      %2803 = vmatmul.mubr.bf16.gmra.mrb[0].mxu0 %v1047
      %v2804 = vpop.f32.mrb[0].mxu0
      %v2805 = vadd.f32 0.0, %v2804
      %v2806 = vpop.f32.mrb[0].mxu0
      %v2807 = vpop.f32.mrb[0].mxu0
      %v2808 = vadd.f32 0.0, %v2807
      %v2809 = vpop.f32.mrb[0].mxu0
      %2810 = vmatprep.mubr.bf16.mxu0 0
      %2811 = vmatmul.mubr.bf16.gmra.mrb[0].mxu0 %v1048
      %v2812 = vpop.f32.mrb[0].mxu0
      %v2813 = vadd.f32 0.0, %v2812
      %v2814 = vpop.f32.mrb[0].mxu0
      %v2815 = vpop.f32.mrb[0].mxu0
      %v2816 = vadd.f32 0.0, %v2815
      %v2817 = vpop.f32.mrb[0].mxu0
      %2818 = vmatprep.mubr.bf16.mxu0 0
      %2819 = vmatmul.mubr.bf16.gmra.mrb[0].mxu0 %v1049
      %v2820 = vpop.f32.mrb[0].mxu0
      %v2821 = vadd.f32 0.0, %v2820
      %v2822 = vpop.f32.mrb[0].mxu0
      %v2823 = vpop.f32.mrb[0].mxu0
      %v2824 = vadd.f32 0.0, %v2823
      %v2825 = vpop.f32.mrb[0].mxu0
      %2826 = vmatprep.mubr.bf16.mxu0 0
      %2827 = vmatmul.mubr.bf16.gmra.mrb[0].mxu0 %v1050
      %v2828 = vpop.f32.mrb[0].mxu0
      %v2829 = vadd.f32 0.0, %v2828
      %v2830 = vpop.f32.mrb[0].mxu0
      %v2831 = vpop.f32.mrb[0].mxu0
      %v2832 = vadd.f32 0.0, %v2831
      %v2833 = vpop.f32.mrb[0].mxu0
      %2834 = vmatprep.mubr.bf16.mxu0 0
      %2835 = vmatmul.mubr.bf16.gmra.mrb[0].mxu0 %v1051
      %v2836 = vpop.f32.mrb[0].mxu0
      %v2837 = vadd.f32 0.0, %v2836
      %v2838 = vpop.f32.mrb[0].mxu0
      %v2839 = vpop.f32.mrb[0].mxu0
      %v2840 = vadd.f32 0.0, %v2839
      %v2841 = vpop.f32.mrb[0].mxu0
      %2842 = vmatprep.mubr.bf16.mxu0 0
      %2843 = vmatmul.mubr.bf16.gmra.mrb[0].mxu0 %v1052
      %v2844 = vpop.f32.mrb[0].mxu0
      %v2845 = vadd.f32 0.0, %v2844
      %v2846 = vpop.f32.mrb[0].mxu0
      %v2847 = vpop.f32.mrb[0].mxu0
      %v2848 = vadd.f32 0.0, %v2847
      %v2849 = vpop.f32.mrb[0].mxu0
      %2850 = vmatprep.mubr.bf16.mxu0 0
      %2851 = vmatmul.mubr.bf16.gmra.mrb[0].mxu0 %v1846
      %v2852 = vpop.f32.mrb[0].mxu0
      %v2853 = vadd.f32 0.0, %v2852
      %v2854 = vpop.f32.mrb[0].mxu0
      %v2855 = vpop.f32.mrb[0].mxu0
      %v2856 = vadd.f32 0.0, %v2855
      %v2857 = vpop.f32.mrb[0].mxu0
      %2858 = vmatprep.mubr.bf16.mxu0 0
      %2859 = vmatmul.mubr.bf16.gmra.mrb[0].mxu0 %v2640
      %v2860 = vpop.f32.mrb[0].mxu0
      %v2861 = vadd.f32 0.0, %v2860
      %v2862 = vpop.f32.mrb[0].mxu0
      %v2863 = vpop.f32.mrb[0].mxu0
      %v2864 = vadd.f32 0.0, %v2863
      %v2865 = vpop.f32.mrb[0].mxu0
      %2866 = vdwg.mxu0
      %v2867 = vadd.f32 %v2601, %v2741
      %v2868 = vadd.f32 %v2602, %v2744
      %v2869 = vadd.f32 %v2603, %v2749
      %v2870 = vadd.f32 %v2604, %v2752
      %v2871 = vadd.f32 %v2605, %v2757
      %v2872 = vadd.f32 %v2606, %v2760
      %v2873 = vadd.f32 %v2607, %v2765
      %v2874 = vadd.f32 %v2608, %v2768
      %v2875 = vadd.f32 %v2609, %v2773
      %v2876 = vadd.f32 %v2610, %v2776
      %v2877 = vadd.f32 %v2611, %v2781
      %v2878 = vadd.f32 %v2612, %v2784
      %v2879 = vadd.f32 %v2613, %v2789
      %v2880 = vadd.f32 %v2614, %v2792
      %v2881 = vadd.f32 %v2615, %v2797
      %v2882 = vadd.f32 %v2616, %v2800
      %v2883 = vadd.f32 %v2617, %v2805
      %v2884 = vadd.f32 %v2618, %v2808
      %v2885 = vadd.f32 %v2619, %v2813
      %v2886 = vadd.f32 %v2620, %v2816
      %v2887 = vadd.f32 %v2621, %v2821
      %v2888 = vadd.f32 %v2622, %v2824
      %v2889 = vadd.f32 %v2623, %v2829
      %v2890 = vadd.f32 %v2624, %v2832
      %v2891 = vadd.f32 %v2625, %v2837
      %v2892 = vadd.f32 %v2626, %v2840
      %v2893 = vadd.f32 %v2627, %v2845
      %v2894 = vadd.f32 %v2628, %v2848
      %v2895 = vadd.f32 %v2629, %v2853
      %v2896 = vadd.f32 %v2630, %v2856
      %v2897 = vadd.f32 %v2631, %v2861
      %v2898 = vadd.f32 %v2632, %v2864
      %v2899 = vld [vmem:[%s2] sm:$0x1]
      %v2901 = vlaneseq
      %v2902 = vshrl.u32 %v2901, 7
      %v2903 = vsub.s32 0, %v2902
      %v2904 = vrot.slane %v2899, %v2903
      %v2906 = vadd.f32 %v2867, %v2904
      %v2907 = vadd.f32 %v2868, %v2904
      %v2908 = vadd.f32 %v2869, %v2904
      %v2909 = vadd.f32 %v2870, %v2904
      %v2910 = vadd.f32 %v2871, %v2904
      %v2911 = vadd.f32 %v2872, %v2904
      %v2912 = vadd.f32 %v2873, %v2904
      %v2913 = vadd.f32 %v2874, %v2904
      %v2914 = vadd.f32 %v2875, %v2904
      %v2915 = vadd.f32 %v2876, %v2904
      %v2916 = vadd.f32 %v2877, %v2904
      %v2917 = vadd.f32 %v2878, %v2904
      %v2918 = vadd.f32 %v2879, %v2904
      %v2919 = vadd.f32 %v2880, %v2904
      %v2920 = vadd.f32 %v2881, %v2904
      %v2921 = vadd.f32 %v2882, %v2904
      %v2922 = vadd.f32 %v2883, %v2904
      %v2923 = vadd.f32 %v2884, %v2904
      %v2924 = vadd.f32 %v2885, %v2904
      %v2925 = vadd.f32 %v2886, %v2904
      %v2926 = vadd.f32 %v2887, %v2904
      %v2927 = vadd.f32 %v2888, %v2904
      %v2928 = vadd.f32 %v2889, %v2904
      %v2929 = vadd.f32 %v2890, %v2904
      %v2930 = vadd.f32 %v2891, %v2904
      %v2931 = vadd.f32 %v2892, %v2904
      %v2932 = vadd.f32 %v2893, %v2904
      %v2933 = vadd.f32 %v2894, %v2904
      %v2934 = vadd.f32 %v2895, %v2904
      %v2935 = vadd.f32 %v2896, %v2904
      %v2936 = vadd.f32 %v2897, %v2904
      %v2937 = vadd.f32 %v2898, %v2904
      %v2938 = vmax.f32 %v2906, 0.0
      %v2939 = vmax.f32 %v2907, 0.0
      %v2940 = vmax.f32 %v2908, 0.0
      %v2941 = vmax.f32 %v2909, 0.0
      %v2942 = vmax.f32 %v2910, 0.0
      %v2943 = vmax.f32 %v2911, 0.0
      %v2944 = vmax.f32 %v2912, 0.0
      %v2945 = vmax.f32 %v2913, 0.0
      %v2946 = vmax.f32 %v2914, 0.0
      %v2947 = vmax.f32 %v2915, 0.0
      %v2948 = vmax.f32 %v2916, 0.0
      %v2949 = vmax.f32 %v2917, 0.0
      %v2950 = vmax.f32 %v2918, 0.0
      %v2951 = vmax.f32 %v2919, 0.0
      %v2952 = vmax.f32 %v2920, 0.0
      %v2953 = vmax.f32 %v2921, 0.0
      %v2954 = vmax.f32 %v2922, 0.0
      %v2955 = vmax.f32 %v2923, 0.0
      %v2956 = vmax.f32 %v2924, 0.0
      %v2957 = vmax.f32 %v2925, 0.0
      %v2958 = vmax.f32 %v2926, 0.0
      %v2959 = vmax.f32 %v2927, 0.0
      %v2960 = vmax.f32 %v2928, 0.0
      %v2961 = vmax.f32 %v2929, 0.0
      %v2962 = vmax.f32 %v2930, 0.0
      %v2963 = vmax.f32 %v2931, 0.0
      %v2964 = vmax.f32 %v2932, 0.0
      %v2965 = vmax.f32 %v2933, 0.0
      %v2966 = vmax.f32 %v2934, 0.0
      %v2967 = vmax.f32 %v2935, 0.0
      %v2968 = vmax.f32 %v2936, 0.0
      %v2969 = vmax.f32 %v2937, 0.0
      %v2970 = vpack.c.bf16 %v2939, %v2938
      %v2971 = vpack.c.bf16 %v2941, %v2940
      %v2972 = vpack.c.bf16 %v2943, %v2942
      %v2973 = vpack.c.bf16 %v2945, %v2944
      %v2974 = vpack.c.bf16 %v2947, %v2946
      %v2975 = vpack.c.bf16 %v2949, %v2948
      %v2976 = vpack.c.bf16 %v2951, %v2950
      %v2977 = vpack.c.bf16 %v2953, %v2952
      %v2978 = vpack.c.bf16 %v2955, %v2954
      %v2979 = vpack.c.bf16 %v2957, %v2956
      %v2980 = vpack.c.bf16 %v2959, %v2958
      %v2981 = vpack.c.bf16 %v2961, %v2960
      %v2982 = vpack.c.bf16 %v2963, %v2962
      %v2983 = vpack.c.bf16 %v2965, %v2964
      %v2984 = vpack.c.bf16 %v2967, %v2966
      %v2985 = vpack.c.bf16 %v2969, %v2968
      %v3002 = vunpack.c.l.b16 %v2970
      %v3003 = vunpack.c.h.b16 %v2970
      %v3004 = vunpack.c.l.b16 %v2971
      %v3005 = vunpack.c.h.b16 %v2971
      %v3006 = vunpack.c.l.b16 %v2972
      %v3007 = vunpack.c.h.b16 %v2972
      %v3008 = vunpack.c.l.b16 %v2973
      %v3009 = vunpack.c.h.b16 %v2973
      %v3010 = vunpack.c.l.b16 %v2974
      %v3011 = vunpack.c.h.b16 %v2974
      %v3012 = vunpack.c.l.b16 %v2975
      %v3013 = vunpack.c.h.b16 %v2975
      %v3014 = vunpack.c.l.b16 %v2976
      %v3015 = vunpack.c.h.b16 %v2976
      %v3016 = vunpack.c.l.b16 %v2977
      %v3017 = vunpack.c.h.b16 %v2977
      %v3018 = vunpack.c.l.b16 %v2978
      %v3019 = vunpack.c.h.b16 %v2978
      %v3020 = vunpack.c.l.b16 %v2979
      %v3021 = vunpack.c.h.b16 %v2979
      %v3022 = vunpack.c.l.b16 %v2980
      %v3023 = vunpack.c.h.b16 %v2980
      %v3024 = vunpack.c.l.b16 %v2981
      %v3025 = vunpack.c.h.b16 %v2981
      %v3026 = vunpack.c.l.b16 %v2982
      %v3027 = vunpack.c.h.b16 %v2982
      %v3028 = vunpack.c.l.b16 %v2983
      %v3029 = vunpack.c.h.b16 %v2983
      %v3030 = vunpack.c.l.b16 %v2984
      %v3031 = vunpack.c.h.b16 %v2984
      %v3032 = vunpack.c.l.b16 %v2985
      %v3033 = vunpack.c.h.b16 %v2985
      %v3034 = vpack.c.b16 %v3002, %v3002
      %v3035 = vpack.c.b16 %v3003, %v3003
      %v3036 = vpack.c.b16 %v3004, %v3004
      %v3037 = vpack.c.b16 %v3005, %v3005
      %v3038 = vpack.c.b16 %v3006, %v3006
      %v3039 = vpack.c.b16 %v3007, %v3007
      %v3040 = vpack.c.b16 %v3008, %v3008
      %v3041 = vpack.c.b16 %v3009, %v3009
      %v3042 = vpack.c.b16 %v3010, %v3010
      %v3043 = vpack.c.b16 %v3011, %v3011
      %v3044 = vpack.c.b16 %v3012, %v3012
      %v3045 = vpack.c.b16 %v3013, %v3013
      %v3046 = vpack.c.b16 %v3014, %v3014
      %v3047 = vpack.c.b16 %v3015, %v3015
      %v3048 = vpack.c.b16 %v3016, %v3016
      %v3049 = vpack.c.b16 %v3017, %v3017
      %v3050 = vpack.c.b16 %v3018, %v3018
      %v3051 = vpack.c.b16 %v3019, %v3019
      %v3052 = vpack.c.b16 %v3020, %v3020
      %v3053 = vpack.c.b16 %v3021, %v3021
      %v3054 = vpack.c.b16 %v3022, %v3022
      %v3055 = vpack.c.b16 %v3023, %v3023
      %v3056 = vpack.c.b16 %v3024, %v3024
      %v3057 = vpack.c.b16 %v3025, %v3025
      %v3058 = vpack.c.b16 %v3026, %v3026
      %v3059 = vpack.c.b16 %v3027, %v3027
      %v3060 = vpack.c.b16 %v3028, %v3028
      %v3061 = vpack.c.b16 %v3029, %v3029
      %v3062 = vpack.c.b16 %v3030, %v3030
      %v3063 = vpack.c.b16 %v3031, %v3031
      %v3064 = vpack.c.b16 %v3032, %v3032
      %v3065 = vpack.c.b16 %v3033, %v3033
      %3098 = vst [vmem:[%s170] sm:$0xf] %v3034
      %3099 = vst [vmem:[%s170 + $0x4] sm:$0xf] %v3035
      %3100 = vst [vmem:[%s170 + $0x8] sm:$0xf] %v3036
      %3101 = vst [vmem:[%s170 + $0xc] sm:$0xf] %v3037
      %3102 = vst [vmem:[%s170 + $0x10] sm:$0xf] %v3038
      %3103 = vst [vmem:[%s170 + $0x14] sm:$0xf] %v3039
      %3104 = vst [vmem:[%s170 + $0x18] sm:$0xf] %v3040
      %3105 = vst [vmem:[%s170 + $0x1c] sm:$0xf] %v3041
      %3106 = vst [vmem:[%s170 + $0x20] sm:$0xf] %v3042
      %3107 = vst [vmem:[%s170 + $0x24] sm:$0xf] %v3043
      %3108 = vst [vmem:[%s170 + $0x28] sm:$0xf] %v3044
      %3109 = vst [vmem:[%s170 + $0x2c] sm:$0xf] %v3045
      %3110 = vst [vmem:[%s170 + $0x30] sm:$0xf] %v3046
      %3111 = vst [vmem:[%s170 + $0x34] sm:$0xf] %v3047
      %3112 = vst [vmem:[%s170 + $0x38] sm:$0xf] %v3048
      %3113 = vst [vmem:[%s170 + $0x3c] sm:$0xf] %v3049
      %3114 = vst [vmem:[%s170 + $0x40] sm:$0xf] %v3050
      %3115 = vst [vmem:[%s170 + $0x44] sm:$0xf] %v3051
      %3116 = vst [vmem:[%s170 + $0x48] sm:$0xf] %v3052
      %3117 = vst [vmem:[%s170 + $0x4c] sm:$0xf] %v3053
      %3118 = vst [vmem:[%s170 + $0x50] sm:$0xf] %v3054
      %3119 = vst [vmem:[%s170 + $0x54] sm:$0xf] %v3055
      %3120 = vst [vmem:[%s170 + $0x58] sm:$0xf] %v3056
      %3121 = vst [vmem:[%s170 + $0x5c] sm:$0xf] %v3057
      %3122 = vst [vmem:[%s170 + $0x60] sm:$0xf] %v3058
      %3123 = vst [vmem:[%s170 + $0x64] sm:$0xf] %v3059
      %3124 = vst [vmem:[%s170 + $0x68] sm:$0xf] %v3060
      %3125 = vst [vmem:[%s170 + $0x6c] sm:$0xf] %v3061
      %3126 = vst [vmem:[%s170 + $0x70] sm:$0xf] %v3062
      %3127 = vst [vmem:[%s170 + $0x74] sm:$0xf] %v3063
      %3128 = vst [vmem:[%s170 + $0x78] sm:$0xf] %v3064
      %3129 = vst [vmem:[%s170 + $0x7c] sm:$0xf] %v3065
      %p3130 = scmp.lt.s32.totalorder %s14, 1
      %s3131 = scalar_select %p3130, %s14, 1
      %s3132 = smul.addr %s3131, 32
      %s3133 = smul.addr %s3132, 4
      %s3134 = scalar_lea.vmem %s3, %s3133
      // Predicated region
      $region33: #{_lambda_.8} parent=31 // pred_check
        %p3135 = pneg %p100
      $region34: #{_lambda_.8} parent=31 // pred_check_branch
        %3137 = sbr.rel (%p3135) target = $region36
      $region35: #{_lambda_.8} parent=31 // pred_region
        _
      $region36: #{_lambda_.8} parent=31 // pred_fallthru
        _
    $region32: #{_lambda_.8} parent=5 // pred_fallthru
      _
    %p3138 = scmp.le.s32.totalorder 2, %s9
    // Predicated region
    $region37: #{_lambda_.8} parent=5 // pred_check
      %p3139 = pneg %p3138
    $region38: #{_lambda_.8} parent=5 // pred_check_branch
      %3141 = sbr.rel (%p3139) target = $region40
    $region39: #{_lambda_.8} parent=5 // pred_region
      %s3142 = ssub.s32 %s9, 2
      // Predicated region
      $region41: #{_lambda_.8} parent=39 // pred_check
        %p3143 = pneg %p106
      $region42: #{_lambda_.8} parent=39 // pred_check_branch
        %3145 = sbr.rel (%p3143) target = $region44
      $region43: #{_lambda_.8} parent=39 // pred_region
        %p3146 = scmp.lt.s32.totalorder %s15, 1
        %s3147 = scalar_select %p3146, %s15, 1
        %s3148 = smul.addr %s3147, 32
        %s3149 = smul.addr %s3148, 4
        %s3150 = scalar_lea.vmem %s3, %s3149
      $region44: #{_lambda_.8} parent=39 // pred_fallthru
        _
    $region40: #{_lambda_.8} parent=5 // pred_fallthru
      _
  $region6: #{_lambda_.8} parent=0 // loop_footer
    %s13 = sadd.s32 1, %s9
  $region7: #{_lambda_.8} parent=0 // loop_footer_branch
    %8 = sbr.rel target = $region3
  $region8: #{_lambda_.8} parent=0 // loop_exit
    _

</llo_original>
